<compile_context>
chip_gen: v7x
topology: tpu7x:2x2x1
jax: 0.10.0
libtpu: 0.0.40
codegen_flags: <defaults>
</compile_context>

<pallas_src>
import functools

import jax
import jax.numpy as jnp
from jax.experimental import pallas as pl
from jax.experimental.pallas import tpu as pltpu


_VMEM_LIMIT = 32 * 1024 * 1024   # safe scoped-VMEM budget on v5e / v6e / v7x
_CHUNK_T = 8                     # timesteps per grid step (fully unrolled in-kernel)


def _round_up(x, m):
    return ((x + m - 1) // m) * m


def _pick_tile(dim, pref, align):
    """Largest tile <= pref that divides dim (dim is a multiple of align)."""
    if dim <= pref:
        return dim
    t = max(align, (pref // align) * align)
    while dim % t:
        t -= align
    return t


# -----------------------------------------------------------------------------
# Kernel 1: tiled matmul + bias  (used for x@W_ih+b gate projection and the FC)
# -----------------------------------------------------------------------------
def _matmul_bias_kernel(x_ref, w_ref, b_ref, out_ref):
    # x tile is f32; cast to bf16 for the MXU, accumulate in f32, add f32 bias.
    x = x_ref[...].astype(jnp.bfloat16)
    out_ref[...] = (
        jnp.dot(x, w_ref[...], preferred_element_type=jnp.float32) + b_ref[...]
    ).astype(out_ref.dtype)


def _matmul_bias(x, w_bf16, b_f32, *, tm_pref=256, tn_pref=512):
    """(M, K) f32 @ (K, N) bf16 + (1, N) f32 -> (M, N) f32, tiled over (M, N)."""
    M, K = x.shape
    _, N = w_bf16.shape
    tm = _pick_tile(M, tm_pref, 8)
    tn = _pick_tile(N, tn_pref, 128)
    grid = (M // tm, N // tn)
    return pl.pallas_call(
        _matmul_bias_kernel,
        out_shape=jax.ShapeDtypeStruct((M, N), jnp.float32),
        grid=grid,
        in_specs=[
            pl.BlockSpec((tm, K), lambda i, j: (i, 0)),
            pl.BlockSpec((K, tn), lambda i, j: (0, j)),
            pl.BlockSpec((1, tn), lambda i, j: (0, j)),
        ],
        out_specs=pl.BlockSpec((tm, tn), lambda i, j: (i, j)),
        compiler_params=pltpu.CompilerParams(
            dimension_semantics=("parallel", "parallel"),
            vmem_limit_bytes=_VMEM_LIMIT,
        ),
    )(x, w_bf16, b_f32)


# -----------------------------------------------------------------------------
# Kernel 2: LSTM recurrence (input projection already done, bias already folded)
# -----------------------------------------------------------------------------
def _lstm_recurrent_kernel(gx_ref, whh_ref, out_ref, h_ref, c_ref):
    """
    gx_ref  : (Tc, tb, 4H) f32   precomputed x@W_ih + (b_ih+b_hh) chunk
    whh_ref : (H, 4H)      bf16  hidden->gates weight (transposed)
    out_ref : (Tc, tb, H)  f32   hidden states for this chunk
    h_ref   : (tb, H)      f32   persistent carry (VMEM scratch)
    c_ref   : (tb, H)      f32   persistent carry (VMEM scratch)
    grid = (B//tb ["parallel"], T//Tc ["arbitrary"])
    """
    H = out_ref.shape[2]
    Tc = gx_ref.shape[0]

    @pl.when(pl.program_id(1) == 0)
    def _():
        h_ref[...] = jnp.zeros_like(h_ref)
        c_ref[...] = jnp.zeros_like(c_ref)

    def step(t, carry):
        h, c = carry
        gates = gx_ref[t] + jnp.dot(
            h.astype(jnp.bfloat16), whh_ref[...],
            preferred_element_type=jnp.float32)                 # (tb, 4H) f32
        i = jax.nn.sigmoid(gates[:, 0 * H:1 * H])
        f = jax.nn.sigmoid(gates[:, 1 * H:2 * H])
        g = jnp.tanh(gates[:, 2 * H:3 * H])
        o = jax.nn.sigmoid(gates[:, 3 * H:4 * H])
        c_new = f * c + i * g
        h_new = o * jnp.tanh(c_new)
        out_ref[t] = h_new                                      # lane-dense (8,128k) store
        return (h_new, c_new)

    h, c = jax.lax.fori_loop(0, Tc, step, (h_ref[...], c_ref[...]), unroll=True)
    h_ref[...] = h
    c_ref[...] = c


def _lstm_recurrent(gx, whh_bf16, *, chunk_t, tb_pref=128):
    Tp, Bp, fourH = gx.shape
    Hp = fourH // 4
    tb = _pick_tile(Bp, tb_pref, 8)
    grid = (Bp // tb, Tp // chunk_t)
    return pl.pallas_call(
        _lstm_recurrent_kernel,
        out_shape=jax.ShapeDtypeStruct((Tp, Bp, Hp), jnp.float32),
        grid=grid,
        in_specs=[
            pl.BlockSpec((chunk_t, tb, fourH), lambda b, t: (t, b, 0)),
            pl.BlockSpec((Hp, fourH), lambda b, t: (0, 0)),
        ],
        out_specs=pl.BlockSpec((chunk_t, tb, Hp), lambda b, t: (t, b, 0)),
        scratch_shapes=[
            pltpu.VMEM((tb, Hp), jnp.float32),
            pltpu.VMEM((tb, Hp), jnp.float32),
        ],
        compiler_params=pltpu.CompilerParams(
            dimension_semantics=("parallel", "arbitrary"),
            vmem_limit_bytes=_VMEM_LIMIT,
        ),
    )(gx, whh_bf16)


# -----------------------------------------------------------------------------
# Parameter init (raw, PyTorch-shaped) and kernel-friendly preparation (padded)
# -----------------------------------------------------------------------------
def init_params(key, embed_size, hidden_size, vocab_size, num_layers):
    ks = iter(jax.random.split(key, 1 + 4 * num_layers + 2))
    bound = 1.0 / (float(hidden_size) ** 0.5)

    def unif(k, shape):
        return jax.random.uniform(k, shape, jnp.float32, -bound, bound)

    raw = {"embed": jax.random.normal(next(ks), (vocab_size, embed_size),
                                      jnp.float32)}
    layers = []
    for l in range(num_layers):
        in_size = embed_size if l == 0 else hidden_size
        layers.append({
            "w_ih": unif(next(ks), (4 * hidden_size, in_size)),
            "w_hh": unif(next(ks), (4 * hidden_size, hidden_size)),
            "b_ih": unif(next(ks), (4 * hidden_size,)),
            "b_hh": unif(next(ks), (4 * hidden_size,)),
        })
    raw["lstm"] = layers
    raw["fc_w"] = unif(next(ks), (vocab_size, hidden_size))
    raw["fc_b"] = unif(next(ks), (vocab_size,))
    return raw


def _pad_gate_weight(w, H, Hp, in_dim, in_p):
    """(4H, in) PyTorch layout -> (in_p, 4Hp), each gate block padded H->Hp."""
    w4 = w.reshape(4, H, in_dim)
    w4 = jnp.pad(w4, ((0, 0), (0, Hp - H), (0, in_p - in_dim)))
    return jnp.transpose(w4, (2, 0, 1)).reshape(in_p, 4 * Hp)


def _pad_gate_bias(b, H, Hp):
    b4 = jnp.pad(b.reshape(4, H), ((0, 0), (0, Hp - H)))
    return b4.reshape(1, 4 * Hp)


def prepare_params(raw, embed_size, hidden_size, vocab_size):
    Ep = _round_up(embed_size, 128)
    Hp = _round_up(hidden_size, 128)
    Vp = _round_up(vocab_size, 128)

    prep = {"embed": raw["embed"]}          # gather table: keep unpadded f32
    layers = []
    for l, layer in enumerate(raw["lstm"]):
        in_size = layer["w_ih"].shape[1]
        in_p = Ep if l == 0 else Hp
        wih_t = _pad_gate_weight(layer["w_ih"], hidden_size, Hp, in_size, in_p)
        whh_t = _pad_gate_weight(layer["w_hh"], hidden_size, Hp,
                                 hidden_size, Hp)
        bias = _pad_gate_bias(layer["b_ih"] + layer["b_hh"], hidden_size, Hp)
        layers.append({
            "wih_t": wih_t.astype(jnp.bfloat16),   # (in_p, 4Hp)
            "whh_t": whh_t.astype(jnp.bfloat16),   # (Hp, 4Hp)
            "bias": bias.astype(jnp.float32),      # (1, 4Hp)
        })
    prep["lstm"] = layers
    fc_w = jnp.pad(raw["fc_w"], ((0, Vp - vocab_size), (0, Hp - hidden_size)))
    prep["fc_w_t"] = fc_w.T.astype(jnp.bfloat16)                    # (Hp, Vp)
    prep["fc_b"] = jnp.pad(raw["fc_b"], (0, Vp - vocab_size))[None, :]  # (1, Vp)
    return prep


# -----------------------------------------------------------------------------
# DecoderRNN forward (embedding gather / concat / pad / transpose are XLA glue)
# -----------------------------------------------------------------------------
@functools.partial(jax.jit, static_argnames=("vocab_size",))
def decoder_rnn_forward(prep, features, captions, *, vocab_size):
    """features: (B, E) f32, captions: (B, Tcap) int32 -> (B, Tcap, V) f32."""
    emb = jnp.take(prep["embed"], captions[:, :-1], axis=0)        # (B, T-1, E)
    x = jnp.concatenate([features[:, None, :], emb], axis=1)       # (B, T, E)
    x = x.astype(jnp.float32)

    B, T, E = x.shape
    Ep = prep["lstm"][0]["wih_t"].shape[0]
    Hp, Vp = prep["fc_w_t"].shape
    Bp = _round_up(B, 8)
    Tp = _round_up(T, _CHUNK_T)

    # time-major + pad to vreg-friendly shapes (zero padding is exact)
    x = jnp.transpose(x, (1, 0, 2))                                # (T, B, E)
    x = jnp.pad(x, ((0, Tp - T), (0, Bp - B), (0, Ep - E)))        # (Tp, Bp, Ep)

    for layer in prep["lstm"]:
        # one big MXU matmul for all timesteps: gates_x = x @ W_ih^T + (b_ih+b_hh)
        gx = _matmul_bias(x.reshape(Tp * Bp, x.shape[-1]),
                          layer["wih_t"], layer["bias"])           # (Tp*Bp, 4Hp)
        gx = gx.reshape(Tp, Bp, 4 * Hp)
        # serial recurrence: only h @ W_hh^T on the per-step critical path
        x = _lstm_recurrent(gx, layer["whh_t"], chunk_t=_CHUNK_T)  # (Tp, Bp, Hp)

    # TODO(synk): fusing all LSTM layers + FC into one pallas_call (ping-pong
    # VMEM activations) would remove the per-layer HBM round trip.
    logits = _matmul_bias(x.reshape(Tp * Bp, Hp),
                          prep["fc_w_t"], prep["fc_b"])            # (Tp*Bp, Vp)
    logits = jnp.transpose(logits.reshape(Tp, Bp, Vp), (1, 0, 2))  # (Bp, Tp, Vp)
    return logits[:B, :T, :vocab_size]


# -----------------------------------------------------------------------------
# Pure-JAX reference (same bf16-matmul / f32-gate-math precision policy)
# -----------------------------------------------------------------------------
def decoder_rnn_reference(raw, features, captions):
    emb = jnp.take(raw["embed"], captions[:, :-1], axis=0)
    x = jnp.concatenate([features[:, None, :], emb], axis=1).astype(jnp.float32)
    x = jnp.transpose(x, (1, 0, 2))                                # (T, B, E)
    T, B, _ = x.shape

    for layer in raw["lstm"]:
        H = layer["w_hh"].shape[1]
        wih_t = layer["w_ih"].T.astype(jnp.bfloat16)
        whh_t = layer["w_hh"].T.astype(jnp.bfloat16)
        bias = (layer["b_ih"] + layer["b_hh"])[None, :]
        gx = (jnp.dot(x.reshape(T * B, -1).astype(jnp.bfloat16), wih_t,
                      preferred_element_type=jnp.float32) + bias)
        gx = gx.reshape(T, B, 4 * H)

        def step(carry, g_t, whh_t=whh_t, H=H):
            h, c = carry
            gates = g_t + jnp.dot(h.astype(jnp.bfloat16), whh_t,
                                  preferred_element_type=jnp.float32)
            i = jax.nn.sigmoid(gates[:, 0 * H:1 * H])
            f = jax.nn.sigmoid(gates[:, 1 * H:2 * H])
            g = jnp.tanh(gates[:, 2 * H:3 * H])
            o = jax.nn.sigmoid(gates[:, 3 * H:4 * H])
            c = f * c + i * g
            h = o * jnp.tanh(c)
            return (h, c), h

        init = (jnp.zeros((B, H), jnp.float32), jnp.zeros((B, H), jnp.float32))
        _, x = jax.lax.scan(step, init, gx)                        # (T, B, H)

    H = x.shape[-1]
    logits = (jnp.dot(x.reshape(T * B, H).astype(jnp.bfloat16),
                      raw["fc_w"].T.astype(jnp.bfloat16),
                      preferred_element_type=jnp.float32)
              + raw["fc_b"][None, :])
    logits = logits.reshape(T, B, -1)
    return jnp.transpose(logits, (1, 0, 2))


# -----------------------------------------------------------------------------
if __name__ == "__main__":
    embed_size, hidden_size, vocab_size, num_layers = 32, 32, 64, 2
    batch, cap_len = 2, 8

    key = jax.random.PRNGKey(0)
    k_params, k_feat, k_cap = jax.random.split(key, 3)

    raw = init_params(k_params, embed_size, hidden_size, vocab_size, num_layers)
    prep = prepare_params(raw, embed_size, hidden_size, vocab_size)

    features = jax.random.normal(k_feat, (batch, embed_size), jnp.float32)
    captions = jax.random.randint(k_cap, (batch, cap_len), 0, vocab_size,
                                  jnp.int32)

    out = decoder_rnn_forward(prep, features, captions, vocab_size=vocab_size)
    out = jax.block_until_ready(out)
    assert out.shape == (batch, cap_len, vocab_size), out.shape

    ref = decoder_rnn_reference(raw, features, captions)
    err = float(jnp.max(jnp.abs(out - ref)))
    assert err < 2e-3, err

    print("KERNEL_OK")
</pallas_src>

<mosaic_0001>
module attributes {stable_mosaic.version = 11 : i64} {
  func.func @_matmul_bias_kernel(%arg0: i32, %arg1: i32, %arg2: memref<64x128xf32, #tpu.memory_space<vmem>>, %arg3: memref<128x512xbf16, #tpu.memory_space<vmem>>, %arg4: memref<1x512xf32, #tpu.memory_space<vmem>>, %arg5: memref<64x512xf32, #tpu.memory_space<vmem>>) attributes {dimension_semantics = [#tpu.dimension_semantics<parallel>, #tpu.dimension_semantics<parallel>], iteration_bounds = array<i64: 1, 1>, scalar_prefetch = 0 : i64, scratch_operands = 0 : i64, tpu.core_type = #tpu.core_type<tc>, window_params = [{transform_indices = @transform_0, window_bounds = array<i64: 64, 128>}, {transform_indices = @transform_1, window_bounds = array<i64: 128, 512>}, {transform_indices = @transform_2, window_bounds = array<i64: 1, 512>}, {transform_indices = @transform_3, window_bounds = array<i64: 64, 512>}]} {
    %c0 = arith.constant 0 : index
    %c0_0 = arith.constant 0 : index
    %0 = vector.load %arg2[%c0, %c0_0] : memref<64x128xf32, #tpu.memory_space<vmem>>, vector<64x128xf32>
    %1 = arith.truncf %0 : vector<64x128xf32> to vector<64x128xbf16>
    %c0_1 = arith.constant 0 : index
    %c0_2 = arith.constant 0 : index
    %2 = vector.load %arg3[%c0_1, %c0_2] : memref<128x512xbf16, #tpu.memory_space<vmem>>, vector<128x512xbf16>
    %cst = arith.constant dense<0.000000e+00> : vector<64x512xf32>
    %3 = tpu.matmul %1, %2, %cst {dimension_numbers = #tpu.dot_dimension_numbers<[1], [0], [0], [1], [0, 0, 1, 1], [], []>} : vector<64x128xbf16>, vector<128x512xbf16>, vector<64x512xf32> -> vector<64x512xf32>
    %c0_3 = arith.constant 0 : index
    %c0_4 = arith.constant 0 : index
    %4 = vector.load %arg4[%c0_3, %c0_4] : memref<1x512xf32, #tpu.memory_space<vmem>>, vector<1x512xf32>
    %5 = vector.broadcast %4 : vector<1x512xf32> to vector<64x512xf32>
    %6 = arith.addf %3, %5 : vector<64x512xf32>
    %c0_5 = arith.constant 0 : index
    %c0_6 = arith.constant 0 : index
    %7 = vector.load %arg5[%c0_5, %c0_6] : memref<64x512xf32, #tpu.memory_space<vmem>>, vector<64x512xf32>
    tpu.vector_store %arg5[%c0_5, %c0_6], %6 {strides = array<i32>} : memref<64x512xf32, #tpu.memory_space<vmem>>, vector<64x512xf32>,
    return
  }
  func.func @transform_0(%arg0: i32, %arg1: i32) -> (i32, i32) {
    %c0_i32 = arith.constant 0 : i32
    %c0_i32_0 = arith.constant 0 : i32
    return %arg0, %c0_i32 : i32, i32
  }
  func.func @transform_1(%arg0: i32, %arg1: i32) -> (i32, i32) {
    %c0_i32 = arith.constant 0 : i32
    %c0_i32_0 = arith.constant 0 : i32
    return %c0_i32, %arg1 : i32, i32
  }
  func.func @transform_2(%arg0: i32, %arg1: i32) -> (i32, i32) {
    %c0_i32 = arith.constant 0 : i32
    %c0_i32_0 = arith.constant 0 : i32
    return %c0_i32, %arg1 : i32, i32
  }
  func.func @transform_3(%arg0: i32, %arg1: i32) -> (i32, i32) {
    %c0_i32 = arith.constant 0 : i32
    return %arg0, %arg1 : i32, i32
  }
}

module attributes {stable_mosaic.version = 11 : i64} {
  func.func @_matmul_bias_kernel(%arg0: i32, %arg1: i32, %arg2: memref<64x128xf32, #tpu.memory_space<vmem>>, %arg3: memref<128x128xbf16, #tpu.memory_space<vmem>>, %arg4: memref<1x128xf32, #tpu.memory_space<vmem>>, %arg5: memref<64x128xf32, #tpu.memory_space<vmem>>) attributes {dimension_semantics = [#tpu.dimension_semantics<parallel>, #tpu.dimension_semantics<parallel>], iteration_bounds = array<i64: 1, 1>, scalar_prefetch = 0 : i64, scratch_operands = 0 : i64, tpu.core_type = #tpu.core_type<tc>, window_params = [{transform_indices = @transform_0, window_bounds = array<i64: 64, 128>}, {transform_indices = @transform_1, window_bounds = array<i64: 128, 128>}, {transform_indices = @transform_2, window_bounds = array<i64: 1, 128>}, {transform_indices = @transform_3, window_bounds = array<i64: 64, 128>}]} {
    %c0 = arith.constant 0 : index
    %c0_0 = arith.constant 0 : index
    %0 = vector.load %arg2[%c0, %c0_0] : memref<64x128xf32, #tpu.memory_space<vmem>>, vector<64x128xf32>
    %1 = arith.truncf %0 : vector<64x128xf32> to vector<64x128xbf16>
    %c0_1 = arith.constant 0 : index
    %c0_2 = arith.constant 0 : index
    %2 = vector.load %arg3[%c0_1, %c0_2] : memref<128x128xbf16, #tpu.memory_space<vmem>>, vector<128x128xbf16>
    %cst = arith.constant dense<0.000000e+00> : vector<64x128xf32>
    %3 = tpu.matmul %1, %2, %cst {dimension_numbers = #tpu.dot_dimension_numbers<[1], [0], [0], [1], [0, 0, 1, 1], [], []>} : vector<64x128xbf16>, vector<128x128xbf16>, vector<64x128xf32> -> vector<64x128xf32>
    %c0_3 = arith.constant 0 : index
    %c0_4 = arith.constant 0 : index
    %4 = vector.load %arg4[%c0_3, %c0_4] : memref<1x128xf32, #tpu.memory_space<vmem>>, vector<1x128xf32>
    %5 = vector.broadcast %4 : vector<1x128xf32> to vector<64x128xf32>
    %6 = arith.addf %3, %5 : vector<64x128xf32>
    %c0_5 = arith.constant 0 : index
    %c0_6 = arith.constant 0 : index
    %7 = vector.load %arg5[%c0_5, %c0_6] : memref<64x128xf32, #tpu.memory_space<vmem>>, vector<64x128xf32>
    tpu.vector_store %arg5[%c0_5, %c0_6], %6 {strides = array<i32>} : memref<64x128xf32, #tpu.memory_space<vmem>>, vector<64x128xf32>,
    return
  }
  func.func @transform_0(%arg0: i32, %arg1: i32) -> (i32, i32) {
    %c0_i32 = arith.constant 0 : i32
    %c0_i32_0 = arith.constant 0 : i32
    return %arg0, %c0_i32 : i32, i32
  }
  func.func @transform_1(%arg0: i32, %arg1: i32) -> (i32, i32) {
    %c0_i32 = arith.constant 0 : i32
    %c0_i32_0 = arith.constant 0 : i32
    return %c0_i32, %arg1 : i32, i32
  }
  func.func @transform_2(%arg0: i32, %arg1: i32) -> (i32, i32) {
    %c0_i32 = arith.constant 0 : i32
    %c0_i32_0 = arith.constant 0 : i32
    return %c0_i32, %arg1 : i32, i32
  }
  func.func @transform_3(%arg0: i32, %arg1: i32) -> (i32, i32) {
    %c0_i32 = arith.constant 0 : i32
    return %arg0, %arg1 : i32, i32
  }
}

module attributes {stable_mosaic.version = 11 : i64} {
  func.func @_lstm_recurrent_kernel(%arg0: i32, %arg1: i32, %arg2: memref<8x8x512xf32, #tpu.memory_space<vmem>>, %arg3: memref<128x512xbf16, #tpu.memory_space<vmem>>, %arg4: memref<8x8x128xf32, #tpu.memory_space<vmem>>, %arg5: memref<8x128xf32, #tpu.memory_space<vmem>>, %arg6: memref<8x128xf32, #tpu.memory_space<vmem>>) attributes {dimension_semantics = [#tpu.dimension_semantics<parallel>, #tpu.dimension_semantics<arbitrary>], iteration_bounds = array<i64: 1, 1>, scalar_prefetch = 0 : i64, scratch_operands = 2 : i64, tpu.core_type = #tpu.core_type<tc>, window_params = [{transform_indices = @transform_0, window_bounds = array<i64: 8, 8, 512>}, {pipeline_mode = #tpu.pipeline_mode<synchronous>, transform_indices = @transform_1, window_bounds = array<i64: 128, 512>}, {transform_indices = @transform_2, window_bounds = array<i64: 8, 8, 128>}]} {
    %c0_i32 = arith.constant 0 : i32
    %0 = arith.cmpi eq, %arg1, %c0_i32 : i32
    %1 = arith.extui %0 : i1 to i32
    %c0_i32_0 = arith.constant 0 : i32
    %2 = arith.cmpi ne, %1, %c0_i32_0 : i32
    scf.if %2 {
      %cst_88 = arith.constant 0.000000e+00 : f32
      %295 = vector.broadcast %cst_88 : f32 to vector<8x128xf32>
      %c0_89 = arith.constant 0 : index
      %c0_90 = arith.constant 0 : index
      %296 = vector.load %arg5[%c0_89, %c0_90] : memref<8x128xf32, #tpu.memory_space<vmem>>, vector<8x128xf32>
      tpu.vector_store %arg5[%c0_89, %c0_90], %295 {strides = array<i32>} : memref<8x128xf32, #tpu.memory_space<vmem>>, vector<8x128xf32>,
      %cst_91 = arith.constant 0.000000e+00 : f32
      %297 = vector.broadcast %cst_91 : f32 to vector<8x128xf32>
      %c0_92 = arith.constant 0 : index
      %c0_93 = arith.constant 0 : index
      %298 = vector.load %arg6[%c0_92, %c0_93] : memref<8x128xf32, #tpu.memory_space<vmem>>, vector<8x128xf32>
      tpu.vector_store %arg6[%c0_92, %c0_93], %297 {strides = array<i32>} : memref<8x128xf32, #tpu.memory_space<vmem>>, vector<8x128xf32>,
    } else {
    }
    %c0 = arith.constant 0 : index
    %c0_1 = arith.constant 0 : index
    %3 = vector.load %arg5[%c0, %c0_1] : memref<8x128xf32, #tpu.memory_space<vmem>>, vector<8x128xf32>
    %c0_2 = arith.constant 0 : index
    %c0_3 = arith.constant 0 : index
    %4 = vector.load %arg6[%c0_2, %c0_3] : memref<8x128xf32, #tpu.memory_space<vmem>>, vector<8x128xf32>
    %c0_i32_4 = arith.constant 0 : i32
    %5 = arith.index_cast %c0_i32_4 : i32 to index
    %c0_5 = arith.constant 0 : index
    %c0_6 = arith.constant 0 : index
    %6 = vector.load %arg2[%5, %c0_5, %c0_6] : memref<8x8x512xf32, #tpu.memory_space<vmem>>, vector<1x8x512xf32>
    %7 = vector.shape_cast %6 : vector<1x8x512xf32> to vector<8x512xf32>
    %8 = arith.truncf %3 : vector<8x128xf32> to vector<8x128xbf16>
    %c0_7 = arith.constant 0 : index
    %c0_8 = arith.constant 0 : index
    %9 = vector.load %arg3[%c0_7, %c0_8] : memref<128x512xbf16, #tpu.memory_space<vmem>>, vector<128x512xbf16>
    %cst = arith.constant dense<0.000000e+00> : vector<8x512xf32>
    %10 = tpu.matmul %8, %9, %cst {dimension_numbers = #tpu.dot_dimension_numbers<[1], [0], [0], [1], [0, 0, 1, 1], [], []>} : vector<8x128xbf16>, vector<128x512xbf16>, vector<8x512xf32> -> vector<8x512xf32>
    %11 = arith.addf %7, %10 : vector<8x512xf32>
    %12 = vector.extract_strided_slice %11 {offsets = [0, 0], sizes = [8, 128], strides = [1, 1]} : vector<8x512xf32> to vector<8x128xf32>
    %13 = arith.negf %12 : vector<8x128xf32>
    %14 = math.exp %13 : vector<8x128xf32>
    %cst_9 = arith.constant 1.000000e+00 : f32
    %15 = vector.broadcast %cst_9 : f32 to vector<8x128xf32>
    %16 = arith.addf %15, %14 : vector<8x128xf32>
    %17 = arith.divf %15, %16 : vector<8x128xf32>
    %18 = vector.extract_strided_slice %11 {offsets = [0, 128], sizes = [8, 128], strides = [1, 1]} : vector<8x512xf32> to vector<8x128xf32>
    %19 = arith.negf %18 : vector<8x128xf32>
    %20 = math.exp %19 : vector<8x128xf32>
    %cst_10 = arith.constant 1.000000e+00 : f32
    %21 = vector.broadcast %cst_10 : f32 to vector<8x128xf32>
    %22 = arith.addf %21, %20 : vector<8x128xf32>
    %23 = arith.divf %21, %22 : vector<8x128xf32>
    %24 = vector.extract_strided_slice %11 {offsets = [0, 256], sizes = [8, 128], strides = [1, 1]} : vector<8x512xf32> to vector<8x128xf32>
    %25 = math.tanh %24 : vector<8x128xf32>
    %26 = vector.extract_strided_slice %11 {offsets = [0, 384], sizes = [8, 128], strides = [1, 1]} : vector<8x512xf32> to vector<8x128xf32>
    %27 = arith.negf %26 : vector<8x128xf32>
    %28 = math.exp %27 : vector<8x128xf32>
    %cst_11 = arith.constant 1.000000e+00 : f32
    %29 = vector.broadcast %cst_11 : f32 to vector<8x128xf32>
    %30 = arith.addf %29, %28 : vector<8x128xf32>
    %31 = arith.divf %29, %30 : vector<8x128xf32>
    %32 = arith.mulf %23, %4 : vector<8x128xf32>
    %33 = arith.mulf %17, %25 : vector<8x128xf32>
    %34 = arith.addf %32, %33 : vector<8x128xf32>
    %35 = math.tanh %34 : vector<8x128xf32>
    %36 = arith.mulf %31, %35 : vector<8x128xf32>
    %37 = arith.index_cast %c0_i32_4 : i32 to index
    %c0_12 = arith.constant 0 : index
    %c0_13 = arith.constant 0 : index
    %38 = vector.load %arg4[%37, %c0_12, %c0_13] : memref<8x8x128xf32, #tpu.memory_space<vmem>>, vector<1x8x128xf32>
    %39 = vector.shape_cast %38 : vector<1x8x128xf32> to vector<8x128xf32>
    %40 = vector.shape_cast %36 : vector<8x128xf32> to vector<1x8x128xf32>
    tpu.vector_store %arg4[%37, %c0_12, %c0_13], %40 {strides = array<i32>} : memref<8x8x128xf32, #tpu.memory_space<vmem>>, vector<1x8x128xf32>,
    %c1_i32 = arith.constant 1 : i32
    %41 = arith.index_cast %c1_i32 : i32 to index
    %c0_14 = arith.constant 0 : index
    %c0_15 = arith.constant 0 : index
    %42 = vector.load %arg2[%41, %c0_14, %c0_15] : memref<8x8x512xf32, #tpu.memory_space<vmem>>, vector<1x8x512xf32>
    %43 = vector.shape_cast %42 : vector<1x8x512xf32> to vector<8x512xf32>
    %44 = arith.truncf %36 : vector<8x128xf32> to vector<8x128xbf16>
    %c0_16 = arith.constant 0 : index
    %c0_17 = arith.constant 0 : index
    %45 = vector.load %arg3[%c0_16, %c0_17] : memref<128x512xbf16, #tpu.memory_space<vmem>>, vector<128x512xbf16>
    %cst_18 = arith.constant dense<0.000000e+00> : vector<8x512xf32>
    %46 = tpu.matmul %44, %45, %cst_18 {dimension_numbers = #tpu.dot_dimension_numbers<[1], [0], [0], [1], [0, 0, 1, 1], [], []>} : vector<8x128xbf16>, vector<128x512xbf16>, vector<8x512xf32> -> vector<8x512xf32>
    %47 = arith.addf %43, %46 : vector<8x512xf32>
    %48 = vector.extract_strided_slice %47 {offsets = [0, 0], sizes = [8, 128], strides = [1, 1]} : vector<8x512xf32> to vector<8x128xf32>
    %49 = arith.negf %48 : vector<8x128xf32>
    %50 = math.exp %49 : vector<8x128xf32>
    %cst_19 = arith.constant 1.000000e+00 : f32
    %51 = vector.broadcast %cst_19 : f32 to vector<8x128xf32>
    %52 = arith.addf %51, %50 : vector<8x128xf32>
    %53 = arith.divf %51, %52 : vector<8x128xf32>
    %54 = vector.extract_strided_slice %47 {offsets = [0, 128], sizes = [8, 128], strides = [1, 1]} : vector<8x512xf32> to vector<8x128xf32>
    %55 = arith.negf %54 : vector<8x128xf32>
    %56 = math.exp %55 : vector<8x128xf32>
    %cst_20 = arith.constant 1.000000e+00 : f32
    %57 = vector.broadcast %cst_20 : f32 to vector<8x128xf32>
    %58 = arith.addf %57, %56 : vector<8x128xf32>
    %59 = arith.divf %57, %58 : vector<8x128xf32>
    %60 = vector.extract_strided_slice %47 {offsets = [0, 256], sizes = [8, 128], strides = [1, 1]} : vector<8x512xf32> to vector<8x128xf32>
    %61 = math.tanh %60 : vector<8x128xf32>
    %62 = vector.extract_strided_slice %47 {offsets = [0, 384], sizes = [8, 128], strides = [1, 1]} : vector<8x512xf32> to vector<8x128xf32>
    %63 = arith.negf %62 : vector<8x128xf32>
    %64 = math.exp %63 : vector<8x128xf32>
    %cst_21 = arith.constant 1.000000e+00 : f32
    %65 = vector.broadcast %cst_21 : f32 to vector<8x128xf32>
    %66 = arith.addf %65, %64 : vector<8x128xf32>
    %67 = arith.divf %65, %66 : vector<8x128xf32>
    %68 = arith.mulf %59, %34 : vector<8x128xf32>
    %69 = arith.mulf %53, %61 : vector<8x128xf32>
    %70 = arith.addf %68, %69 : vector<8x128xf32>
    %71 = math.tanh %70 : vector<8x128xf32>
    %72 = arith.mulf %67, %71 : vector<8x128xf32>
    %73 = arith.index_cast %c1_i32 : i32 to index
    %c0_22 = arith.constant 0 : index
    %c0_23 = arith.constant 0 : index
    %74 = vector.load %arg4[%73, %c0_22, %c0_23] : memref<8x8x128xf32, #tpu.memory_space<vmem>>, vector<1x8x128xf32>
    %75 = vector.shape_cast %74 : vector<1x8x128xf32> to vector<8x128xf32>
    %76 = vector.shape_cast %72 : vector<8x128xf32> to vector<1x8x128xf32>
    tpu.vector_store %arg4[%73, %c0_22, %c0_23], %76 {strides = array<i32>} : memref<8x8x128xf32, #tpu.memory_space<vmem>>, vector<1x8x128xf32>,
    %c2_i32 = arith.constant 2 : i32
    %77 = arith.index_cast %c2_i32 : i32 to index
    %c0_24 = arith.constant 0 : index
    %c0_25 = arith.constant 0 : index
    %78 = vector.load %arg2[%77, %c0_24, %c0_25] : memref<8x8x512xf32, #tpu.memory_space<vmem>>, vector<1x8x512xf32>
    %79 = vector.shape_cast %78 : vector<1x8x512xf32> to vector<8x512xf32>
    %80 = arith.truncf %72 : vector<8x128xf32> to vector<8x128xbf16>
    %c0_26 = arith.constant 0 : index
    %c0_27 = arith.constant 0 : index
    %81 = vector.load %arg3[%c0_26, %c0_27] : memref<128x512xbf16, #tpu.memory_space<vmem>>, vector<128x512xbf16>
    %cst_28 = arith.constant dense<0.000000e+00> : vector<8x512xf32>
    %82 = tpu.matmul %80, %81, %cst_28 {dimension_numbers = #tpu.dot_dimension_numbers<[1], [0], [0], [1], [0, 0, 1, 1], [], []>} : vector<8x128xbf16>, vector<128x512xbf16>, vector<8x512xf32> -> vector<8x512xf32>
    %83 = arith.addf %79, %82 : vector<8x512xf32>
    %84 = vector.extract_strided_slice %83 {offsets = [0, 0], sizes = [8, 128], strides = [1, 1]} : vector<8x512xf32> to vector<8x128xf32>
    %85 = arith.negf %84 : vector<8x128xf32>
    %86 = math.exp %85 : vector<8x128xf32>
    %cst_29 = arith.constant 1.000000e+00 : f32
    %87 = vector.broadcast %cst_29 : f32 to vector<8x128xf32>
    %88 = arith.addf %87, %86 : vector<8x128xf32>
    %89 = arith.divf %87, %88 : vector<8x128xf32>
    %90 = vector.extract_strided_slice %83 {offsets = [0, 128], sizes = [8, 128], strides = [1, 1]} : vector<8x512xf32> to vector<8x128xf32>
    %91 = arith.negf %90 : vector<8x128xf32>
    %92 = math.exp %91 : vector<8x128xf32>
    %cst_30 = arith.constant 1.000000e+00 : f32
    %93 = vector.broadcast %cst_30 : f32 to vector<8x128xf32>
    %94 = arith.addf %93, %92 : vector<8x128xf32>
    %95 = arith.divf %93, %94 : vector<8x128xf32>
    %96 = vector.extract_strided_slice %83 {offsets = [0, 256], sizes = [8, 128], strides = [1, 1]} : vector<8x512xf32> to vector<8x128xf32>
    %97 = math.tanh %96 : vector<8x128xf32>
    %98 = vector.extract_strided_slice %83 {offsets = [0, 384], sizes = [8, 128], strides = [1, 1]} : vector<8x512xf32> to vector<8x128xf32>
    %99 = arith.negf %98 : vector<8x128xf32>
    %100 = math.exp %99 : vector<8x128xf32>
    %cst_31 = arith.constant 1.000000e+00 : f32
    %101 = vector.broadcast %cst_31 : f32 to vector<8x128xf32>
    %102 = arith.addf %101, %100 : vector<8x128xf32>
    %103 = arith.divf %101, %102 : vector<8x128xf32>
    %104 = arith.mulf %95, %70 : vector<8x128xf32>
    %105 = arith.mulf %89, %97 : vector<8x128xf32>
    %106 = arith.addf %104, %105 : vector<8x128xf32>
    %107 = math.tanh %106 : vector<8x128xf32>
    %108 = arith.mulf %103, %107 : vector<8x128xf32>
    %109 = arith.index_cast %c2_i32 : i32 to index
    %c0_32 = arith.constant 0 : index
    %c0_33 = arith.constant 0 : index
    %110 = vector.load %arg4[%109, %c0_32, %c0_33] : memref<8x8x128xf32, #tpu.memory_space<vmem>>, vector<1x8x128xf32>
    %111 = vector.shape_cast %110 : vector<1x8x128xf32> to vector<8x128xf32>
    %112 = vector.shape_cast %108 : vector<8x128xf32> to vector<1x8x128xf32>
    tpu.vector_store %arg4[%109, %c0_32, %c0_33], %112 {strides = array<i32>} : memref<8x8x128xf32, #tpu.memory_space<vmem>>, vector<1x8x128xf32>,
    %c3_i32 = arith.constant 3 : i32
    %113 = arith.index_cast %c3_i32 : i32 to index
    %c0_34 = arith.constant 0 : index
    %c0_35 = arith.constant 0 : index
    %114 = vector.load %arg2[%113, %c0_34, %c0_35] : memref<8x8x512xf32, #tpu.memory_space<vmem>>, vector<1x8x512xf32>
    %115 = vector.shape_cast %114 : vector<1x8x512xf32> to vector<8x512xf32>
    %116 = arith.truncf %108 : vector<8x128xf32> to vector<8x128xbf16>
    %c0_36 = arith.constant 0 : index
    %c0_37 = arith.constant 0 : index
    %117 = vector.load %arg3[%c0_36, %c0_37] : memref<128x512xbf16, #tpu.memory_space<vmem>>, vector<128x512xbf16>
    %cst_38 = arith.constant dense<0.000000e+00> : vector<8x512xf32>
    %118 = tpu.matmul %116, %117, %cst_38 {dimension_numbers = #tpu.dot_dimension_numbers<[1], [0], [0], [1], [0, 0, 1, 1], [], []>} : vector<8x128xbf16>, vector<128x512xbf16>, vector<8x512xf32> -> vector<8x512xf32>
    %119 = arith.addf %115, %118 : vector<8x512xf32>
    %120 = vector.extract_strided_slice %119 {offsets = [0, 0], sizes = [8, 128], strides = [1, 1]} : vector<8x512xf32> to vector<8x128xf32>
    %121 = arith.negf %120 : vector<8x128xf32>
    %122 = math.exp %121 : vector<8x128xf32>
    %cst_39 = arith.constant 1.000000e+00 : f32
    %123 = vector.broadcast %cst_39 : f32 to vector<8x128xf32>
    %124 = arith.addf %123, %122 : vector<8x128xf32>
    %125 = arith.divf %123, %124 : vector<8x128xf32>
    %126 = vector.extract_strided_slice %119 {offsets = [0, 128], sizes = [8, 128], strides = [1, 1]} : vector<8x512xf32> to vector<8x128xf32>
    %127 = arith.negf %126 : vector<8x128xf32>
    %128 = math.exp %127 : vector<8x128xf32>
    %cst_40 = arith.constant 1.000000e+00 : f32
    %129 = vector.broadcast %cst_40 : f32 to vector<8x128xf32>
    %130 = arith.addf %129, %128 : vector<8x128xf32>
    %131 = arith.divf %129, %130 : vector<8x128xf32>
    %132 = vector.extract_strided_slice %119 {offsets = [0, 256], sizes = [8, 128], strides = [1, 1]} : vector<8x512xf32> to vector<8x128xf32>
    %133 = math.tanh %132 : vector<8x128xf32>
    %134 = vector.extract_strided_slice %119 {offsets = [0, 384], sizes = [8, 128], strides = [1, 1]} : vector<8x512xf32> to vector<8x128xf32>
    %135 = arith.negf %134 : vector<8x128xf32>
    %136 = math.exp %135 : vector<8x128xf32>
    %cst_41 = arith.constant 1.000000e+00 : f32
    %137 = vector.broadcast %cst_41 : f32 to vector<8x128xf32>
    %138 = arith.addf %137, %136 : vector<8x128xf32>
    %139 = arith.divf %137, %138 : vector<8x128xf32>
    %140 = arith.mulf %131, %106 : vector<8x128xf32>
    %141 = arith.mulf %125, %133 : vector<8x128xf32>
    %142 = arith.addf %140, %141 : vector<8x128xf32>
    %143 = math.tanh %142 : vector<8x128xf32>
    %144 = arith.mulf %139, %143 : vector<8x128xf32>
    %145 = arith.index_cast %c3_i32 : i32 to index
    %c0_42 = arith.constant 0 : index
    %c0_43 = arith.constant 0 : index
    %146 = vector.load %arg4[%145, %c0_42, %c0_43] : memref<8x8x128xf32, #tpu.memory_space<vmem>>, vector<1x8x128xf32>
    %147 = vector.shape_cast %146 : vector<1x8x128xf32> to vector<8x128xf32>
    %148 = vector.shape_cast %144 : vector<8x128xf32> to vector<1x8x128xf32>
    tpu.vector_store %arg4[%145, %c0_42, %c0_43], %148 {strides = array<i32>} : memref<8x8x128xf32, #tpu.memory_space<vmem>>, vector<1x8x128xf32>,
    %c4_i32 = arith.constant 4 : i32
    %149 = arith.index_cast %c4_i32 : i32 to index
    %c0_44 = arith.constant 0 : index
    %c0_45 = arith.constant 0 : index
    %150 = vector.load %arg2[%149, %c0_44, %c0_45] : memref<8x8x512xf32, #tpu.memory_space<vmem>>, vector<1x8x512xf32>
    %151 = vector.shape_cast %150 : vector<1x8x512xf32> to vector<8x512xf32>
    %152 = arith.truncf %144 : vector<8x128xf32> to vector<8x128xbf16>
    %c0_46 = arith.constant 0 : index
    %c0_47 = arith.constant 0 : index
    %153 = vector.load %arg3[%c0_46, %c0_47] : memref<128x512xbf16, #tpu.memory_space<vmem>>, vector<128x512xbf16>
    %cst_48 = arith.constant dense<0.000000e+00> : vector<8x512xf32>
    %154 = tpu.matmul %152, %153, %cst_48 {dimension_numbers = #tpu.dot_dimension_numbers<[1], [0], [0], [1], [0, 0, 1, 1], [], []>} : vector<8x128xbf16>, vector<128x512xbf16>, vector<8x512xf32> -> vector<8x512xf32>
    %155 = arith.addf %151, %154 : vector<8x512xf32>
    %156 = vector.extract_strided_slice %155 {offsets = [0, 0], sizes = [8, 128], strides = [1, 1]} : vector<8x512xf32> to vector<8x128xf32>
    %157 = arith.negf %156 : vector<8x128xf32>
    %158 = math.exp %157 : vector<8x128xf32>
    %cst_49 = arith.constant 1.000000e+00 : f32
    %159 = vector.broadcast %cst_49 : f32 to vector<8x128xf32>
    %160 = arith.addf %159, %158 : vector<8x128xf32>
    %161 = arith.divf %159, %160 : vector<8x128xf32>
    %162 = vector.extract_strided_slice %155 {offsets = [0, 128], sizes = [8, 128], strides = [1, 1]} : vector<8x512xf32> to vector<8x128xf32>
    %163 = arith.negf %162 : vector<8x128xf32>
    %164 = math.exp %163 : vector<8x128xf32>
    %cst_50 = arith.constant 1.000000e+00 : f32
    %165 = vector.broadcast %cst_50 : f32 to vector<8x128xf32>
    %166 = arith.addf %165, %164 : vector<8x128xf32>
    %167 = arith.divf %165, %166 : vector<8x128xf32>
    %168 = vector.extract_strided_slice %155 {offsets = [0, 256], sizes = [8, 128], strides = [1, 1]} : vector<8x512xf32> to vector<8x128xf32>
    %169 = math.tanh %168 : vector<8x128xf32>
    %170 = vector.extract_strided_slice %155 {offsets = [0, 384], sizes = [8, 128], strides = [1, 1]} : vector<8x512xf32> to vector<8x128xf32>
    %171 = arith.negf %170 : vector<8x128xf32>
    %172 = math.exp %171 : vector<8x128xf32>
    %cst_51 = arith.constant 1.000000e+00 : f32
    %173 = vector.broadcast %cst_51 : f32 to vector<8x128xf32>
    %174 = arith.addf %173, %172 : vector<8x128xf32>
    %175 = arith.divf %173, %174 : vector<8x128xf32>
    %176 = arith.mulf %167, %142 : vector<8x128xf32>
    %177 = arith.mulf %161, %169 : vector<8x128xf32>
    %178 = arith.addf %176, %177 : vector<8x128xf32>
    %179 = math.tanh %178 : vector<8x128xf32>
    %180 = arith.mulf %175, %179 : vector<8x128xf32>
    %181 = arith.index_cast %c4_i32 : i32 to index
    %c0_52 = arith.constant 0 : index
    %c0_53 = arith.constant 0 : index
    %182 = vector.load %arg4[%181, %c0_52, %c0_53] : memref<8x8x128xf32, #tpu.memory_space<vmem>>, vector<1x8x128xf32>
    %183 = vector.shape_cast %182 : vector<1x8x128xf32> to vector<8x128xf32>
    %184 = vector.shape_cast %180 : vector<8x128xf32> to vector<1x8x128xf32>
    tpu.vector_store %arg4[%181, %c0_52, %c0_53], %184 {strides = array<i32>} : memref<8x8x128xf32, #tpu.memory_space<vmem>>, vector<1x8x128xf32>,
    %c5_i32 = arith.constant 5 : i32
    %185 = arith.index_cast %c5_i32 : i32 to index
    %c0_54 = arith.constant 0 : index
    %c0_55 = arith.constant 0 : index
    %186 = vector.load %arg2[%185, %c0_54, %c0_55] : memref<8x8x512xf32, #tpu.memory_space<vmem>>, vector<1x8x512xf32>
    %187 = vector.shape_cast %186 : vector<1x8x512xf32> to vector<8x512xf32>
    %188 = arith.truncf %180 : vector<8x128xf32> to vector<8x128xbf16>
    %c0_56 = arith.constant 0 : index
    %c0_57 = arith.constant 0 : index
    %189 = vector.load %arg3[%c0_56, %c0_57] : memref<128x512xbf16, #tpu.memory_space<vmem>>, vector<128x512xbf16>
    %cst_58 = arith.constant dense<0.000000e+00> : vector<8x512xf32>
    %190 = tpu.matmul %188, %189, %cst_58 {dimension_numbers = #tpu.dot_dimension_numbers<[1], [0], [0], [1], [0, 0, 1, 1], [], []>} : vector<8x128xbf16>, vector<128x512xbf16>, vector<8x512xf32> -> vector<8x512xf32>
    %191 = arith.addf %187, %190 : vector<8x512xf32>
    %192 = vector.extract_strided_slice %191 {offsets = [0, 0], sizes = [8, 128], strides = [1, 1]} : vector<8x512xf32> to vector<8x128xf32>
    %193 = arith.negf %192 : vector<8x128xf32>
    %194 = math.exp %193 : vector<8x128xf32>
    %cst_59 = arith.constant 1.000000e+00 : f32
    %195 = vector.broadcast %cst_59 : f32 to vector<8x128xf32>
    %196 = arith.addf %195, %194 : vector<8x128xf32>
    %197 = arith.divf %195, %196 : vector<8x128xf32>
    %198 = vector.extract_strided_slice %191 {offsets = [0, 128], sizes = [8, 128], strides = [1, 1]} : vector<8x512xf32> to vector<8x128xf32>
    %199 = arith.negf %198 : vector<8x128xf32>
    %200 = math.exp %199 : vector<8x128xf32>
    %cst_60 = arith.constant 1.000000e+00 : f32
    %201 = vector.broadcast %cst_60 : f32 to vector<8x128xf32>
    %202 = arith.addf %201, %200 : vector<8x128xf32>
    %203 = arith.divf %201, %202 : vector<8x128xf32>
    %204 = vector.extract_strided_slice %191 {offsets = [0, 256], sizes = [8, 128], strides = [1, 1]} : vector<8x512xf32> to vector<8x128xf32>
    %205 = math.tanh %204 : vector<8x128xf32>
    %206 = vector.extract_strided_slice %191 {offsets = [0, 384], sizes = [8, 128], strides = [1, 1]} : vector<8x512xf32> to vector<8x128xf32>
    %207 = arith.negf %206 : vector<8x128xf32>
    %208 = math.exp %207 : vector<8x128xf32>
    %cst_61 = arith.constant 1.000000e+00 : f32
    %209 = vector.broadcast %cst_61 : f32 to vector<8x128xf32>
    %210 = arith.addf %209, %208 : vector<8x128xf32>
    %211 = arith.divf %209, %210 : vector<8x128xf32>
    %212 = arith.mulf %203, %178 : vector<8x128xf32>
    %213 = arith.mulf %197, %205 : vector<8x128xf32>
    %214 = arith.addf %212, %213 : vector<8x128xf32>
    %215 = math.tanh %214 : vector<8x128xf32>
    %216 = arith.mulf %211, %215 : vector<8x128xf32>
    %217 = arith.index_cast %c5_i32 : i32 to index
    %c0_62 = arith.constant 0 : index
    %c0_63 = arith.constant 0 : index
    %218 = vector.load %arg4[%217, %c0_62, %c0_63] : memref<8x8x128xf32, #tpu.memory_space<vmem>>, vector<1x8x128xf32>
    %219 = vector.shape_cast %218 : vector<1x8x128xf32> to vector<8x128xf32>
    %220 = vector.shape_cast %216 : vector<8x128xf32> to vector<1x8x128xf32>
    tpu.vector_store %arg4[%217, %c0_62, %c0_63], %220 {strides = array<i32>} : memref<8x8x128xf32, #tpu.memory_space<vmem>>, vector<1x8x128xf32>,
    %c6_i32 = arith.constant 6 : i32
    %221 = arith.index_cast %c6_i32 : i32 to index
    %c0_64 = arith.constant 0 : index
    %c0_65 = arith.constant 0 : index
    %222 = vector.load %arg2[%221, %c0_64, %c0_65] : memref<8x8x512xf32, #tpu.memory_space<vmem>>, vector<1x8x512xf32>
    %223 = vector.shape_cast %222 : vector<1x8x512xf32> to vector<8x512xf32>
    %224 = arith.truncf %216 : vector<8x128xf32> to vector<8x128xbf16>
    %c0_66 = arith.constant 0 : index
    %c0_67 = arith.constant 0 : index
    %225 = vector.load %arg3[%c0_66, %c0_67] : memref<128x512xbf16, #tpu.memory_space<vmem>>, vector<128x512xbf16>
    %cst_68 = arith.constant dense<0.000000e+00> : vector<8x512xf32>
    %226 = tpu.matmul %224, %225, %cst_68 {dimension_numbers = #tpu.dot_dimension_numbers<[1], [0], [0], [1], [0, 0, 1, 1], [], []>} : vector<8x128xbf16>, vector<128x512xbf16>, vector<8x512xf32> -> vector<8x512xf32>
    %227 = arith.addf %223, %226 : vector<8x512xf32>
    %228 = vector.extract_strided_slice %227 {offsets = [0, 0], sizes = [8, 128], strides = [1, 1]} : vector<8x512xf32> to vector<8x128xf32>
    %229 = arith.negf %228 : vector<8x128xf32>
    %230 = math.exp %229 : vector<8x128xf32>
    %cst_69 = arith.constant 1.000000e+00 : f32
    %231 = vector.broadcast %cst_69 : f32 to vector<8x128xf32>
    %232 = arith.addf %231, %230 : vector<8x128xf32>
    %233 = arith.divf %231, %232 : vector<8x128xf32>
    %234 = vector.extract_strided_slice %227 {offsets = [0, 128], sizes = [8, 128], strides = [1, 1]} : vector<8x512xf32> to vector<8x128xf32>
    %235 = arith.negf %234 : vector<8x128xf32>
    %236 = math.exp %235 : vector<8x128xf32>
    %cst_70 = arith.constant 1.000000e+00 : f32
    %237 = vector.broadcast %cst_70 : f32 to vector<8x128xf32>
    %238 = arith.addf %237, %236 : vector<8x128xf32>
    %239 = arith.divf %237, %238 : vector<8x128xf32>
    %240 = vector.extract_strided_slice %227 {offsets = [0, 256], sizes = [8, 128], strides = [1, 1]} : vector<8x512xf32> to vector<8x128xf32>
    %241 = math.tanh %240 : vector<8x128xf32>
    %242 = vector.extract_strided_slice %227 {offsets = [0, 384], sizes = [8, 128], strides = [1, 1]} : vector<8x512xf32> to vector<8x128xf32>
    %243 = arith.negf %242 : vector<8x128xf32>
    %244 = math.exp %243 : vector<8x128xf32>
    %cst_71 = arith.constant 1.000000e+00 : f32
    %245 = vector.broadcast %cst_71 : f32 to vector<8x128xf32>
    %246 = arith.addf %245, %244 : vector<8x128xf32>
    %247 = arith.divf %245, %246 : vector<8x128xf32>
    %248 = arith.mulf %239, %214 : vector<8x128xf32>
    %249 = arith.mulf %233, %241 : vector<8x128xf32>
    %250 = arith.addf %248, %249 : vector<8x128xf32>
    %251 = math.tanh %250 : vector<8x128xf32>
    %252 = arith.mulf %247, %251 : vector<8x128xf32>
    %253 = arith.index_cast %c6_i32 : i32 to index
    %c0_72 = arith.constant 0 : index
    %c0_73 = arith.constant 0 : index
    %254 = vector.load %arg4[%253, %c0_72, %c0_73] : memref<8x8x128xf32, #tpu.memory_space<vmem>>, vector<1x8x128xf32>
    %255 = vector.shape_cast %254 : vector<1x8x128xf32> to vector<8x128xf32>
    %256 = vector.shape_cast %252 : vector<8x128xf32> to vector<1x8x128xf32>
    tpu.vector_store %arg4[%253, %c0_72, %c0_73], %256 {strides = array<i32>} : memref<8x8x128xf32, #tpu.memory_space<vmem>>, vector<1x8x128xf32>,
    %c7_i32 = arith.constant 7 : i32
    %257 = arith.index_cast %c7_i32 : i32 to index
    %c0_74 = arith.constant 0 : index
    %c0_75 = arith.constant 0 : index
    %258 = vector.load %arg2[%257, %c0_74, %c0_75] : memref<8x8x512xf32, #tpu.memory_space<vmem>>, vector<1x8x512xf32>
    %259 = vector.shape_cast %258 : vector<1x8x512xf32> to vector<8x512xf32>
    %260 = arith.truncf %252 : vector<8x128xf32> to vector<8x128xbf16>
    %c0_76 = arith.constant 0 : index
    %c0_77 = arith.constant 0 : index
    %261 = vector.load %arg3[%c0_76, %c0_77] : memref<128x512xbf16, #tpu.memory_space<vmem>>, vector<128x512xbf16>
    %cst_78 = arith.constant dense<0.000000e+00> : vector<8x512xf32>
    %262 = tpu.matmul %260, %261, %cst_78 {dimension_numbers = #tpu.dot_dimension_numbers<[1], [0], [0], [1], [0, 0, 1, 1], [], []>} : vector<8x128xbf16>, vector<128x512xbf16>, vector<8x512xf32> -> vector<8x512xf32>
    %263 = arith.addf %259, %262 : vector<8x512xf32>
    %264 = vector.extract_strided_slice %263 {offsets = [0, 0], sizes = [8, 128], strides = [1, 1]} : vector<8x512xf32> to vector<8x128xf32>
    %265 = arith.negf %264 : vector<8x128xf32>
    %266 = math.exp %265 : vector<8x128xf32>
    %cst_79 = arith.constant 1.000000e+00 : f32
    %267 = vector.broadcast %cst_79 : f32 to vector<8x128xf32>
    %268 = arith.addf %267, %266 : vector<8x128xf32>
    %269 = arith.divf %267, %268 : vector<8x128xf32>
    %270 = vector.extract_strided_slice %263 {offsets = [0, 128], sizes = [8, 128], strides = [1, 1]} : vector<8x512xf32> to vector<8x128xf32>
    %271 = arith.negf %270 : vector<8x128xf32>
    %272 = math.exp %271 : vector<8x128xf32>
    %cst_80 = arith.constant 1.000000e+00 : f32
    %273 = vector.broadcast %cst_80 : f32 to vector<8x128xf32>
    %274 = arith.addf %273, %272 : vector<8x128xf32>
    %275 = arith.divf %273, %274 : vector<8x128xf32>
    %276 = vector.extract_strided_slice %263 {offsets = [0, 256], sizes = [8, 128], strides = [1, 1]} : vector<8x512xf32> to vector<8x128xf32>
    %277 = math.tanh %276 : vector<8x128xf32>
    %278 = vector.extract_strided_slice %263 {offsets = [0, 384], sizes = [8, 128], strides = [1, 1]} : vector<8x512xf32> to vector<8x128xf32>
    %279 = arith.negf %278 : vector<8x128xf32>
    %280 = math.exp %279 : vector<8x128xf32>
    %cst_81 = arith.constant 1.000000e+00 : f32
    %281 = vector.broadcast %cst_81 : f32 to vector<8x128xf32>
    %282 = arith.addf %281, %280 : vector<8x128xf32>
    %283 = arith.divf %281, %282 : vector<8x128xf32>
    %284 = arith.mulf %275, %250 : vector<8x128xf32>
    %285 = arith.mulf %269, %277 : vector<8x128xf32>
    %286 = arith.addf %284, %285 : vector<8x128xf32>
    %287 = math.tanh %286 : vector<8x128xf32>
    %288 = arith.mulf %283, %287 : vector<8x128xf32>
    %289 = arith.index_cast %c7_i32 : i32 to index
    %c0_82 = arith.constant 0 : index
    %c0_83 = arith.constant 0 : index
    %290 = vector.load %arg4[%289, %c0_82, %c0_83] : memref<8x8x128xf32, #tpu.memory_space<vmem>>, vector<1x8x128xf32>
    %291 = vector.shape_cast %290 : vector<1x8x128xf32> to vector<8x128xf32>
    %292 = vector.shape_cast %288 : vector<8x128xf32> to vector<1x8x128xf32>
    tpu.vector_store %arg4[%289, %c0_82, %c0_83], %292 {strides = array<i32>} : memref<8x8x128xf32, #tpu.memory_space<vmem>>, vector<1x8x128xf32>,
    %c8_i32 = arith.constant 8 : i32
    %c0_84 = arith.constant 0 : index
    %c0_85 = arith.constant 0 : index
    %293 = vector.load %arg5[%c0_84, %c0_85] : memref<8x128xf32, #tpu.memory_space<vmem>>, vector<8x128xf32>
    tpu.vector_store %arg5[%c0_84, %c0_85], %288 {strides = array<i32>} : memref<8x128xf32, #tpu.memory_space<vmem>>, vector<8x128xf32>,
    %c0_86 = arith.constant 0 : index
    %c0_87 = arith.constant 0 : index
    %294 = vector.load %arg6[%c0_86, %c0_87] : memref<8x128xf32, #tpu.memory_space<vmem>>, vector<8x128xf32>
    tpu.vector_store %arg6[%c0_86, %c0_87], %286 {strides = array<i32>} : memref<8x128xf32, #tpu.memory_space<vmem>>, vector<8x128xf32>,
    return
  }
  func.func @transform_0(%arg0: i32, %arg1: i32) -> (i32, i32, i32) {
    %c0_i32 = arith.constant 0 : i32
    %c0_i32_0 = arith.constant 0 : i32
    return %arg1, %arg0, %c0_i32 : i32, i32, i32
  }
  func.func @transform_1(%arg0: i32, %arg1: i32) -> (i32, i32) {
    %c0_i32 = arith.constant 0 : i32
    %c0_i32_0 = arith.constant 0 : i32
    %c0_i32_1 = arith.constant 0 : i32
    return %c0_i32, %c0_i32_0 : i32, i32
  }
  func.func @transform_2(%arg0: i32, %arg1: i32) -> (i32, i32, i32) {
    %c0_i32 = arith.constant 0 : i32
    %c0_i32_0 = arith.constant 0 : i32
    return %arg1, %arg0, %c0_i32 : i32, i32, i32
  }
}

</mosaic_0001>

<llo_original>
// kernel: decoder_rnn_forward.9
$region0: #{decoder_rnn_forward.9}
  #allocation0 [shape = 'u32[]', space=smem, size = 0x4, offset = 0x4, fixed_abs, tag = 'smem constant byte address 0x4 - core index']
  #allocation1 [shape = 'u32[144,128]{1,0:T(1,128)}', space=vmem, size = 0x12000, scoped, tag = 'internal scratch']
  %s0 = inlined_call_operand.vmem [shape: f32[64,128], index: 0, kind: input, shape index: {}]
  %s1 = inlined_call_operand.vmem [shape: bf16[128,128], index: 1, kind: input, shape index: {}]
  %s2 = inlined_call_operand.vmem [shape: f32[1,128], index: 2, kind: input, shape index: {}]
  %s3 = inlined_call_operand.vmem [shape: f32[64,128], index: 3, kind: output, shape index: {}]
  %s4 = sld [smem:[#allocation0]]
  $region22: #{decoder_rnn_forward.9} parent=0
    _
  %s6 = ssub.s32 1, %s4
  %s7 = scalar_select 0, %s6, %s4
  // Predicated region
  $region2: #{decoder_rnn_forward.9} parent=0 // pred_check
    _
  $region3: #{decoder_rnn_forward.9} parent=0 // pred_check_branch
    %9 = sbr.rel (0) target = $region5
  $region4: #{decoder_rnn_forward.9} parent=0 // pred_region
    _
  $region5: #{decoder_rnn_forward.9} parent=0 // pred_fallthru
    _
  // Predicated region
  $region6: #{decoder_rnn_forward.9} parent=0 // pred_check
    _
  $region7: #{decoder_rnn_forward.9} parent=0 // pred_check_branch
    %11 = sbr.rel (0) target = $region9
  $region8: #{decoder_rnn_forward.9} parent=0 // pred_region
    _
  $region9: #{decoder_rnn_forward.9} parent=0 // pred_fallthru
    _
  // Predicated region
  $region10: #{decoder_rnn_forward.9} parent=0 // pred_check
    _
  $region11: #{decoder_rnn_forward.9} parent=0 // pred_check_branch
    %13 = sbr.rel (0) target = $region13
  $region12: #{decoder_rnn_forward.9} parent=0 // pred_region
    _
  $region13: #{decoder_rnn_forward.9} parent=0 // pred_fallthru
    _
  %v15 = vld [vmem:[%s0] sm:$0xff]
  %v16 = vld [vmem:[%s0 + $0x8] sm:$0xff]
  %v17 = vld [vmem:[%s0 + $0x10] sm:$0xff]
  %v18 = vld [vmem:[%s0 + $0x18] sm:$0xff]
  %v19 = vld [vmem:[%s0 + $0x20] sm:$0xff]
  %v20 = vld [vmem:[%s0 + $0x28] sm:$0xff]
  %v21 = vld [vmem:[%s0 + $0x30] sm:$0xff]
  %v22 = vld [vmem:[%s0 + $0x38] sm:$0xff]
  %v23 = vpack.c.bf16 %v16, %v15
  %v24 = vpack.c.bf16 %v18, %v17
  %v25 = vpack.c.bf16 %v20, %v19
  %v26 = vpack.c.bf16 %v22, %v21
  %v27 = vld [vmem:[%s1] sm:$0xf]
  %v28 = vld [vmem:[%s1 + $0x4] sm:$0xf]
  %v29 = vld [vmem:[%s1 + $0x8] sm:$0xf]
  %v30 = vld [vmem:[%s1 + $0xc] sm:$0xf]
  %v31 = vld [vmem:[%s1 + $0x10] sm:$0xf]
  %v32 = vld [vmem:[%s1 + $0x14] sm:$0xf]
  %v33 = vld [vmem:[%s1 + $0x18] sm:$0xf]
  %v34 = vld [vmem:[%s1 + $0x1c] sm:$0xf]
  %v35 = vld [vmem:[%s1 + $0x20] sm:$0xf]
  %v36 = vld [vmem:[%s1 + $0x24] sm:$0xf]
  %v37 = vld [vmem:[%s1 + $0x28] sm:$0xf]
  %v38 = vld [vmem:[%s1 + $0x2c] sm:$0xf]
  %v39 = vld [vmem:[%s1 + $0x30] sm:$0xf]
  %v40 = vld [vmem:[%s1 + $0x34] sm:$0xf]
  %v41 = vld [vmem:[%s1 + $0x38] sm:$0xf]
  %v42 = vld [vmem:[%s1 + $0x3c] sm:$0xf]
  %v43 = vld [vmem:[%s2] sm:$0x1]
  %v45 = vlaneseq
  %v46 = vshrl.u32 %v45, 7
  %v47 = vsub.s32 0, %v46
  %v48 = vrot.slane %v43, %v47
  %v66 = vunpack.c.l.b16 %v27
  %v67 = vunpack.c.l.b16 %v28
  %v68 = vunpack.c.l.b16 %v29
  %v69 = vunpack.c.l.b16 %v30
  %v70 = vunpack.c.l.b16 %v31
  %v71 = vunpack.c.l.b16 %v32
  %v72 = vunpack.c.l.b16 %v33
  %v73 = vunpack.c.l.b16 %v34
  %v74 = vunpack.c.l.b16 %v35
  %v75 = vunpack.c.l.b16 %v36
  %v76 = vunpack.c.l.b16 %v37
  %v77 = vunpack.c.l.b16 %v38
  %v78 = vunpack.c.l.b16 %v39
  %v79 = vunpack.c.l.b16 %v40
  %v80 = vunpack.c.l.b16 %v41
  %v81 = vunpack.c.l.b16 %v42
  %v82 = vpack.c.b16 %v67, %v66
  %v83 = vpack.c.b16 %v69, %v68
  %v84 = vpack.c.b16 %v71, %v70
  %v85 = vpack.c.b16 %v73, %v72
  %v86 = vpack.c.b16 %v75, %v74
  %v87 = vpack.c.b16 %v77, %v76
  %v88 = vpack.c.b16 %v79, %v78
  %v89 = vpack.c.b16 %v81, %v80
  %98 = vmatprep.subr.bf16.mxu0 0
  %99 = vmatpush1.bf16.msra.mxu0 %v82
  %100 = vmatprep.subr.bf16.mxu0 0
  %101 = vmatpush1.bf16.msra.mxu0 %v83
  %102 = vmatprep.subr.bf16.mxu0 0
  %103 = vmatpush1.bf16.msra.mxu0 %v84
  %104 = vmatprep.subr.bf16.mxu0 0
  %105 = vmatpush1.bf16.msra.mxu0 %v85
  %106 = vmatprep.subr.bf16.mxu0 0
  %107 = vmatpush1.bf16.msra.mxu0 %v86
  %108 = vmatprep.subr.bf16.mxu0 0
  %109 = vmatpush1.bf16.msra.mxu0 %v87
  %110 = vmatprep.subr.bf16.mxu0 0
  %111 = vmatpush1.bf16.msra.mxu0 %v88
  %112 = vmatprep.subr.bf16.mxu0 0
  %113 = vmatpush1.bf16.msra.mxu0 %v89
  %114 = vmatprep.subr.bf16.mxu0 0
  %115 = vmatpush1.bf16.msra.mxu0 0
  %116 = vmatprep.subr.bf16.mxu0 0
  %117 = vmatpush1.bf16.msra.mxu0 0
  %118 = vmatprep.subr.bf16.mxu0 0
  %119 = vmatpush1.bf16.msra.mxu0 0
  %120 = vmatprep.subr.bf16.mxu0 0
  %121 = vmatpush1.bf16.msra.mxu0 0
  %122 = vmatprep.subr.bf16.mxu0 0
  %123 = vmatpush1.bf16.msra.mxu0 0
  %124 = vmatprep.subr.bf16.mxu0 0
  %125 = vmatpush1.bf16.msra.mxu0 0
  %126 = vmatprep.subr.bf16.mxu0 0
  %127 = vmatpush1.bf16.msra.mxu0 0
  %128 = vmatprep.subr.bf16.mxu0 0
  %129 = vmatpush1.bf16.msra.mxu0 0
  %130 = vmatprep.mubr.bf16.mxu0 0
  %131 = vmatmul.mubr.bf16.gmra.mrb[0].mxu0 %v23
  %v132 = vpop.f32.mrb[0].mxu0
  %v133 = vadd.f32 %v48, %v132
  %v134 = vpop.f32.mrb[0].mxu0
  %v135 = vpop.f32.mrb[0].mxu0
  %v136 = vadd.f32 %v48, %v135
  %v137 = vpop.f32.mrb[0].mxu0
  %138 = vmatprep.mubr.bf16.mxu0 0
  %139 = vmatmul.mubr.bf16.gmra.mrb[0].mxu0 %v24
  %v140 = vpop.f32.mrb[0].mxu0
  %v141 = vadd.f32 %v48, %v140
  %v142 = vpop.f32.mrb[0].mxu0
  %v143 = vpop.f32.mrb[0].mxu0
  %v144 = vadd.f32 %v48, %v143
  %v145 = vpop.f32.mrb[0].mxu0
  %146 = vmatprep.mubr.bf16.mxu0 0
  %147 = vmatmul.mubr.bf16.gmra.mrb[0].mxu0 %v25
  %v148 = vpop.f32.mrb[0].mxu0
  %v149 = vadd.f32 %v48, %v148
  %v150 = vpop.f32.mrb[0].mxu0
  %v151 = vpop.f32.mrb[0].mxu0
  %v152 = vadd.f32 %v48, %v151
  %v153 = vpop.f32.mrb[0].mxu0
  %154 = vmatprep.mubr.bf16.mxu0 0
  %155 = vmatmul.mubr.bf16.gmra.mrb[0].mxu0 %v26
  %v156 = vpop.f32.mrb[0].mxu0
  %v157 = vadd.f32 %v48, %v156
  %v158 = vpop.f32.mrb[0].mxu0
  %v159 = vpop.f32.mrb[0].mxu0
  %v160 = vadd.f32 %v48, %v159
  %v161 = vpop.f32.mrb[0].mxu0
  %162 = vdwg.mxu0
  %163 = vst [vmem:[%s3] sm:$0xff] %v133
  %164 = vst [vmem:[%s3 + $0x8] sm:$0xff] %v136
  %165 = vst [vmem:[%s3 + $0x10] sm:$0xff] %v141
  %166 = vst [vmem:[%s3 + $0x18] sm:$0xff] %v144
  %167 = vst [vmem:[%s3 + $0x20] sm:$0xff] %v149
  %168 = vst [vmem:[%s3 + $0x28] sm:$0xff] %v152
  %169 = vst [vmem:[%s3 + $0x30] sm:$0xff] %v157
  %170 = vst [vmem:[%s3 + $0x38] sm:$0xff] %v160
  // Predicated region
  $region14: #{decoder_rnn_forward.9} parent=0 // pred_check
    _
  $region15: #{decoder_rnn_forward.9} parent=0 // pred_check_branch
    %172 = sbr.rel (0) target = $region17
  $region16: #{decoder_rnn_forward.9} parent=0 // pred_region
    _
  $region17: #{decoder_rnn_forward.9} parent=0 // pred_fallthru
    _
  // Predicated region
  $region18: #{decoder_rnn_forward.9} parent=0 // pred_check
    _
  $region19: #{decoder_rnn_forward.9} parent=0 // pred_check_branch
    %174 = sbr.rel (0) target = $region21
  $region20: #{decoder_rnn_forward.9} parent=0 // pred_region
    _
  $region21: #{decoder_rnn_forward.9} parent=0 // pred_fallthru
    _

// kernel: decoder_rnn_forward.5
$region0: #{decoder_rnn_forward.5}
  #allocation0 [shape = 'u32[]', space=smem, size = 0x4, offset = 0x4, fixed_abs, tag = 'smem constant byte address 0x4 - core index']
  #allocation1 [shape = 'u32[144,128]{1,0:T(1,128)}', space=vmem, size = 0x12000, scoped, tag = 'internal scratch']
  %s0 = inlined_call_operand.vmem [shape: f32[64,128], index: 0, kind: input, shape index: {}]
  %s1 = inlined_call_operand.vmem [shape: bf16[128,512], index: 1, kind: input, shape index: {}]
  %s2 = inlined_call_operand.vmem [shape: f32[1,512], index: 2, kind: input, shape index: {}]
  %s3 = inlined_call_operand.vmem [shape: f32[64,512], index: 3, kind: output, shape index: {}]
  %s4 = sld [smem:[#allocation0]]
  $region22: #{decoder_rnn_forward.5} parent=0
    _
  %s6 = ssub.s32 1, %s4
  %s7 = scalar_select 0, %s6, %s4
  // Predicated region
  $region2: #{decoder_rnn_forward.5} parent=0 // pred_check
    _
  $region3: #{decoder_rnn_forward.5} parent=0 // pred_check_branch
    %9 = sbr.rel (0) target = $region5
  $region4: #{decoder_rnn_forward.5} parent=0 // pred_region
    _
  $region5: #{decoder_rnn_forward.5} parent=0 // pred_fallthru
    _
  // Predicated region
  $region6: #{decoder_rnn_forward.5} parent=0 // pred_check
    _
  $region7: #{decoder_rnn_forward.5} parent=0 // pred_check_branch
    %11 = sbr.rel (0) target = $region9
  $region8: #{decoder_rnn_forward.5} parent=0 // pred_region
    _
  $region9: #{decoder_rnn_forward.5} parent=0 // pred_fallthru
    _
  // Predicated region
  $region10: #{decoder_rnn_forward.5} parent=0 // pred_check
    _
  $region11: #{decoder_rnn_forward.5} parent=0 // pred_check_branch
    %13 = sbr.rel (0) target = $region13
  $region12: #{decoder_rnn_forward.5} parent=0 // pred_region
    _
  $region13: #{decoder_rnn_forward.5} parent=0 // pred_fallthru
    _
  %v15 = vld [vmem:[%s0] sm:$0xff]
  %v16 = vld [vmem:[%s0 + $0x8] sm:$0xff]
  %v17 = vld [vmem:[%s0 + $0x10] sm:$0xff]
  %v18 = vld [vmem:[%s0 + $0x18] sm:$0xff]
  %v19 = vld [vmem:[%s0 + $0x20] sm:$0xff]
  %v20 = vld [vmem:[%s0 + $0x28] sm:$0xff]
  %v21 = vld [vmem:[%s0 + $0x30] sm:$0xff]
  %v22 = vld [vmem:[%s0 + $0x38] sm:$0xff]
  %v23 = vpack.c.bf16 %v16, %v15
  %v24 = vpack.c.bf16 %v18, %v17
  %v25 = vpack.c.bf16 %v20, %v19
  %v26 = vpack.c.bf16 %v22, %v21
  %v27 = vld [vmem:[%s1] sm:$0xff]
  %v28 = vld [vmem:[%s1 + $0x8] sm:$0xff]
  %v29 = vld [vmem:[%s1 + $0x10] sm:$0xff]
  %v30 = vld [vmem:[%s1 + $0x18] sm:$0xff]
  %v31 = vld [vmem:[%s1 + $0x20] sm:$0xff]
  %v32 = vld [vmem:[%s1 + $0x28] sm:$0xff]
  %v33 = vld [vmem:[%s1 + $0x30] sm:$0xff]
  %v34 = vld [vmem:[%s1 + $0x38] sm:$0xff]
  %v35 = vld [vmem:[%s1 + $0x40] sm:$0xff]
  %v36 = vld [vmem:[%s1 + $0x48] sm:$0xff]
  %v37 = vld [vmem:[%s1 + $0x50] sm:$0xff]
  %v38 = vld [vmem:[%s1 + $0x58] sm:$0xff]
  %v39 = vld [vmem:[%s1 + $0x60] sm:$0xff]
  %v40 = vld [vmem:[%s1 + $0x68] sm:$0xff]
  %v41 = vld [vmem:[%s1 + $0x70] sm:$0xff]
  %v42 = vld [vmem:[%s1 + $0x78] sm:$0xff]
  %v43 = vld [vmem:[%s1 + $0x80] sm:$0xff]
  %v44 = vld [vmem:[%s1 + $0x88] sm:$0xff]
  %v45 = vld [vmem:[%s1 + $0x90] sm:$0xff]
  %v46 = vld [vmem:[%s1 + $0x98] sm:$0xff]
  %v47 = vld [vmem:[%s1 + $0xa0] sm:$0xff]
  %v48 = vld [vmem:[%s1 + $0xa8] sm:$0xff]
  %v49 = vld [vmem:[%s1 + $0xb0] sm:$0xff]
  %v50 = vld [vmem:[%s1 + $0xb8] sm:$0xff]
  %v51 = vld [vmem:[%s1 + $0xc0] sm:$0xff]
  %v52 = vld [vmem:[%s1 + $0xc8] sm:$0xff]
  %v53 = vld [vmem:[%s1 + $0xd0] sm:$0xff]
  %v54 = vld [vmem:[%s1 + $0xd8] sm:$0xff]
  %v55 = vld [vmem:[%s1 + $0xe0] sm:$0xff]
  %v56 = vld [vmem:[%s1 + $0xe8] sm:$0xff]
  %v57 = vld [vmem:[%s1 + $0xf0] sm:$0xff]
  %v58 = vld [vmem:[%s1 + $0xf8] sm:$0xff]
  %v59 = vld [vmem:[%s2] sm:$0xf]
  %v61 = vlaneseq
  %v62 = vshrl.u32 %v61, 7
  %v63 = vsub.s32 0, %v62
  %v64 = vrot.slane %v59, %v63
  %v65 = vlaneseq
  %v66 = vshrl.u32 %v65, 7
  %v67 = vsub.s32 1, %v66
  %v68 = vrot.slane %v59, %v67
  %v69 = vlaneseq
  %v70 = vshrl.u32 %v69, 7
  %v71 = vsub.s32 2, %v70
  %v72 = vrot.slane %v59, %v71
  %v73 = vlaneseq
  %v74 = vshrl.u32 %v73, 7
  %v75 = vsub.s32 3, %v74
  %v76 = vrot.slane %v59, %v75
  %v113 = vunpack.c.l.b16 %v27
  %v114 = vunpack.c.h.b16 %v27
  %v115 = vunpack.c.l.b16 %v28
  %v116 = vunpack.c.h.b16 %v28
  %v117 = vunpack.c.l.b16 %v29
  %v118 = vunpack.c.h.b16 %v29
  %v119 = vunpack.c.l.b16 %v30
  %v120 = vunpack.c.h.b16 %v30
  %v121 = vunpack.c.l.b16 %v31
  %v122 = vunpack.c.h.b16 %v31
  %v123 = vunpack.c.l.b16 %v32
  %v124 = vunpack.c.h.b16 %v32
  %v125 = vunpack.c.l.b16 %v33
  %v126 = vunpack.c.h.b16 %v33
  %v127 = vunpack.c.l.b16 %v34
  %v128 = vunpack.c.h.b16 %v34
  %v129 = vunpack.c.l.b16 %v35
  %v130 = vunpack.c.h.b16 %v35
  %v131 = vunpack.c.l.b16 %v36
  %v132 = vunpack.c.h.b16 %v36
  %v133 = vunpack.c.l.b16 %v37
  %v134 = vunpack.c.h.b16 %v37
  %v135 = vunpack.c.l.b16 %v38
  %v136 = vunpack.c.h.b16 %v38
  %v137 = vunpack.c.l.b16 %v39
  %v138 = vunpack.c.h.b16 %v39
  %v139 = vunpack.c.l.b16 %v40
  %v140 = vunpack.c.h.b16 %v40
  %v141 = vunpack.c.l.b16 %v41
  %v142 = vunpack.c.h.b16 %v41
  %v143 = vunpack.c.l.b16 %v42
  %v144 = vunpack.c.h.b16 %v42
  %v145 = vunpack.c.l.b16 %v43
  %v146 = vunpack.c.h.b16 %v43
  %v147 = vunpack.c.l.b16 %v44
  %v148 = vunpack.c.h.b16 %v44
  %v149 = vunpack.c.l.b16 %v45
  %v150 = vunpack.c.h.b16 %v45
  %v151 = vunpack.c.l.b16 %v46
  %v152 = vunpack.c.h.b16 %v46
  %v153 = vunpack.c.l.b16 %v47
  %v154 = vunpack.c.h.b16 %v47
  %v155 = vunpack.c.l.b16 %v48
  %v156 = vunpack.c.h.b16 %v48
  %v157 = vunpack.c.l.b16 %v49
  %v158 = vunpack.c.h.b16 %v49
  %v159 = vunpack.c.l.b16 %v50
  %v160 = vunpack.c.h.b16 %v50
  %v161 = vunpack.c.l.b16 %v51
  %v162 = vunpack.c.h.b16 %v51
  %v163 = vunpack.c.l.b16 %v52
  %v164 = vunpack.c.h.b16 %v52
  %v165 = vunpack.c.l.b16 %v53
  %v166 = vunpack.c.h.b16 %v53
  %v167 = vunpack.c.l.b16 %v54
  %v168 = vunpack.c.h.b16 %v54
  %v169 = vunpack.c.l.b16 %v55
  %v170 = vunpack.c.h.b16 %v55
  %v171 = vunpack.c.l.b16 %v56
  %v172 = vunpack.c.h.b16 %v56
  %v173 = vunpack.c.l.b16 %v57
  %v174 = vunpack.c.h.b16 %v57
  %v175 = vunpack.c.l.b16 %v58
  %v176 = vunpack.c.h.b16 %v58
  %v177 = vpack.c.b16 %v117, %v113
  %v178 = vpack.c.b16 %v118, %v114
  %v179 = vpack.c.b16 %v119, %v115
  %v180 = vpack.c.b16 %v120, %v116
  %v181 = vpack.c.b16 %v125, %v121
  %v182 = vpack.c.b16 %v126, %v122
  %v183 = vpack.c.b16 %v127, %v123
  %v184 = vpack.c.b16 %v128, %v124
  %v185 = vpack.c.b16 %v133, %v129
  %v186 = vpack.c.b16 %v134, %v130
  %v187 = vpack.c.b16 %v135, %v131
  %v188 = vpack.c.b16 %v136, %v132
  %v189 = vpack.c.b16 %v141, %v137
  %v190 = vpack.c.b16 %v142, %v138
  %v191 = vpack.c.b16 %v143, %v139
  %v192 = vpack.c.b16 %v144, %v140
  %v193 = vpack.c.b16 %v149, %v145
  %v194 = vpack.c.b16 %v150, %v146
  %v195 = vpack.c.b16 %v151, %v147
  %v196 = vpack.c.b16 %v152, %v148
  %v197 = vpack.c.b16 %v157, %v153
  %v198 = vpack.c.b16 %v158, %v154
  %v199 = vpack.c.b16 %v159, %v155
  %v200 = vpack.c.b16 %v160, %v156
  %v201 = vpack.c.b16 %v165, %v161
  %v202 = vpack.c.b16 %v166, %v162
  %v203 = vpack.c.b16 %v167, %v163
  %v204 = vpack.c.b16 %v168, %v164
  %v205 = vpack.c.b16 %v173, %v169
  %v206 = vpack.c.b16 %v174, %v170
  %v207 = vpack.c.b16 %v175, %v171
  %v208 = vpack.c.b16 %v176, %v172
  %241 = vmatprep.subr.bf16.mxu0 %v178
  %242 = vmatpush1.bf16.msra.mxu0 %v177
  %243 = vmatprep.subr.bf16.mxu0 %v182
  %244 = vmatpush1.bf16.msra.mxu0 %v181
  %245 = vmatprep.subr.bf16.mxu0 %v186
  %246 = vmatpush1.bf16.msra.mxu0 %v185
  %247 = vmatprep.subr.bf16.mxu0 %v190
  %248 = vmatpush1.bf16.msra.mxu0 %v189
  %249 = vmatprep.subr.bf16.mxu0 %v194
  %250 = vmatpush1.bf16.msra.mxu0 %v193
  %251 = vmatprep.subr.bf16.mxu0 %v198
  %252 = vmatpush1.bf16.msra.mxu0 %v197
  %253 = vmatprep.subr.bf16.mxu0 %v202
  %254 = vmatpush1.bf16.msra.mxu0 %v201
  %255 = vmatprep.subr.bf16.mxu0 %v206
  %256 = vmatpush1.bf16.msra.mxu0 %v205
  %257 = vmatprep.subr.bf16.mxu0 0
  %258 = vmatpush1.bf16.msra.mxu0 0
  %259 = vmatprep.subr.bf16.mxu0 0
  %260 = vmatpush1.bf16.msra.mxu0 0
  %261 = vmatprep.subr.bf16.mxu0 0
  %262 = vmatpush1.bf16.msra.mxu0 0
  %263 = vmatprep.subr.bf16.mxu0 0
  %264 = vmatpush1.bf16.msra.mxu0 0
  %265 = vmatprep.subr.bf16.mxu0 0
  %266 = vmatpush1.bf16.msra.mxu0 0
  %267 = vmatprep.subr.bf16.mxu0 0
  %268 = vmatpush1.bf16.msra.mxu0 0
  %269 = vmatprep.subr.bf16.mxu0 0
  %270 = vmatpush1.bf16.msra.mxu0 0
  %271 = vmatprep.subr.bf16.mxu0 0
  %272 = vmatpush1.bf16.msra.mxu0 0
  %273 = vmatprep.mubr.bf16.mxu0 0
  %274 = vmatmul.mubr.bf16.gmra.mrb[0].mxu0 %v23
  %v275 = vpop.f32.mrb[0].mxu0
  %v276 = vadd.f32 %v64, %v275
  %v277 = vpop.f32.mrb[0].mxu0
  %v278 = vadd.f32 %v68, %v277
  %v279 = vpop.f32.mrb[0].mxu0
  %v280 = vadd.f32 %v64, %v279
  %v281 = vpop.f32.mrb[0].mxu0
  %v282 = vadd.f32 %v68, %v281
  %283 = vmatprep.mubr.bf16.mxu0 0
  %284 = vmatmul.mubr.bf16.gmra.mrb[0].mxu0 %v24
  %v285 = vpop.f32.mrb[0].mxu0
  %v286 = vadd.f32 %v64, %v285
  %v287 = vpop.f32.mrb[0].mxu0
  %v288 = vadd.f32 %v68, %v287
  %v289 = vpop.f32.mrb[0].mxu0
  %v290 = vadd.f32 %v64, %v289
  %v291 = vpop.f32.mrb[0].mxu0
  %v292 = vadd.f32 %v68, %v291
  %293 = vmatprep.mubr.bf16.mxu0 0
  %294 = vmatmul.mubr.bf16.gmra.mrb[0].mxu0 %v25
  %v295 = vpop.f32.mrb[0].mxu0
  %v296 = vadd.f32 %v64, %v295
  %v297 = vpop.f32.mrb[0].mxu0
  %v298 = vadd.f32 %v68, %v297
  %v299 = vpop.f32.mrb[0].mxu0
  %v300 = vadd.f32 %v64, %v299
  %v301 = vpop.f32.mrb[0].mxu0
  %v302 = vadd.f32 %v68, %v301
  %303 = vmatprep.mubr.bf16.mxu0 0
  %304 = vmatmul.mubr.bf16.gmra.mrb[0].mxu0 %v26
  %v305 = vpop.f32.mrb[0].mxu0
  %v306 = vadd.f32 %v64, %v305
  %v307 = vpop.f32.mrb[0].mxu0
  %v308 = vadd.f32 %v68, %v307
  %v309 = vpop.f32.mrb[0].mxu0
  %v310 = vadd.f32 %v64, %v309
  %v311 = vpop.f32.mrb[0].mxu0
  %v312 = vadd.f32 %v68, %v311
  %313 = vdwg.mxu0
  %314 = vmatprep.subr.bf16.mxu0 %v180
  %315 = vmatpush1.bf16.msra.mxu0 %v179
  %316 = vmatprep.subr.bf16.mxu0 %v184
  %317 = vmatpush1.bf16.msra.mxu0 %v183
  %318 = vmatprep.subr.bf16.mxu0 %v188
  %319 = vmatpush1.bf16.msra.mxu0 %v187
  %320 = vmatprep.subr.bf16.mxu0 %v192
  %321 = vmatpush1.bf16.msra.mxu0 %v191
  %322 = vmatprep.subr.bf16.mxu0 %v196
  %323 = vmatpush1.bf16.msra.mxu0 %v195
  %324 = vmatprep.subr.bf16.mxu0 %v200
  %325 = vmatpush1.bf16.msra.mxu0 %v199
  %326 = vmatprep.subr.bf16.mxu0 %v204
  %327 = vmatpush1.bf16.msra.mxu0 %v203
  %328 = vmatprep.subr.bf16.mxu0 %v208
  %329 = vmatpush1.bf16.msra.mxu0 %v207
  %330 = vmatprep.subr.bf16.mxu0 0
  %331 = vmatpush1.bf16.msra.mxu0 0
  %332 = vmatprep.subr.bf16.mxu0 0
  %333 = vmatpush1.bf16.msra.mxu0 0
  %334 = vmatprep.subr.bf16.mxu0 0
  %335 = vmatpush1.bf16.msra.mxu0 0
  %336 = vmatprep.subr.bf16.mxu0 0
  %337 = vmatpush1.bf16.msra.mxu0 0
  %338 = vmatprep.subr.bf16.mxu0 0
  %339 = vmatpush1.bf16.msra.mxu0 0
  %340 = vmatprep.subr.bf16.mxu0 0
  %341 = vmatpush1.bf16.msra.mxu0 0
  %342 = vmatprep.subr.bf16.mxu0 0
  %343 = vmatpush1.bf16.msra.mxu0 0
  %344 = vmatprep.subr.bf16.mxu0 0
  %345 = vmatpush1.bf16.msra.mxu0 0
  %346 = vmatprep.mubr.bf16.mxu0 0
  %347 = vmatmul.mubr.bf16.gmra.mrb[0].mxu0 %v23
  %v348 = vpop.f32.mrb[0].mxu0
  %v349 = vadd.f32 %v72, %v348
  %v350 = vpop.f32.mrb[0].mxu0
  %v351 = vadd.f32 %v76, %v350
  %v352 = vpop.f32.mrb[0].mxu0
  %v353 = vadd.f32 %v72, %v352
  %v354 = vpop.f32.mrb[0].mxu0
  %v355 = vadd.f32 %v76, %v354
  %356 = vmatprep.mubr.bf16.mxu0 0
  %357 = vmatmul.mubr.bf16.gmra.mrb[0].mxu0 %v24
  %v358 = vpop.f32.mrb[0].mxu0
  %v359 = vadd.f32 %v72, %v358
  %v360 = vpop.f32.mrb[0].mxu0
  %v361 = vadd.f32 %v76, %v360
  %v362 = vpop.f32.mrb[0].mxu0
  %v363 = vadd.f32 %v72, %v362
  %v364 = vpop.f32.mrb[0].mxu0
  %v365 = vadd.f32 %v76, %v364
  %366 = vmatprep.mubr.bf16.mxu0 0
  %367 = vmatmul.mubr.bf16.gmra.mrb[0].mxu0 %v25
  %v368 = vpop.f32.mrb[0].mxu0
  %v369 = vadd.f32 %v72, %v368
  %v370 = vpop.f32.mrb[0].mxu0
  %v371 = vadd.f32 %v76, %v370
  %v372 = vpop.f32.mrb[0].mxu0
  %v373 = vadd.f32 %v72, %v372
  %v374 = vpop.f32.mrb[0].mxu0
  %v375 = vadd.f32 %v76, %v374
  %376 = vmatprep.mubr.bf16.mxu0 0
  %377 = vmatmul.mubr.bf16.gmra.mrb[0].mxu0 %v26
  %v378 = vpop.f32.mrb[0].mxu0
  %v379 = vadd.f32 %v72, %v378
  %v380 = vpop.f32.mrb[0].mxu0
  %v381 = vadd.f32 %v76, %v380
  %v382 = vpop.f32.mrb[0].mxu0
  %v383 = vadd.f32 %v72, %v382
  %v384 = vpop.f32.mrb[0].mxu0
  %v385 = vadd.f32 %v76, %v384
  %386 = vdwg.mxu0
  %387 = vst [vmem:[%s3] sm:$0xff] %v276
  %388 = vst [vmem:[%s3 + $0x8] sm:$0xff] %v278
  %389 = vst [vmem:[%s3 + $0x10] sm:$0xff] %v349
  %390 = vst [vmem:[%s3 + $0x18] sm:$0xff] %v351
  %391 = vst [vmem:[%s3 + $0x20] sm:$0xff] %v280
  %392 = vst [vmem:[%s3 + $0x28] sm:$0xff] %v282
  %393 = vst [vmem:[%s3 + $0x30] sm:$0xff] %v353
  %394 = vst [vmem:[%s3 + $0x38] sm:$0xff] %v355
  %395 = vst [vmem:[%s3 + $0x40] sm:$0xff] %v286
  %396 = vst [vmem:[%s3 + $0x48] sm:$0xff] %v288
  %397 = vst [vmem:[%s3 + $0x50] sm:$0xff] %v359
  %398 = vst [vmem:[%s3 + $0x58] sm:$0xff] %v361
  %399 = vst [vmem:[%s3 + $0x60] sm:$0xff] %v290
  %400 = vst [vmem:[%s3 + $0x68] sm:$0xff] %v292
  %401 = vst [vmem:[%s3 + $0x70] sm:$0xff] %v363
  %402 = vst [vmem:[%s3 + $0x78] sm:$0xff] %v365
  %403 = vst [vmem:[%s3 + $0x80] sm:$0xff] %v296
  %404 = vst [vmem:[%s3 + $0x88] sm:$0xff] %v298
  %405 = vst [vmem:[%s3 + $0x90] sm:$0xff] %v369
  %406 = vst [vmem:[%s3 + $0x98] sm:$0xff] %v371
  %407 = vst [vmem:[%s3 + $0xa0] sm:$0xff] %v300
  %408 = vst [vmem:[%s3 + $0xa8] sm:$0xff] %v302
  %409 = vst [vmem:[%s3 + $0xb0] sm:$0xff] %v373
  %410 = vst [vmem:[%s3 + $0xb8] sm:$0xff] %v375
  %411 = vst [vmem:[%s3 + $0xc0] sm:$0xff] %v306
  %412 = vst [vmem:[%s3 + $0xc8] sm:$0xff] %v308
  %413 = vst [vmem:[%s3 + $0xd0] sm:$0xff] %v379
  %414 = vst [vmem:[%s3 + $0xd8] sm:$0xff] %v381
  %415 = vst [vmem:[%s3 + $0xe0] sm:$0xff] %v310
  %416 = vst [vmem:[%s3 + $0xe8] sm:$0xff] %v312
  %417 = vst [vmem:[%s3 + $0xf0] sm:$0xff] %v383
  %418 = vst [vmem:[%s3 + $0xf8] sm:$0xff] %v385
  // Predicated region
  $region14: #{decoder_rnn_forward.5} parent=0 // pred_check
    _
  $region15: #{decoder_rnn_forward.5} parent=0 // pred_check_branch
    %420 = sbr.rel (0) target = $region17
  $region16: #{decoder_rnn_forward.5} parent=0 // pred_region
    _
  $region17: #{decoder_rnn_forward.5} parent=0 // pred_fallthru
    _
  // Predicated region
  $region18: #{decoder_rnn_forward.5} parent=0 // pred_check
    _
  $region19: #{decoder_rnn_forward.5} parent=0 // pred_check_branch
    %422 = sbr.rel (0) target = $region21
  $region20: #{decoder_rnn_forward.5} parent=0 // pred_region
    _
  $region21: #{decoder_rnn_forward.5} parent=0 // pred_fallthru
    _

// kernel: decoder_rnn_forward.6
$region0: #{decoder_rnn_forward.6}
  #allocation0 [shape = 'u32[]', space=smem, size = 0x4, offset = 0x4, fixed_abs, tag = 'smem constant byte address 0x4 - core index']
  #allocation1 [shape = 'u32[144,128]{1,0:T(1,128)}', space=vmem, size = 0x12000, scoped, tag = 'internal scratch']
  #allocation2 [shape = 'f32[8,128]{1,0:T(8,128)}', space=vmem, size = 0x1000, scoped, tag = 'scratch operand']
  #allocation3 [shape = 'f32[8,128]{1,0:T(8,128)}', space=vmem, size = 0x1000, scoped, tag = 'scratch operand']
  %s0 = inlined_call_operand.vmem [shape: f32[8,8,512], index: 0, kind: input, shape index: {}]
  %s1 = inlined_call_operand.vmem [shape: bf16[128,512], index: 1, kind: input, shape index: {}]
  %s2 = inlined_call_operand.vmem [shape: f32[8,8,128], index: 2, kind: output, shape index: {}]
  %s3 = sld [smem:[#allocation0]]
  $region22: #{decoder_rnn_forward.6} parent=0
    _
  %s5 = ssub.s32 1, %s3
  %s6 = scalar_select 0, %s5, %s3
  // Predicated region
  $region2: #{decoder_rnn_forward.6} parent=0 // pred_check
    _
  $region3: #{decoder_rnn_forward.6} parent=0 // pred_check_branch
    %8 = sbr.rel (0) target = $region5
  $region4: #{decoder_rnn_forward.6} parent=0 // pred_region
    _
  $region5: #{decoder_rnn_forward.6} parent=0 // pred_fallthru
    _
  // Predicated region
  $region6: #{decoder_rnn_forward.6} parent=0 // pred_check
    _
  $region7: #{decoder_rnn_forward.6} parent=0 // pred_check_branch
    %10 = sbr.rel (0) target = $region9
  $region8: #{decoder_rnn_forward.6} parent=0 // pred_region
    _
  $region9: #{decoder_rnn_forward.6} parent=0 // pred_fallthru
    _
  %p12 = scmp.eq.s32.totalorder 0, 0
  // Predicated region
  $region10: #{decoder_rnn_forward.6} parent=0 // pred_check
    %p13 = pneg %p12
  $region11: #{decoder_rnn_forward.6} parent=0 // pred_check_branch
    %15 = sbr.rel (%p13) target = $region13
  $region12: #{decoder_rnn_forward.6} parent=0 // pred_region
    %16 = vst [vmem:[#allocation2] sm:$0xff] 0.0
    %17 = vst [vmem:[#allocation3] sm:$0xff] 0.0
  $region13: #{decoder_rnn_forward.6} parent=0 // pred_fallthru
    _
  %v18 = vld [vmem:[#allocation2] sm:$0xff]
  %v19 = vld [vmem:[#allocation3] sm:$0xff]
  %v20 = vld [vmem:[%s0] sm:$0xff]
  %v21 = vld [vmem:[%s0 + $0x8] sm:$0xff]
  %v22 = vld [vmem:[%s0 + $0x10] sm:$0xff]
  %v23 = vld [vmem:[%s0 + $0x18] sm:$0xff]
  %v24 = vpack.c.bf16 %v18, %v18
  %v25 = vld [vmem:[%s1] sm:$0xff]
  %v26 = vld [vmem:[%s1 + $0x8] sm:$0xff]
  %v27 = vld [vmem:[%s1 + $0x10] sm:$0xff]
  %v28 = vld [vmem:[%s1 + $0x18] sm:$0xff]
  %v29 = vld [vmem:[%s1 + $0x20] sm:$0xff]
  %v30 = vld [vmem:[%s1 + $0x28] sm:$0xff]
  %v31 = vld [vmem:[%s1 + $0x30] sm:$0xff]
  %v32 = vld [vmem:[%s1 + $0x38] sm:$0xff]
  %v33 = vld [vmem:[%s1 + $0x40] sm:$0xff]
  %v34 = vld [vmem:[%s1 + $0x48] sm:$0xff]
  %v35 = vld [vmem:[%s1 + $0x50] sm:$0xff]
  %v36 = vld [vmem:[%s1 + $0x58] sm:$0xff]
  %v37 = vld [vmem:[%s1 + $0x60] sm:$0xff]
  %v38 = vld [vmem:[%s1 + $0x68] sm:$0xff]
  %v39 = vld [vmem:[%s1 + $0x70] sm:$0xff]
  %v40 = vld [vmem:[%s1 + $0x78] sm:$0xff]
  %v41 = vld [vmem:[%s1 + $0x80] sm:$0xff]
  %v42 = vld [vmem:[%s1 + $0x88] sm:$0xff]
  %v43 = vld [vmem:[%s1 + $0x90] sm:$0xff]
  %v44 = vld [vmem:[%s1 + $0x98] sm:$0xff]
  %v45 = vld [vmem:[%s1 + $0xa0] sm:$0xff]
  %v46 = vld [vmem:[%s1 + $0xa8] sm:$0xff]
  %v47 = vld [vmem:[%s1 + $0xb0] sm:$0xff]
  %v48 = vld [vmem:[%s1 + $0xb8] sm:$0xff]
  %v49 = vld [vmem:[%s1 + $0xc0] sm:$0xff]
  %v50 = vld [vmem:[%s1 + $0xc8] sm:$0xff]
  %v51 = vld [vmem:[%s1 + $0xd0] sm:$0xff]
  %v52 = vld [vmem:[%s1 + $0xd8] sm:$0xff]
  %v53 = vld [vmem:[%s1 + $0xe0] sm:$0xff]
  %v54 = vld [vmem:[%s1 + $0xe8] sm:$0xff]
  %v55 = vld [vmem:[%s1 + $0xf0] sm:$0xff]
  %v56 = vld [vmem:[%s1 + $0xf8] sm:$0xff]
  %v89 = vunpack.c.l.b16 %v25
  %v90 = vunpack.c.h.b16 %v25
  %v91 = vunpack.c.l.b16 %v26
  %v92 = vunpack.c.h.b16 %v26
  %v93 = vunpack.c.l.b16 %v27
  %v94 = vunpack.c.h.b16 %v27
  %v95 = vunpack.c.l.b16 %v28
  %v96 = vunpack.c.h.b16 %v28
  %v97 = vunpack.c.l.b16 %v29
  %v98 = vunpack.c.h.b16 %v29
  %v99 = vunpack.c.l.b16 %v30
  %v100 = vunpack.c.h.b16 %v30
  %v101 = vunpack.c.l.b16 %v31
  %v102 = vunpack.c.h.b16 %v31
  %v103 = vunpack.c.l.b16 %v32
  %v104 = vunpack.c.h.b16 %v32
  %v105 = vunpack.c.l.b16 %v33
  %v106 = vunpack.c.h.b16 %v33
  %v107 = vunpack.c.l.b16 %v34
  %v108 = vunpack.c.h.b16 %v34
  %v109 = vunpack.c.l.b16 %v35
  %v110 = vunpack.c.h.b16 %v35
  %v111 = vunpack.c.l.b16 %v36
  %v112 = vunpack.c.h.b16 %v36
  %v113 = vunpack.c.l.b16 %v37
  %v114 = vunpack.c.h.b16 %v37
  %v115 = vunpack.c.l.b16 %v38
  %v116 = vunpack.c.h.b16 %v38
  %v117 = vunpack.c.l.b16 %v39
  %v118 = vunpack.c.h.b16 %v39
  %v119 = vunpack.c.l.b16 %v40
  %v120 = vunpack.c.h.b16 %v40
  %v121 = vunpack.c.l.b16 %v41
  %v122 = vunpack.c.h.b16 %v41
  %v123 = vunpack.c.l.b16 %v42
  %v124 = vunpack.c.h.b16 %v42
  %v125 = vunpack.c.l.b16 %v43
  %v126 = vunpack.c.h.b16 %v43
  %v127 = vunpack.c.l.b16 %v44
  %v128 = vunpack.c.h.b16 %v44
  %v129 = vunpack.c.l.b16 %v45
  %v130 = vunpack.c.h.b16 %v45
  %v131 = vunpack.c.l.b16 %v46
  %v132 = vunpack.c.h.b16 %v46
  %v133 = vunpack.c.l.b16 %v47
  %v134 = vunpack.c.h.b16 %v47
  %v135 = vunpack.c.l.b16 %v48
  %v136 = vunpack.c.h.b16 %v48
  %v137 = vunpack.c.l.b16 %v49
  %v138 = vunpack.c.h.b16 %v49
  %v139 = vunpack.c.l.b16 %v50
  %v140 = vunpack.c.h.b16 %v50
  %v141 = vunpack.c.l.b16 %v51
  %v142 = vunpack.c.h.b16 %v51
  %v143 = vunpack.c.l.b16 %v52
  %v144 = vunpack.c.h.b16 %v52
  %v145 = vunpack.c.l.b16 %v53
  %v146 = vunpack.c.h.b16 %v53
  %v147 = vunpack.c.l.b16 %v54
  %v148 = vunpack.c.h.b16 %v54
  %v149 = vunpack.c.l.b16 %v55
  %v150 = vunpack.c.h.b16 %v55
  %v151 = vunpack.c.l.b16 %v56
  %v152 = vunpack.c.h.b16 %v56
  %v153 = vpack.c.b16 %v93, %v89
  %v154 = vpack.c.b16 %v94, %v90
  %v155 = vpack.c.b16 %v95, %v91
  %v156 = vpack.c.b16 %v96, %v92
  %v157 = vpack.c.b16 %v101, %v97
  %v158 = vpack.c.b16 %v102, %v98
  %v159 = vpack.c.b16 %v103, %v99
  %v160 = vpack.c.b16 %v104, %v100
  %v161 = vpack.c.b16 %v109, %v105
  %v162 = vpack.c.b16 %v110, %v106
  %v163 = vpack.c.b16 %v111, %v107
  %v164 = vpack.c.b16 %v112, %v108
  %v165 = vpack.c.b16 %v117, %v113
  %v166 = vpack.c.b16 %v118, %v114
  %v167 = vpack.c.b16 %v119, %v115
  %v168 = vpack.c.b16 %v120, %v116
  %v169 = vpack.c.b16 %v125, %v121
  %v170 = vpack.c.b16 %v126, %v122
  %v171 = vpack.c.b16 %v127, %v123
  %v172 = vpack.c.b16 %v128, %v124
  %v173 = vpack.c.b16 %v133, %v129
  %v174 = vpack.c.b16 %v134, %v130
  %v175 = vpack.c.b16 %v135, %v131
  %v176 = vpack.c.b16 %v136, %v132
  %v177 = vpack.c.b16 %v141, %v137
  %v178 = vpack.c.b16 %v142, %v138
  %v179 = vpack.c.b16 %v143, %v139
  %v180 = vpack.c.b16 %v144, %v140
  %v181 = vpack.c.b16 %v149, %v145
  %v182 = vpack.c.b16 %v150, %v146
  %v183 = vpack.c.b16 %v151, %v147
  %v184 = vpack.c.b16 %v152, %v148
  %217 = vmatprep.subr.bf16.mxu0 %v154
  %218 = vmatpush1.bf16.msra.mxu0 %v153
  %219 = vmatprep.subr.bf16.mxu0 %v158
  %220 = vmatpush1.bf16.msra.mxu0 %v157
  %221 = vmatprep.subr.bf16.mxu0 %v162
  %222 = vmatpush1.bf16.msra.mxu0 %v161
  %223 = vmatprep.subr.bf16.mxu0 %v166
  %224 = vmatpush1.bf16.msra.mxu0 %v165
  %225 = vmatprep.subr.bf16.mxu0 %v170
  %226 = vmatpush1.bf16.msra.mxu0 %v169
  %227 = vmatprep.subr.bf16.mxu0 %v174
  %228 = vmatpush1.bf16.msra.mxu0 %v173
  %229 = vmatprep.subr.bf16.mxu0 %v178
  %230 = vmatpush1.bf16.msra.mxu0 %v177
  %231 = vmatprep.subr.bf16.mxu0 %v182
  %232 = vmatpush1.bf16.msra.mxu0 %v181
  %233 = vmatprep.subr.bf16.mxu0 0
  %234 = vmatpush1.bf16.msra.mxu0 0
  %235 = vmatprep.subr.bf16.mxu0 0
  %236 = vmatpush1.bf16.msra.mxu0 0
  %237 = vmatprep.subr.bf16.mxu0 0
  %238 = vmatpush1.bf16.msra.mxu0 0
  %239 = vmatprep.subr.bf16.mxu0 0
  %240 = vmatpush1.bf16.msra.mxu0 0
  %241 = vmatprep.subr.bf16.mxu0 0
  %242 = vmatpush1.bf16.msra.mxu0 0
  %243 = vmatprep.subr.bf16.mxu0 0
  %244 = vmatpush1.bf16.msra.mxu0 0
  %245 = vmatprep.subr.bf16.mxu0 0
  %246 = vmatpush1.bf16.msra.mxu0 0
  %247 = vmatprep.subr.bf16.mxu0 0
  %248 = vmatpush1.bf16.msra.mxu0 0
  %249 = vmatprep.mubr.bf16.mxu0 0
  %250 = vmatmul.mubr.bf16.gmra.mrb[0].mxu0 %v24
  %v251 = vpop.f32.mrb[0].mxu0
  %v252 = vadd.f32 0.0, %v251
  %v253 = vpop.f32.mrb[0].mxu0
  %v254 = vadd.f32 0.0, %v253
  %v255 = vpop.f32.mrb[0].mxu0
  %v256 = vpop.f32.mrb[0].mxu0
  %257 = vdwg.mxu0
  %258 = vmatprep.subr.bf16.mxu0 %v156
  %259 = vmatpush1.bf16.msra.mxu0 %v155
  %260 = vmatprep.subr.bf16.mxu0 %v160
  %261 = vmatpush1.bf16.msra.mxu0 %v159
  %262 = vmatprep.subr.bf16.mxu0 %v164
  %263 = vmatpush1.bf16.msra.mxu0 %v163
  %264 = vmatprep.subr.bf16.mxu0 %v168
  %265 = vmatpush1.bf16.msra.mxu0 %v167
  %266 = vmatprep.subr.bf16.mxu0 %v172
  %267 = vmatpush1.bf16.msra.mxu0 %v171
  %268 = vmatprep.subr.bf16.mxu0 %v176
  %269 = vmatpush1.bf16.msra.mxu0 %v175
  %270 = vmatprep.subr.bf16.mxu0 %v180
  %271 = vmatpush1.bf16.msra.mxu0 %v179
  %272 = vmatprep.subr.bf16.mxu0 %v184
  %273 = vmatpush1.bf16.msra.mxu0 %v183
  %274 = vmatprep.subr.bf16.mxu0 0
  %275 = vmatpush1.bf16.msra.mxu0 0
  %276 = vmatprep.subr.bf16.mxu0 0
  %277 = vmatpush1.bf16.msra.mxu0 0
  %278 = vmatprep.subr.bf16.mxu0 0
  %279 = vmatpush1.bf16.msra.mxu0 0
  %280 = vmatprep.subr.bf16.mxu0 0
  %281 = vmatpush1.bf16.msra.mxu0 0
  %282 = vmatprep.subr.bf16.mxu0 0
  %283 = vmatpush1.bf16.msra.mxu0 0
  %284 = vmatprep.subr.bf16.mxu0 0
  %285 = vmatpush1.bf16.msra.mxu0 0
  %286 = vmatprep.subr.bf16.mxu0 0
  %287 = vmatpush1.bf16.msra.mxu0 0
  %288 = vmatprep.subr.bf16.mxu0 0
  %289 = vmatpush1.bf16.msra.mxu0 0
  %290 = vmatprep.mubr.bf16.mxu0 0
  %291 = vmatmul.mubr.bf16.gmra.mrb[0].mxu0 %v24
  %v292 = vpop.f32.mrb[0].mxu0
  %v293 = vadd.f32 0.0, %v292
  %v294 = vpop.f32.mrb[0].mxu0
  %v295 = vadd.f32 0.0, %v294
  %v296 = vpop.f32.mrb[0].mxu0
  %v297 = vpop.f32.mrb[0].mxu0
  %298 = vdwg.mxu0
  %v299 = vadd.f32 %v20, %v252
  %v300 = vadd.f32 %v21, %v254
  %v301 = vadd.f32 %v22, %v293
  %v302 = vadd.f32 %v23, %v295
  %v303 = vxor.u32 %v299, 2147483648
  %v304 = vmul.f32 %v303, 1.442695
  %v305 = vpow.pop %v304
  %v306 = vadd.f32 %v305, 1.0
  %v307 = vrcp.pop %v306
  %v308 = vmul.f32 1.0, %v307
  %v309 = vxor.u32 %v300, 2147483648
  %v310 = vmul.f32 %v309, 1.442695
  %v311 = vpow.pop %v310
  %v312 = vadd.f32 %v311, 1.0
  %v313 = vrcp.pop %v312
  %v314 = vmul.f32 1.0, %v313
  %v315 = vtanh.pop %v301
  %v316 = vxor.u32 %v302, 2147483648
  %v317 = vmul.f32 %v316, 1.442695
  %v318 = vpow.pop %v317
  %v319 = vadd.f32 %v318, 1.0
  %v320 = vrcp.pop %v319
  %v321 = vmul.f32 1.0, %v320
  %v322 = vmul.f32 %v314, %v19
  %v323 = vmul.f32 %v308, %v315
  %v324 = vadd.f32 %v322, %v323
  %v325 = vtanh.pop %v324
  %v326 = vmul.f32 %v321, %v325
  %327 = vst [vmem:[%s2] sm:$0xff] %v326
  %s328 = scalar_lea.vmem %s0, 32
  %v329 = vld [vmem:[%s328] sm:$0xff]
  %v330 = vld [vmem:[%s328 + $0x8] sm:$0xff]
  %v331 = vld [vmem:[%s328 + $0x10] sm:$0xff]
  %v332 = vld [vmem:[%s328 + $0x18] sm:$0xff]
  %v333 = vpack.c.bf16 %v326, %v326
  %v334 = vld [vmem:[%s1] sm:$0xff]
  %v335 = vld [vmem:[%s1 + $0x8] sm:$0xff]
  %v336 = vld [vmem:[%s1 + $0x10] sm:$0xff]
  %v337 = vld [vmem:[%s1 + $0x18] sm:$0xff]
  %v338 = vld [vmem:[%s1 + $0x20] sm:$0xff]
  %v339 = vld [vmem:[%s1 + $0x28] sm:$0xff]
  %v340 = vld [vmem:[%s1 + $0x30] sm:$0xff]
  %v341 = vld [vmem:[%s1 + $0x38] sm:$0xff]
  %v342 = vld [vmem:[%s1 + $0x40] sm:$0xff]
  %v343 = vld [vmem:[%s1 + $0x48] sm:$0xff]
  %v344 = vld [vmem:[%s1 + $0x50] sm:$0xff]
  %v345 = vld [vmem:[%s1 + $0x58] sm:$0xff]
  %v346 = vld [vmem:[%s1 + $0x60] sm:$0xff]
  %v347 = vld [vmem:[%s1 + $0x68] sm:$0xff]
  %v348 = vld [vmem:[%s1 + $0x70] sm:$0xff]
  %v349 = vld [vmem:[%s1 + $0x78] sm:$0xff]
  %v350 = vld [vmem:[%s1 + $0x80] sm:$0xff]
  %v351 = vld [vmem:[%s1 + $0x88] sm:$0xff]
  %v352 = vld [vmem:[%s1 + $0x90] sm:$0xff]
  %v353 = vld [vmem:[%s1 + $0x98] sm:$0xff]
  %v354 = vld [vmem:[%s1 + $0xa0] sm:$0xff]
  %v355 = vld [vmem:[%s1 + $0xa8] sm:$0xff]
  %v356 = vld [vmem:[%s1 + $0xb0] sm:$0xff]
  %v357 = vld [vmem:[%s1 + $0xb8] sm:$0xff]
  %v358 = vld [vmem:[%s1 + $0xc0] sm:$0xff]
  %v359 = vld [vmem:[%s1 + $0xc8] sm:$0xff]
  %v360 = vld [vmem:[%s1 + $0xd0] sm:$0xff]
  %v361 = vld [vmem:[%s1 + $0xd8] sm:$0xff]
  %v362 = vld [vmem:[%s1 + $0xe0] sm:$0xff]
  %v363 = vld [vmem:[%s1 + $0xe8] sm:$0xff]
  %v364 = vld [vmem:[%s1 + $0xf0] sm:$0xff]
  %v365 = vld [vmem:[%s1 + $0xf8] sm:$0xff]
  %v398 = vunpack.c.l.b16 %v334
  %v399 = vunpack.c.h.b16 %v334
  %v400 = vunpack.c.l.b16 %v335
  %v401 = vunpack.c.h.b16 %v335
  %v402 = vunpack.c.l.b16 %v336
  %v403 = vunpack.c.h.b16 %v336
  %v404 = vunpack.c.l.b16 %v337
  %v405 = vunpack.c.h.b16 %v337
  %v406 = vunpack.c.l.b16 %v338
  %v407 = vunpack.c.h.b16 %v338
  %v408 = vunpack.c.l.b16 %v339
  %v409 = vunpack.c.h.b16 %v339
  %v410 = vunpack.c.l.b16 %v340
  %v411 = vunpack.c.h.b16 %v340
  %v412 = vunpack.c.l.b16 %v341
  %v413 = vunpack.c.h.b16 %v341
  %v414 = vunpack.c.l.b16 %v342
  %v415 = vunpack.c.h.b16 %v342
  %v416 = vunpack.c.l.b16 %v343
  %v417 = vunpack.c.h.b16 %v343
  %v418 = vunpack.c.l.b16 %v344
  %v419 = vunpack.c.h.b16 %v344
  %v420 = vunpack.c.l.b16 %v345
  %v421 = vunpack.c.h.b16 %v345
  %v422 = vunpack.c.l.b16 %v346
  %v423 = vunpack.c.h.b16 %v346
  %v424 = vunpack.c.l.b16 %v347
  %v425 = vunpack.c.h.b16 %v347
  %v426 = vunpack.c.l.b16 %v348
  %v427 = vunpack.c.h.b16 %v348
  %v428 = vunpack.c.l.b16 %v349
  %v429 = vunpack.c.h.b16 %v349
  %v430 = vunpack.c.l.b16 %v350
  %v431 = vunpack.c.h.b16 %v350
  %v432 = vunpack.c.l.b16 %v351
  %v433 = vunpack.c.h.b16 %v351
  %v434 = vunpack.c.l.b16 %v352
  %v435 = vunpack.c.h.b16 %v352
  %v436 = vunpack.c.l.b16 %v353
  %v437 = vunpack.c.h.b16 %v353
  %v438 = vunpack.c.l.b16 %v354
  %v439 = vunpack.c.h.b16 %v354
  %v440 = vunpack.c.l.b16 %v355
  %v441 = vunpack.c.h.b16 %v355
  %v442 = vunpack.c.l.b16 %v356
  %v443 = vunpack.c.h.b16 %v356
  %v444 = vunpack.c.l.b16 %v357
  %v445 = vunpack.c.h.b16 %v357
  %v446 = vunpack.c.l.b16 %v358
  %v447 = vunpack.c.h.b16 %v358
  %v448 = vunpack.c.l.b16 %v359
  %v449 = vunpack.c.h.b16 %v359
  %v450 = vunpack.c.l.b16 %v360
  %v451 = vunpack.c.h.b16 %v360
  %v452 = vunpack.c.l.b16 %v361
  %v453 = vunpack.c.h.b16 %v361
  %v454 = vunpack.c.l.b16 %v362
  %v455 = vunpack.c.h.b16 %v362
  %v456 = vunpack.c.l.b16 %v363
  %v457 = vunpack.c.h.b16 %v363
  %v458 = vunpack.c.l.b16 %v364
  %v459 = vunpack.c.h.b16 %v364
  %v460 = vunpack.c.l.b16 %v365
  %v461 = vunpack.c.h.b16 %v365
  %v462 = vpack.c.b16 %v402, %v398
  %v463 = vpack.c.b16 %v403, %v399
  %v464 = vpack.c.b16 %v404, %v400
  %v465 = vpack.c.b16 %v405, %v401
  %v466 = vpack.c.b16 %v410, %v406
  %v467 = vpack.c.b16 %v411, %v407
  %v468 = vpack.c.b16 %v412, %v408
  %v469 = vpack.c.b16 %v413, %v409
  %v470 = vpack.c.b16 %v418, %v414
  %v471 = vpack.c.b16 %v419, %v415
  %v472 = vpack.c.b16 %v420, %v416
  %v473 = vpack.c.b16 %v421, %v417
  %v474 = vpack.c.b16 %v426, %v422
  %v475 = vpack.c.b16 %v427, %v423
  %v476 = vpack.c.b16 %v428, %v424
  %v477 = vpack.c.b16 %v429, %v425
  %v478 = vpack.c.b16 %v434, %v430
  %v479 = vpack.c.b16 %v435, %v431
  %v480 = vpack.c.b16 %v436, %v432
  %v481 = vpack.c.b16 %v437, %v433
  %v482 = vpack.c.b16 %v442, %v438
  %v483 = vpack.c.b16 %v443, %v439
  %v484 = vpack.c.b16 %v444, %v440
  %v485 = vpack.c.b16 %v445, %v441
  %v486 = vpack.c.b16 %v450, %v446
  %v487 = vpack.c.b16 %v451, %v447
  %v488 = vpack.c.b16 %v452, %v448
  %v489 = vpack.c.b16 %v453, %v449
  %v490 = vpack.c.b16 %v458, %v454
  %v491 = vpack.c.b16 %v459, %v455
  %v492 = vpack.c.b16 %v460, %v456
  %v493 = vpack.c.b16 %v461, %v457
  %526 = vmatprep.subr.bf16.mxu0 %v463
  %527 = vmatpush1.bf16.msra.mxu0 %v462
  %528 = vmatprep.subr.bf16.mxu0 %v467
  %529 = vmatpush1.bf16.msra.mxu0 %v466
  %530 = vmatprep.subr.bf16.mxu0 %v471
  %531 = vmatpush1.bf16.msra.mxu0 %v470
  %532 = vmatprep.subr.bf16.mxu0 %v475
  %533 = vmatpush1.bf16.msra.mxu0 %v474
  %534 = vmatprep.subr.bf16.mxu0 %v479
  %535 = vmatpush1.bf16.msra.mxu0 %v478
  %536 = vmatprep.subr.bf16.mxu0 %v483
  %537 = vmatpush1.bf16.msra.mxu0 %v482
  %538 = vmatprep.subr.bf16.mxu0 %v487
  %539 = vmatpush1.bf16.msra.mxu0 %v486
  %540 = vmatprep.subr.bf16.mxu0 %v491
  %541 = vmatpush1.bf16.msra.mxu0 %v490
  %542 = vmatprep.subr.bf16.mxu0 0
  %543 = vmatpush1.bf16.msra.mxu0 0
  %544 = vmatprep.subr.bf16.mxu0 0
  %545 = vmatpush1.bf16.msra.mxu0 0
  %546 = vmatprep.subr.bf16.mxu0 0
  %547 = vmatpush1.bf16.msra.mxu0 0
  %548 = vmatprep.subr.bf16.mxu0 0
  %549 = vmatpush1.bf16.msra.mxu0 0
  %550 = vmatprep.subr.bf16.mxu0 0
  %551 = vmatpush1.bf16.msra.mxu0 0
  %552 = vmatprep.subr.bf16.mxu0 0
  %553 = vmatpush1.bf16.msra.mxu0 0
  %554 = vmatprep.subr.bf16.mxu0 0
  %555 = vmatpush1.bf16.msra.mxu0 0
  %556 = vmatprep.subr.bf16.mxu0 0
  %557 = vmatpush1.bf16.msra.mxu0 0
  %558 = vmatprep.mubr.bf16.mxu0 0
  %559 = vmatmul.mubr.bf16.gmra.mrb[0].mxu0 %v333
  %v560 = vpop.f32.mrb[0].mxu0
  %v561 = vadd.f32 0.0, %v560
  %v562 = vpop.f32.mrb[0].mxu0
  %v563 = vadd.f32 0.0, %v562
  %v564 = vpop.f32.mrb[0].mxu0
  %v565 = vpop.f32.mrb[0].mxu0
  %566 = vdwg.mxu0
  %567 = vmatprep.subr.bf16.mxu0 %v465
  %568 = vmatpush1.bf16.msra.mxu0 %v464
  %569 = vmatprep.subr.bf16.mxu0 %v469
  %570 = vmatpush1.bf16.msra.mxu0 %v468
  %571 = vmatprep.subr.bf16.mxu0 %v473
  %572 = vmatpush1.bf16.msra.mxu0 %v472
  %573 = vmatprep.subr.bf16.mxu0 %v477
  %574 = vmatpush1.bf16.msra.mxu0 %v476
  %575 = vmatprep.subr.bf16.mxu0 %v481
  %576 = vmatpush1.bf16.msra.mxu0 %v480
  %577 = vmatprep.subr.bf16.mxu0 %v485
  %578 = vmatpush1.bf16.msra.mxu0 %v484
  %579 = vmatprep.subr.bf16.mxu0 %v489
  %580 = vmatpush1.bf16.msra.mxu0 %v488
  %581 = vmatprep.subr.bf16.mxu0 %v493
  %582 = vmatpush1.bf16.msra.mxu0 %v492
  %583 = vmatprep.subr.bf16.mxu0 0
  %584 = vmatpush1.bf16.msra.mxu0 0
  %585 = vmatprep.subr.bf16.mxu0 0
  %586 = vmatpush1.bf16.msra.mxu0 0
  %587 = vmatprep.subr.bf16.mxu0 0
  %588 = vmatpush1.bf16.msra.mxu0 0
  %589 = vmatprep.subr.bf16.mxu0 0
  %590 = vmatpush1.bf16.msra.mxu0 0
  %591 = vmatprep.subr.bf16.mxu0 0
  %592 = vmatpush1.bf16.msra.mxu0 0
  %593 = vmatprep.subr.bf16.mxu0 0
  %594 = vmatpush1.bf16.msra.mxu0 0
  %595 = vmatprep.subr.bf16.mxu0 0
  %596 = vmatpush1.bf16.msra.mxu0 0
  %597 = vmatprep.subr.bf16.mxu0 0
  %598 = vmatpush1.bf16.msra.mxu0 0
  %599 = vmatprep.mubr.bf16.mxu0 0
  %600 = vmatmul.mubr.bf16.gmra.mrb[0].mxu0 %v333
  %v601 = vpop.f32.mrb[0].mxu0
  %v602 = vadd.f32 0.0, %v601
  %v603 = vpop.f32.mrb[0].mxu0
  %v604 = vadd.f32 0.0, %v603
  %v605 = vpop.f32.mrb[0].mxu0
  %v606 = vpop.f32.mrb[0].mxu0
  %607 = vdwg.mxu0
  %v608 = vadd.f32 %v329, %v561
  %v609 = vadd.f32 %v330, %v563
  %v610 = vadd.f32 %v331, %v602
  %v611 = vadd.f32 %v332, %v604
  %v612 = vxor.u32 %v608, 2147483648
  %v613 = vmul.f32 %v612, 1.442695
  %v614 = vpow.pop %v613
  %v615 = vadd.f32 %v614, 1.0
  %v616 = vrcp.pop %v615
  %v617 = vmul.f32 1.0, %v616
  %v618 = vxor.u32 %v609, 2147483648
  %v619 = vmul.f32 %v618, 1.442695
  %v620 = vpow.pop %v619
  %v621 = vadd.f32 %v620, 1.0
  %v622 = vrcp.pop %v621
  %v623 = vmul.f32 1.0, %v622
  %v624 = vtanh.pop %v610
  %v625 = vxor.u32 %v611, 2147483648
  %v626 = vmul.f32 %v625, 1.442695
  %v627 = vpow.pop %v626
  %v628 = vadd.f32 %v627, 1.0
  %v629 = vrcp.pop %v628
  %v630 = vmul.f32 1.0, %v629
  %v631 = vmul.f32 %v623, %v324
  %v632 = vmul.f32 %v617, %v624
  %v633 = vadd.f32 %v631, %v632
  %v634 = vtanh.pop %v633
  %v635 = vmul.f32 %v630, %v634
  %s636 = scalar_lea.vmem %s2, 8
  %637 = vst [vmem:[%s636] sm:$0xff] %v635
  %s638 = scalar_lea.vmem %s0, 64
  %v639 = vld [vmem:[%s638] sm:$0xff]
  %v640 = vld [vmem:[%s638 + $0x8] sm:$0xff]
  %v641 = vld [vmem:[%s638 + $0x10] sm:$0xff]
  %v642 = vld [vmem:[%s638 + $0x18] sm:$0xff]
  %v643 = vpack.c.bf16 %v635, %v635
  %v644 = vld [vmem:[%s1] sm:$0xff]
  %v645 = vld [vmem:[%s1 + $0x8] sm:$0xff]
  %v646 = vld [vmem:[%s1 + $0x10] sm:$0xff]
  %v647 = vld [vmem:[%s1 + $0x18] sm:$0xff]
  %v648 = vld [vmem:[%s1 + $0x20] sm:$0xff]
  %v649 = vld [vmem:[%s1 + $0x28] sm:$0xff]
  %v650 = vld [vmem:[%s1 + $0x30] sm:$0xff]
  %v651 = vld [vmem:[%s1 + $0x38] sm:$0xff]
  %v652 = vld [vmem:[%s1 + $0x40] sm:$0xff]
  %v653 = vld [vmem:[%s1 + $0x48] sm:$0xff]
  %v654 = vld [vmem:[%s1 + $0x50] sm:$0xff]
  %v655 = vld [vmem:[%s1 + $0x58] sm:$0xff]
  %v656 = vld [vmem:[%s1 + $0x60] sm:$0xff]
  %v657 = vld [vmem:[%s1 + $0x68] sm:$0xff]
  %v658 = vld [vmem:[%s1 + $0x70] sm:$0xff]
  %v659 = vld [vmem:[%s1 + $0x78] sm:$0xff]
  %v660 = vld [vmem:[%s1 + $0x80] sm:$0xff]
  %v661 = vld [vmem:[%s1 + $0x88] sm:$0xff]
  %v662 = vld [vmem:[%s1 + $0x90] sm:$0xff]
  %v663 = vld [vmem:[%s1 + $0x98] sm:$0xff]
  %v664 = vld [vmem:[%s1 + $0xa0] sm:$0xff]
  %v665 = vld [vmem:[%s1 + $0xa8] sm:$0xff]
  %v666 = vld [vmem:[%s1 + $0xb0] sm:$0xff]
  %v667 = vld [vmem:[%s1 + $0xb8] sm:$0xff]
  %v668 = vld [vmem:[%s1 + $0xc0] sm:$0xff]
  %v669 = vld [vmem:[%s1 + $0xc8] sm:$0xff]
  %v670 = vld [vmem:[%s1 + $0xd0] sm:$0xff]
  %v671 = vld [vmem:[%s1 + $0xd8] sm:$0xff]
  %v672 = vld [vmem:[%s1 + $0xe0] sm:$0xff]
  %v673 = vld [vmem:[%s1 + $0xe8] sm:$0xff]
  %v674 = vld [vmem:[%s1 + $0xf0] sm:$0xff]
  %v675 = vld [vmem:[%s1 + $0xf8] sm:$0xff]
  %v708 = vunpack.c.l.b16 %v644
  %v709 = vunpack.c.h.b16 %v644
  %v710 = vunpack.c.l.b16 %v645
  %v711 = vunpack.c.h.b16 %v645
  %v712 = vunpack.c.l.b16 %v646
  %v713 = vunpack.c.h.b16 %v646
  %v714 = vunpack.c.l.b16 %v647
  %v715 = vunpack.c.h.b16 %v647
  %v716 = vunpack.c.l.b16 %v648
  %v717 = vunpack.c.h.b16 %v648
  %v718 = vunpack.c.l.b16 %v649
  %v719 = vunpack.c.h.b16 %v649
  %v720 = vunpack.c.l.b16 %v650
  %v721 = vunpack.c.h.b16 %v650
  %v722 = vunpack.c.l.b16 %v651
  %v723 = vunpack.c.h.b16 %v651
  %v724 = vunpack.c.l.b16 %v652
  %v725 = vunpack.c.h.b16 %v652
  %v726 = vunpack.c.l.b16 %v653
  %v727 = vunpack.c.h.b16 %v653
  %v728 = vunpack.c.l.b16 %v654
  %v729 = vunpack.c.h.b16 %v654
  %v730 = vunpack.c.l.b16 %v655
  %v731 = vunpack.c.h.b16 %v655
  %v732 = vunpack.c.l.b16 %v656
  %v733 = vunpack.c.h.b16 %v656
  %v734 = vunpack.c.l.b16 %v657
  %v735 = vunpack.c.h.b16 %v657
  %v736 = vunpack.c.l.b16 %v658
  %v737 = vunpack.c.h.b16 %v658
  %v738 = vunpack.c.l.b16 %v659
  %v739 = vunpack.c.h.b16 %v659
  %v740 = vunpack.c.l.b16 %v660
  %v741 = vunpack.c.h.b16 %v660
  %v742 = vunpack.c.l.b16 %v661
  %v743 = vunpack.c.h.b16 %v661
  %v744 = vunpack.c.l.b16 %v662
  %v745 = vunpack.c.h.b16 %v662
  %v746 = vunpack.c.l.b16 %v663
  %v747 = vunpack.c.h.b16 %v663
  %v748 = vunpack.c.l.b16 %v664
  %v749 = vunpack.c.h.b16 %v664
  %v750 = vunpack.c.l.b16 %v665
  %v751 = vunpack.c.h.b16 %v665
  %v752 = vunpack.c.l.b16 %v666
  %v753 = vunpack.c.h.b16 %v666
  %v754 = vunpack.c.l.b16 %v667
  %v755 = vunpack.c.h.b16 %v667
  %v756 = vunpack.c.l.b16 %v668
  %v757 = vunpack.c.h.b16 %v668
  %v758 = vunpack.c.l.b16 %v669
  %v759 = vunpack.c.h.b16 %v669
  %v760 = vunpack.c.l.b16 %v670
  %v761 = vunpack.c.h.b16 %v670
  %v762 = vunpack.c.l.b16 %v671
  %v763 = vunpack.c.h.b16 %v671
  %v764 = vunpack.c.l.b16 %v672
  %v765 = vunpack.c.h.b16 %v672
  %v766 = vunpack.c.l.b16 %v673
  %v767 = vunpack.c.h.b16 %v673
  %v768 = vunpack.c.l.b16 %v674
  %v769 = vunpack.c.h.b16 %v674
  %v770 = vunpack.c.l.b16 %v675
  %v771 = vunpack.c.h.b16 %v675
  %v772 = vpack.c.b16 %v712, %v708
  %v773 = vpack.c.b16 %v713, %v709
  %v774 = vpack.c.b16 %v714, %v710
  %v775 = vpack.c.b16 %v715, %v711
  %v776 = vpack.c.b16 %v720, %v716
  %v777 = vpack.c.b16 %v721, %v717
  %v778 = vpack.c.b16 %v722, %v718
  %v779 = vpack.c.b16 %v723, %v719
  %v780 = vpack.c.b16 %v728, %v724
  %v781 = vpack.c.b16 %v729, %v725
  %v782 = vpack.c.b16 %v730, %v726
  %v783 = vpack.c.b16 %v731, %v727
  %v784 = vpack.c.b16 %v736, %v732
  %v785 = vpack.c.b16 %v737, %v733
  %v786 = vpack.c.b16 %v738, %v734
  %v787 = vpack.c.b16 %v739, %v735
  %v788 = vpack.c.b16 %v744, %v740
  %v789 = vpack.c.b16 %v745, %v741
  %v790 = vpack.c.b16 %v746, %v742
  %v791 = vpack.c.b16 %v747, %v743
  %v792 = vpack.c.b16 %v752, %v748
  %v793 = vpack.c.b16 %v753, %v749
  %v794 = vpack.c.b16 %v754, %v750
  %v795 = vpack.c.b16 %v755, %v751
  %v796 = vpack.c.b16 %v760, %v756
  %v797 = vpack.c.b16 %v761, %v757
  %v798 = vpack.c.b16 %v762, %v758
  %v799 = vpack.c.b16 %v763, %v759
  %v800 = vpack.c.b16 %v768, %v764
  %v801 = vpack.c.b16 %v769, %v765
  %v802 = vpack.c.b16 %v770, %v766
  %v803 = vpack.c.b16 %v771, %v767
  %836 = vmatprep.subr.bf16.mxu0 %v773
  %837 = vmatpush1.bf16.msra.mxu0 %v772
  %838 = vmatprep.subr.bf16.mxu0 %v777
  %839 = vmatpush1.bf16.msra.mxu0 %v776
  %840 = vmatprep.subr.bf16.mxu0 %v781
  %841 = vmatpush1.bf16.msra.mxu0 %v780
  %842 = vmatprep.subr.bf16.mxu0 %v785
  %843 = vmatpush1.bf16.msra.mxu0 %v784
  %844 = vmatprep.subr.bf16.mxu0 %v789
  %845 = vmatpush1.bf16.msra.mxu0 %v788
  %846 = vmatprep.subr.bf16.mxu0 %v793
  %847 = vmatpush1.bf16.msra.mxu0 %v792
  %848 = vmatprep.subr.bf16.mxu0 %v797
  %849 = vmatpush1.bf16.msra.mxu0 %v796
  %850 = vmatprep.subr.bf16.mxu0 %v801
  %851 = vmatpush1.bf16.msra.mxu0 %v800
  %852 = vmatprep.subr.bf16.mxu0 0
  %853 = vmatpush1.bf16.msra.mxu0 0
  %854 = vmatprep.subr.bf16.mxu0 0
  %855 = vmatpush1.bf16.msra.mxu0 0
  %856 = vmatprep.subr.bf16.mxu0 0
  %857 = vmatpush1.bf16.msra.mxu0 0
  %858 = vmatprep.subr.bf16.mxu0 0
  %859 = vmatpush1.bf16.msra.mxu0 0
  %860 = vmatprep.subr.bf16.mxu0 0
  %861 = vmatpush1.bf16.msra.mxu0 0
  %862 = vmatprep.subr.bf16.mxu0 0
  %863 = vmatpush1.bf16.msra.mxu0 0
  %864 = vmatprep.subr.bf16.mxu0 0
  %865 = vmatpush1.bf16.msra.mxu0 0
  %866 = vmatprep.subr.bf16.mxu0 0
  %867 = vmatpush1.bf16.msra.mxu0 0
  %868 = vmatprep.mubr.bf16.mxu0 0
  %869 = vmatmul.mubr.bf16.gmra.mrb[0].mxu0 %v643
  %v870 = vpop.f32.mrb[0].mxu0
  %v871 = vadd.f32 0.0, %v870
  %v872 = vpop.f32.mrb[0].mxu0
  %v873 = vadd.f32 0.0, %v872
  %v874 = vpop.f32.mrb[0].mxu0
  %v875 = vpop.f32.mrb[0].mxu0
  %876 = vdwg.mxu0
  %877 = vmatprep.subr.bf16.mxu0 %v775
  %878 = vmatpush1.bf16.msra.mxu0 %v774
  %879 = vmatprep.subr.bf16.mxu0 %v779
  %880 = vmatpush1.bf16.msra.mxu0 %v778
  %881 = vmatprep.subr.bf16.mxu0 %v783
  %882 = vmatpush1.bf16.msra.mxu0 %v782
  %883 = vmatprep.subr.bf16.mxu0 %v787
  %884 = vmatpush1.bf16.msra.mxu0 %v786
  %885 = vmatprep.subr.bf16.mxu0 %v791
  %886 = vmatpush1.bf16.msra.mxu0 %v790
  %887 = vmatprep.subr.bf16.mxu0 %v795
  %888 = vmatpush1.bf16.msra.mxu0 %v794
  %889 = vmatprep.subr.bf16.mxu0 %v799
  %890 = vmatpush1.bf16.msra.mxu0 %v798
  %891 = vmatprep.subr.bf16.mxu0 %v803
  %892 = vmatpush1.bf16.msra.mxu0 %v802
  %893 = vmatprep.subr.bf16.mxu0 0
  %894 = vmatpush1.bf16.msra.mxu0 0
  %895 = vmatprep.subr.bf16.mxu0 0
  %896 = vmatpush1.bf16.msra.mxu0 0
  %897 = vmatprep.subr.bf16.mxu0 0
  %898 = vmatpush1.bf16.msra.mxu0 0
  %899 = vmatprep.subr.bf16.mxu0 0
  %900 = vmatpush1.bf16.msra.mxu0 0
  %901 = vmatprep.subr.bf16.mxu0 0
  %902 = vmatpush1.bf16.msra.mxu0 0
  %903 = vmatprep.subr.bf16.mxu0 0
  %904 = vmatpush1.bf16.msra.mxu0 0
  %905 = vmatprep.subr.bf16.mxu0 0
  %906 = vmatpush1.bf16.msra.mxu0 0
  %907 = vmatprep.subr.bf16.mxu0 0
  %908 = vmatpush1.bf16.msra.mxu0 0
  %909 = vmatprep.mubr.bf16.mxu0 0
  %910 = vmatmul.mubr.bf16.gmra.mrb[0].mxu0 %v643
  %v911 = vpop.f32.mrb[0].mxu0
  %v912 = vadd.f32 0.0, %v911
  %v913 = vpop.f32.mrb[0].mxu0
  %v914 = vadd.f32 0.0, %v913
  %v915 = vpop.f32.mrb[0].mxu0
  %v916 = vpop.f32.mrb[0].mxu0
  %917 = vdwg.mxu0
  %v918 = vadd.f32 %v639, %v871
  %v919 = vadd.f32 %v640, %v873
  %v920 = vadd.f32 %v641, %v912
  %v921 = vadd.f32 %v642, %v914
  %v922 = vxor.u32 %v918, 2147483648
  %v923 = vmul.f32 %v922, 1.442695
  %v924 = vpow.pop %v923
  %v925 = vadd.f32 %v924, 1.0
  %v926 = vrcp.pop %v925
  %v927 = vmul.f32 1.0, %v926
  %v928 = vxor.u32 %v919, 2147483648
  %v929 = vmul.f32 %v928, 1.442695
  %v930 = vpow.pop %v929
  %v931 = vadd.f32 %v930, 1.0
  %v932 = vrcp.pop %v931
  %v933 = vmul.f32 1.0, %v932
  %v934 = vtanh.pop %v920
  %v935 = vxor.u32 %v921, 2147483648
  %v936 = vmul.f32 %v935, 1.442695
  %v937 = vpow.pop %v936
  %v938 = vadd.f32 %v937, 1.0
  %v939 = vrcp.pop %v938
  %v940 = vmul.f32 1.0, %v939
  %v941 = vmul.f32 %v933, %v633
  %v942 = vmul.f32 %v927, %v934
  %v943 = vadd.f32 %v941, %v942
  %v944 = vtanh.pop %v943
  %v945 = vmul.f32 %v940, %v944
  %s946 = scalar_lea.vmem %s2, 16
  %947 = vst [vmem:[%s946] sm:$0xff] %v945
  %s948 = scalar_lea.vmem %s0, 96
  %v949 = vld [vmem:[%s948] sm:$0xff]
  %v950 = vld [vmem:[%s948 + $0x8] sm:$0xff]
  %v951 = vld [vmem:[%s948 + $0x10] sm:$0xff]
  %v952 = vld [vmem:[%s948 + $0x18] sm:$0xff]
  %v953 = vpack.c.bf16 %v945, %v945
  %v954 = vld [vmem:[%s1] sm:$0xff]
  %v955 = vld [vmem:[%s1 + $0x8] sm:$0xff]
  %v956 = vld [vmem:[%s1 + $0x10] sm:$0xff]
  %v957 = vld [vmem:[%s1 + $0x18] sm:$0xff]
  %v958 = vld [vmem:[%s1 + $0x20] sm:$0xff]
  %v959 = vld [vmem:[%s1 + $0x28] sm:$0xff]
  %v960 = vld [vmem:[%s1 + $0x30] sm:$0xff]
  %v961 = vld [vmem:[%s1 + $0x38] sm:$0xff]
  %v962 = vld [vmem:[%s1 + $0x40] sm:$0xff]
  %v963 = vld [vmem:[%s1 + $0x48] sm:$0xff]
  %v964 = vld [vmem:[%s1 + $0x50] sm:$0xff]
  %v965 = vld [vmem:[%s1 + $0x58] sm:$0xff]
  %v966 = vld [vmem:[%s1 + $0x60] sm:$0xff]
  %v967 = vld [vmem:[%s1 + $0x68] sm:$0xff]
  %v968 = vld [vmem:[%s1 + $0x70] sm:$0xff]
  %v969 = vld [vmem:[%s1 + $0x78] sm:$0xff]
  %v970 = vld [vmem:[%s1 + $0x80] sm:$0xff]
  %v971 = vld [vmem:[%s1 + $0x88] sm:$0xff]
  %v972 = vld [vmem:[%s1 + $0x90] sm:$0xff]
  %v973 = vld [vmem:[%s1 + $0x98] sm:$0xff]
  %v974 = vld [vmem:[%s1 + $0xa0] sm:$0xff]
  %v975 = vld [vmem:[%s1 + $0xa8] sm:$0xff]
  %v976 = vld [vmem:[%s1 + $0xb0] sm:$0xff]
  %v977 = vld [vmem:[%s1 + $0xb8] sm:$0xff]
  %v978 = vld [vmem:[%s1 + $0xc0] sm:$0xff]
  %v979 = vld [vmem:[%s1 + $0xc8] sm:$0xff]
  %v980 = vld [vmem:[%s1 + $0xd0] sm:$0xff]
  %v981 = vld [vmem:[%s1 + $0xd8] sm:$0xff]
  %v982 = vld [vmem:[%s1 + $0xe0] sm:$0xff]
  %v983 = vld [vmem:[%s1 + $0xe8] sm:$0xff]
  %v984 = vld [vmem:[%s1 + $0xf0] sm:$0xff]
  %v985 = vld [vmem:[%s1 + $0xf8] sm:$0xff]
  %v1018 = vunpack.c.l.b16 %v954
  %v1019 = vunpack.c.h.b16 %v954
  %v1020 = vunpack.c.l.b16 %v955
  %v1021 = vunpack.c.h.b16 %v955
  %v1022 = vunpack.c.l.b16 %v956
  %v1023 = vunpack.c.h.b16 %v956
  %v1024 = vunpack.c.l.b16 %v957
  %v1025 = vunpack.c.h.b16 %v957
  %v1026 = vunpack.c.l.b16 %v958
  %v1027 = vunpack.c.h.b16 %v958
  %v1028 = vunpack.c.l.b16 %v959
  %v1029 = vunpack.c.h.b16 %v959
  %v1030 = vunpack.c.l.b16 %v960
  %v1031 = vunpack.c.h.b16 %v960
  %v1032 = vunpack.c.l.b16 %v961
  %v1033 = vunpack.c.h.b16 %v961
  %v1034 = vunpack.c.l.b16 %v962
  %v1035 = vunpack.c.h.b16 %v962
  %v1036 = vunpack.c.l.b16 %v963
  %v1037 = vunpack.c.h.b16 %v963
  %v1038 = vunpack.c.l.b16 %v964
  %v1039 = vunpack.c.h.b16 %v964
  %v1040 = vunpack.c.l.b16 %v965
  %v1041 = vunpack.c.h.b16 %v965
  %v1042 = vunpack.c.l.b16 %v966
  %v1043 = vunpack.c.h.b16 %v966
  %v1044 = vunpack.c.l.b16 %v967
  %v1045 = vunpack.c.h.b16 %v967
  %v1046 = vunpack.c.l.b16 %v968
  %v1047 = vunpack.c.h.b16 %v968
  %v1048 = vunpack.c.l.b16 %v969
  %v1049 = vunpack.c.h.b16 %v969
  %v1050 = vunpack.c.l.b16 %v970
  %v1051 = vunpack.c.h.b16 %v970
  %v1052 = vunpack.c.l.b16 %v971
  %v1053 = vunpack.c.h.b16 %v971
  %v1054 = vunpack.c.l.b16 %v972
  %v1055 = vunpack.c.h.b16 %v972
  %v1056 = vunpack.c.l.b16 %v973
  %v1057 = vunpack.c.h.b16 %v973
  %v1058 = vunpack.c.l.b16 %v974
  %v1059 = vunpack.c.h.b16 %v974
  %v1060 = vunpack.c.l.b16 %v975
  %v1061 = vunpack.c.h.b16 %v975
  %v1062 = vunpack.c.l.b16 %v976
  %v1063 = vunpack.c.h.b16 %v976
  %v1064 = vunpack.c.l.b16 %v977
  %v1065 = vunpack.c.h.b16 %v977
  %v1066 = vunpack.c.l.b16 %v978
  %v1067 = vunpack.c.h.b16 %v978
  %v1068 = vunpack.c.l.b16 %v979
  %v1069 = vunpack.c.h.b16 %v979
  %v1070 = vunpack.c.l.b16 %v980
  %v1071 = vunpack.c.h.b16 %v980
  %v1072 = vunpack.c.l.b16 %v981
  %v1073 = vunpack.c.h.b16 %v981
  %v1074 = vunpack.c.l.b16 %v982
  %v1075 = vunpack.c.h.b16 %v982
  %v1076 = vunpack.c.l.b16 %v983
  %v1077 = vunpack.c.h.b16 %v983
  %v1078 = vunpack.c.l.b16 %v984
  %v1079 = vunpack.c.h.b16 %v984
  %v1080 = vunpack.c.l.b16 %v985
  %v1081 = vunpack.c.h.b16 %v985
  %v1082 = vpack.c.b16 %v1022, %v1018
  %v1083 = vpack.c.b16 %v1023, %v1019
  %v1084 = vpack.c.b16 %v1024, %v1020
  %v1085 = vpack.c.b16 %v1025, %v1021
  %v1086 = vpack.c.b16 %v1030, %v1026
  %v1087 = vpack.c.b16 %v1031, %v1027
  %v1088 = vpack.c.b16 %v1032, %v1028
  %v1089 = vpack.c.b16 %v1033, %v1029
  %v1090 = vpack.c.b16 %v1038, %v1034
  %v1091 = vpack.c.b16 %v1039, %v1035
  %v1092 = vpack.c.b16 %v1040, %v1036
  %v1093 = vpack.c.b16 %v1041, %v1037
  %v1094 = vpack.c.b16 %v1046, %v1042
  %v1095 = vpack.c.b16 %v1047, %v1043
  %v1096 = vpack.c.b16 %v1048, %v1044
  %v1097 = vpack.c.b16 %v1049, %v1045
  %v1098 = vpack.c.b16 %v1054, %v1050
  %v1099 = vpack.c.b16 %v1055, %v1051
  %v1100 = vpack.c.b16 %v1056, %v1052
  %v1101 = vpack.c.b16 %v1057, %v1053
  %v1102 = vpack.c.b16 %v1062, %v1058
  %v1103 = vpack.c.b16 %v1063, %v1059
  %v1104 = vpack.c.b16 %v1064, %v1060
  %v1105 = vpack.c.b16 %v1065, %v1061
  %v1106 = vpack.c.b16 %v1070, %v1066
  %v1107 = vpack.c.b16 %v1071, %v1067
  %v1108 = vpack.c.b16 %v1072, %v1068
  %v1109 = vpack.c.b16 %v1073, %v1069
  %v1110 = vpack.c.b16 %v1078, %v1074
  %v1111 = vpack.c.b16 %v1079, %v1075
  %v1112 = vpack.c.b16 %v1080, %v1076
  %v1113 = vpack.c.b16 %v1081, %v1077
  %1146 = vmatprep.subr.bf16.mxu0 %v1083
  %1147 = vmatpush1.bf16.msra.mxu0 %v1082
  %1148 = vmatprep.subr.bf16.mxu0 %v1087
  %1149 = vmatpush1.bf16.msra.mxu0 %v1086
  %1150 = vmatprep.subr.bf16.mxu0 %v1091
  %1151 = vmatpush1.bf16.msra.mxu0 %v1090
  %1152 = vmatprep.subr.bf16.mxu0 %v1095
  %1153 = vmatpush1.bf16.msra.mxu0 %v1094
  %1154 = vmatprep.subr.bf16.mxu0 %v1099
  %1155 = vmatpush1.bf16.msra.mxu0 %v1098
  %1156 = vmatprep.subr.bf16.mxu0 %v1103
  %1157 = vmatpush1.bf16.msra.mxu0 %v1102
  %1158 = vmatprep.subr.bf16.mxu0 %v1107
  %1159 = vmatpush1.bf16.msra.mxu0 %v1106
  %1160 = vmatprep.subr.bf16.mxu0 %v1111
  %1161 = vmatpush1.bf16.msra.mxu0 %v1110
  %1162 = vmatprep.subr.bf16.mxu0 0
  %1163 = vmatpush1.bf16.msra.mxu0 0
  %1164 = vmatprep.subr.bf16.mxu0 0
  %1165 = vmatpush1.bf16.msra.mxu0 0
  %1166 = vmatprep.subr.bf16.mxu0 0
  %1167 = vmatpush1.bf16.msra.mxu0 0
  %1168 = vmatprep.subr.bf16.mxu0 0
  %1169 = vmatpush1.bf16.msra.mxu0 0
  %1170 = vmatprep.subr.bf16.mxu0 0
  %1171 = vmatpush1.bf16.msra.mxu0 0
  %1172 = vmatprep.subr.bf16.mxu0 0
  %1173 = vmatpush1.bf16.msra.mxu0 0
  %1174 = vmatprep.subr.bf16.mxu0 0
  %1175 = vmatpush1.bf16.msra.mxu0 0
  %1176 = vmatprep.subr.bf16.mxu0 0
  %1177 = vmatpush1.bf16.msra.mxu0 0
  %1178 = vmatprep.mubr.bf16.mxu0 0
  %1179 = vmatmul.mubr.bf16.gmra.mrb[0].mxu0 %v953
  %v1180 = vpop.f32.mrb[0].mxu0
  %v1181 = vadd.f32 0.0, %v1180
  %v1182 = vpop.f32.mrb[0].mxu0
  %v1183 = vadd.f32 0.0, %v1182
  %v1184 = vpop.f32.mrb[0].mxu0
  %v1185 = vpop.f32.mrb[0].mxu0
  %1186 = vdwg.mxu0
  %1187 = vmatprep.subr.bf16.mxu0 %v1085
  %1188 = vmatpush1.bf16.msra.mxu0 %v1084
  %1189 = vmatprep.subr.bf16.mxu0 %v1089
  %1190 = vmatpush1.bf16.msra.mxu0 %v1088
  %1191 = vmatprep.subr.bf16.mxu0 %v1093
  %1192 = vmatpush1.bf16.msra.mxu0 %v1092
  %1193 = vmatprep.subr.bf16.mxu0 %v1097
  %1194 = vmatpush1.bf16.msra.mxu0 %v1096
  %1195 = vmatprep.subr.bf16.mxu0 %v1101
  %1196 = vmatpush1.bf16.msra.mxu0 %v1100
  %1197 = vmatprep.subr.bf16.mxu0 %v1105
  %1198 = vmatpush1.bf16.msra.mxu0 %v1104
  %1199 = vmatprep.subr.bf16.mxu0 %v1109
  %1200 = vmatpush1.bf16.msra.mxu0 %v1108
  %1201 = vmatprep.subr.bf16.mxu0 %v1113
  %1202 = vmatpush1.bf16.msra.mxu0 %v1112
  %1203 = vmatprep.subr.bf16.mxu0 0
  %1204 = vmatpush1.bf16.msra.mxu0 0
  %1205 = vmatprep.subr.bf16.mxu0 0
  %1206 = vmatpush1.bf16.msra.mxu0 0
  %1207 = vmatprep.subr.bf16.mxu0 0
  %1208 = vmatpush1.bf16.msra.mxu0 0
  %1209 = vmatprep.subr.bf16.mxu0 0
  %1210 = vmatpush1.bf16.msra.mxu0 0
  %1211 = vmatprep.subr.bf16.mxu0 0
  %1212 = vmatpush1.bf16.msra.mxu0 0
  %1213 = vmatprep.subr.bf16.mxu0 0
  %1214 = vmatpush1.bf16.msra.mxu0 0
  %1215 = vmatprep.subr.bf16.mxu0 0
  %1216 = vmatpush1.bf16.msra.mxu0 0
  %1217 = vmatprep.subr.bf16.mxu0 0
  %1218 = vmatpush1.bf16.msra.mxu0 0
  %1219 = vmatprep.mubr.bf16.mxu0 0
  %1220 = vmatmul.mubr.bf16.gmra.mrb[0].mxu0 %v953
  %v1221 = vpop.f32.mrb[0].mxu0
  %v1222 = vadd.f32 0.0, %v1221
  %v1223 = vpop.f32.mrb[0].mxu0
  %v1224 = vadd.f32 0.0, %v1223
  %v1225 = vpop.f32.mrb[0].mxu0
  %v1226 = vpop.f32.mrb[0].mxu0
  %1227 = vdwg.mxu0
  %v1228 = vadd.f32 %v949, %v1181
  %v1229 = vadd.f32 %v950, %v1183
  %v1230 = vadd.f32 %v951, %v1222
  %v1231 = vadd.f32 %v952, %v1224
  %v1232 = vxor.u32 %v1228, 2147483648
  %v1233 = vmul.f32 %v1232, 1.442695
  %v1234 = vpow.pop %v1233
  %v1235 = vadd.f32 %v1234, 1.0
  %v1236 = vrcp.pop %v1235
  %v1237 = vmul.f32 1.0, %v1236
  %v1238 = vxor.u32 %v1229, 2147483648
  %v1239 = vmul.f32 %v1238, 1.442695
  %v1240 = vpow.pop %v1239
  %v1241 = vadd.f32 %v1240, 1.0
  %v1242 = vrcp.pop %v1241
  %v1243 = vmul.f32 1.0, %v1242
  %v1244 = vtanh.pop %v1230
  %v1245 = vxor.u32 %v1231, 2147483648
  %v1246 = vmul.f32 %v1245, 1.442695
  %v1247 = vpow.pop %v1246
  %v1248 = vadd.f32 %v1247, 1.0
  %v1249 = vrcp.pop %v1248
  %v1250 = vmul.f32 1.0, %v1249
  %v1251 = vmul.f32 %v1243, %v943
  %v1252 = vmul.f32 %v1237, %v1244
  %v1253 = vadd.f32 %v1251, %v1252
  %v1254 = vtanh.pop %v1253
  %v1255 = vmul.f32 %v1250, %v1254
  %s1256 = scalar_lea.vmem %s2, 24
  %1257 = vst [vmem:[%s1256] sm:$0xff] %v1255
  %s1258 = scalar_lea.vmem %s0, 128
  %v1259 = vld [vmem:[%s1258] sm:$0xff]
  %v1260 = vld [vmem:[%s1258 + $0x8] sm:$0xff]
  %v1261 = vld [vmem:[%s1258 + $0x10] sm:$0xff]
  %v1262 = vld [vmem:[%s1258 + $0x18] sm:$0xff]
  %v1263 = vpack.c.bf16 %v1255, %v1255
  %v1264 = vld [vmem:[%s1] sm:$0xff]
  %v1265 = vld [vmem:[%s1 + $0x8] sm:$0xff]
  %v1266 = vld [vmem:[%s1 + $0x10] sm:$0xff]
  %v1267 = vld [vmem:[%s1 + $0x18] sm:$0xff]
  %v1268 = vld [vmem:[%s1 + $0x20] sm:$0xff]
  %v1269 = vld [vmem:[%s1 + $0x28] sm:$0xff]
  %v1270 = vld [vmem:[%s1 + $0x30] sm:$0xff]
  %v1271 = vld [vmem:[%s1 + $0x38] sm:$0xff]
  %v1272 = vld [vmem:[%s1 + $0x40] sm:$0xff]
  %v1273 = vld [vmem:[%s1 + $0x48] sm:$0xff]
  %v1274 = vld [vmem:[%s1 + $0x50] sm:$0xff]
  %v1275 = vld [vmem:[%s1 + $0x58] sm:$0xff]
  %v1276 = vld [vmem:[%s1 + $0x60] sm:$0xff]
  %v1277 = vld [vmem:[%s1 + $0x68] sm:$0xff]
  %v1278 = vld [vmem:[%s1 + $0x70] sm:$0xff]
  %v1279 = vld [vmem:[%s1 + $0x78] sm:$0xff]
  %v1280 = vld [vmem:[%s1 + $0x80] sm:$0xff]
  %v1281 = vld [vmem:[%s1 + $0x88] sm:$0xff]
  %v1282 = vld [vmem:[%s1 + $0x90] sm:$0xff]
  %v1283 = vld [vmem:[%s1 + $0x98] sm:$0xff]
  %v1284 = vld [vmem:[%s1 + $0xa0] sm:$0xff]
  %v1285 = vld [vmem:[%s1 + $0xa8] sm:$0xff]
  %v1286 = vld [vmem:[%s1 + $0xb0] sm:$0xff]
  %v1287 = vld [vmem:[%s1 + $0xb8] sm:$0xff]
  %v1288 = vld [vmem:[%s1 + $0xc0] sm:$0xff]
  %v1289 = vld [vmem:[%s1 + $0xc8] sm:$0xff]
  %v1290 = vld [vmem:[%s1 + $0xd0] sm:$0xff]
  %v1291 = vld [vmem:[%s1 + $0xd8] sm:$0xff]
  %v1292 = vld [vmem:[%s1 + $0xe0] sm:$0xff]
  %v1293 = vld [vmem:[%s1 + $0xe8] sm:$0xff]
  %v1294 = vld [vmem:[%s1 + $0xf0] sm:$0xff]
  %v1295 = vld [vmem:[%s1 + $0xf8] sm:$0xff]
  %v1328 = vunpack.c.l.b16 %v1264
  %v1329 = vunpack.c.h.b16 %v1264
  %v1330 = vunpack.c.l.b16 %v1265
  %v1331 = vunpack.c.h.b16 %v1265
  %v1332 = vunpack.c.l.b16 %v1266
  %v1333 = vunpack.c.h.b16 %v1266
  %v1334 = vunpack.c.l.b16 %v1267
  %v1335 = vunpack.c.h.b16 %v1267
  %v1336 = vunpack.c.l.b16 %v1268
  %v1337 = vunpack.c.h.b16 %v1268
  %v1338 = vunpack.c.l.b16 %v1269
  %v1339 = vunpack.c.h.b16 %v1269
  %v1340 = vunpack.c.l.b16 %v1270
  %v1341 = vunpack.c.h.b16 %v1270
  %v1342 = vunpack.c.l.b16 %v1271
  %v1343 = vunpack.c.h.b16 %v1271
  %v1344 = vunpack.c.l.b16 %v1272
  %v1345 = vunpack.c.h.b16 %v1272
  %v1346 = vunpack.c.l.b16 %v1273
  %v1347 = vunpack.c.h.b16 %v1273
  %v1348 = vunpack.c.l.b16 %v1274
  %v1349 = vunpack.c.h.b16 %v1274
  %v1350 = vunpack.c.l.b16 %v1275
  %v1351 = vunpack.c.h.b16 %v1275
  %v1352 = vunpack.c.l.b16 %v1276
  %v1353 = vunpack.c.h.b16 %v1276
  %v1354 = vunpack.c.l.b16 %v1277
  %v1355 = vunpack.c.h.b16 %v1277
  %v1356 = vunpack.c.l.b16 %v1278
  %v1357 = vunpack.c.h.b16 %v1278
  %v1358 = vunpack.c.l.b16 %v1279
  %v1359 = vunpack.c.h.b16 %v1279
  %v1360 = vunpack.c.l.b16 %v1280
  %v1361 = vunpack.c.h.b16 %v1280
  %v1362 = vunpack.c.l.b16 %v1281
  %v1363 = vunpack.c.h.b16 %v1281
  %v1364 = vunpack.c.l.b16 %v1282
  %v1365 = vunpack.c.h.b16 %v1282
  %v1366 = vunpack.c.l.b16 %v1283
  %v1367 = vunpack.c.h.b16 %v1283
  %v1368 = vunpack.c.l.b16 %v1284
  %v1369 = vunpack.c.h.b16 %v1284
  %v1370 = vunpack.c.l.b16 %v1285
  %v1371 = vunpack.c.h.b16 %v1285
  %v1372 = vunpack.c.l.b16 %v1286
  %v1373 = vunpack.c.h.b16 %v1286
  %v1374 = vunpack.c.l.b16 %v1287
  %v1375 = vunpack.c.h.b16 %v1287
  %v1376 = vunpack.c.l.b16 %v1288
  %v1377 = vunpack.c.h.b16 %v1288
  %v1378 = vunpack.c.l.b16 %v1289
  %v1379 = vunpack.c.h.b16 %v1289
  %v1380 = vunpack.c.l.b16 %v1290
  %v1381 = vunpack.c.h.b16 %v1290
  %v1382 = vunpack.c.l.b16 %v1291
  %v1383 = vunpack.c.h.b16 %v1291
  %v1384 = vunpack.c.l.b16 %v1292
  %v1385 = vunpack.c.h.b16 %v1292
  %v1386 = vunpack.c.l.b16 %v1293
  %v1387 = vunpack.c.h.b16 %v1293
  %v1388 = vunpack.c.l.b16 %v1294
  %v1389 = vunpack.c.h.b16 %v1294
  %v1390 = vunpack.c.l.b16 %v1295
  %v1391 = vunpack.c.h.b16 %v1295
  %v1392 = vpack.c.b16 %v1332, %v1328
  %v1393 = vpack.c.b16 %v1333, %v1329
  %v1394 = vpack.c.b16 %v1334, %v1330
  %v1395 = vpack.c.b16 %v1335, %v1331
  %v1396 = vpack.c.b16 %v1340, %v1336
  %v1397 = vpack.c.b16 %v1341, %v1337
  %v1398 = vpack.c.b16 %v1342, %v1338
  %v1399 = vpack.c.b16 %v1343, %v1339
  %v1400 = vpack.c.b16 %v1348, %v1344
  %v1401 = vpack.c.b16 %v1349, %v1345
  %v1402 = vpack.c.b16 %v1350, %v1346
  %v1403 = vpack.c.b16 %v1351, %v1347
  %v1404 = vpack.c.b16 %v1356, %v1352
  %v1405 = vpack.c.b16 %v1357, %v1353
  %v1406 = vpack.c.b16 %v1358, %v1354
  %v1407 = vpack.c.b16 %v1359, %v1355
  %v1408 = vpack.c.b16 %v1364, %v1360
  %v1409 = vpack.c.b16 %v1365, %v1361
  %v1410 = vpack.c.b16 %v1366, %v1362
  %v1411 = vpack.c.b16 %v1367, %v1363
  %v1412 = vpack.c.b16 %v1372, %v1368
  %v1413 = vpack.c.b16 %v1373, %v1369
  %v1414 = vpack.c.b16 %v1374, %v1370
  %v1415 = vpack.c.b16 %v1375, %v1371
  %v1416 = vpack.c.b16 %v1380, %v1376
  %v1417 = vpack.c.b16 %v1381, %v1377
  %v1418 = vpack.c.b16 %v1382, %v1378
  %v1419 = vpack.c.b16 %v1383, %v1379
  %v1420 = vpack.c.b16 %v1388, %v1384
  %v1421 = vpack.c.b16 %v1389, %v1385
  %v1422 = vpack.c.b16 %v1390, %v1386
  %v1423 = vpack.c.b16 %v1391, %v1387
  %1456 = vmatprep.subr.bf16.mxu0 %v1393
  %1457 = vmatpush1.bf16.msra.mxu0 %v1392
  %1458 = vmatprep.subr.bf16.mxu0 %v1397
  %1459 = vmatpush1.bf16.msra.mxu0 %v1396
  %1460 = vmatprep.subr.bf16.mxu0 %v1401
  %1461 = vmatpush1.bf16.msra.mxu0 %v1400
  %1462 = vmatprep.subr.bf16.mxu0 %v1405
  %1463 = vmatpush1.bf16.msra.mxu0 %v1404
  %1464 = vmatprep.subr.bf16.mxu0 %v1409
  %1465 = vmatpush1.bf16.msra.mxu0 %v1408
  %1466 = vmatprep.subr.bf16.mxu0 %v1413
  %1467 = vmatpush1.bf16.msra.mxu0 %v1412
  %1468 = vmatprep.subr.bf16.mxu0 %v1417
  %1469 = vmatpush1.bf16.msra.mxu0 %v1416
  %1470 = vmatprep.subr.bf16.mxu0 %v1421
  %1471 = vmatpush1.bf16.msra.mxu0 %v1420
  %1472 = vmatprep.subr.bf16.mxu0 0
  %1473 = vmatpush1.bf16.msra.mxu0 0
  %1474 = vmatprep.subr.bf16.mxu0 0
  %1475 = vmatpush1.bf16.msra.mxu0 0
  %1476 = vmatprep.subr.bf16.mxu0 0
  %1477 = vmatpush1.bf16.msra.mxu0 0
  %1478 = vmatprep.subr.bf16.mxu0 0
  %1479 = vmatpush1.bf16.msra.mxu0 0
  %1480 = vmatprep.subr.bf16.mxu0 0
  %1481 = vmatpush1.bf16.msra.mxu0 0
  %1482 = vmatprep.subr.bf16.mxu0 0
  %1483 = vmatpush1.bf16.msra.mxu0 0
  %1484 = vmatprep.subr.bf16.mxu0 0
  %1485 = vmatpush1.bf16.msra.mxu0 0
  %1486 = vmatprep.subr.bf16.mxu0 0
  %1487 = vmatpush1.bf16.msra.mxu0 0
  %1488 = vmatprep.mubr.bf16.mxu0 0
  %1489 = vmatmul.mubr.bf16.gmra.mrb[0].mxu0 %v1263
  %v1490 = vpop.f32.mrb[0].mxu0
  %v1491 = vadd.f32 0.0, %v1490
  %v1492 = vpop.f32.mrb[0].mxu0
  %v1493 = vadd.f32 0.0, %v1492
  %v1494 = vpop.f32.mrb[0].mxu0
  %v1495 = vpop.f32.mrb[0].mxu0
  %1496 = vdwg.mxu0
  %1497 = vmatprep.subr.bf16.mxu0 %v1395
  %1498 = vmatpush1.bf16.msra.mxu0 %v1394
  %1499 = vmatprep.subr.bf16.mxu0 %v1399
  %1500 = vmatpush1.bf16.msra.mxu0 %v1398
  %1501 = vmatprep.subr.bf16.mxu0 %v1403
  %1502 = vmatpush1.bf16.msra.mxu0 %v1402
  %1503 = vmatprep.subr.bf16.mxu0 %v1407
  %1504 = vmatpush1.bf16.msra.mxu0 %v1406
  %1505 = vmatprep.subr.bf16.mxu0 %v1411
  %1506 = vmatpush1.bf16.msra.mxu0 %v1410
  %1507 = vmatprep.subr.bf16.mxu0 %v1415
  %1508 = vmatpush1.bf16.msra.mxu0 %v1414
  %1509 = vmatprep.subr.bf16.mxu0 %v1419
  %1510 = vmatpush1.bf16.msra.mxu0 %v1418
  %1511 = vmatprep.subr.bf16.mxu0 %v1423
  %1512 = vmatpush1.bf16.msra.mxu0 %v1422
  %1513 = vmatprep.subr.bf16.mxu0 0
  %1514 = vmatpush1.bf16.msra.mxu0 0
  %1515 = vmatprep.subr.bf16.mxu0 0
  %1516 = vmatpush1.bf16.msra.mxu0 0
  %1517 = vmatprep.subr.bf16.mxu0 0
  %1518 = vmatpush1.bf16.msra.mxu0 0
  %1519 = vmatprep.subr.bf16.mxu0 0
  %1520 = vmatpush1.bf16.msra.mxu0 0
  %1521 = vmatprep.subr.bf16.mxu0 0
  %1522 = vmatpush1.bf16.msra.mxu0 0
  %1523 = vmatprep.subr.bf16.mxu0 0
  %1524 = vmatpush1.bf16.msra.mxu0 0
  %1525 = vmatprep.subr.bf16.mxu0 0
  %1526 = vmatpush1.bf16.msra.mxu0 0
  %1527 = vmatprep.subr.bf16.mxu0 0
  %1528 = vmatpush1.bf16.msra.mxu0 0
  %1529 = vmatprep.mubr.bf16.mxu0 0
  %1530 = vmatmul.mubr.bf16.gmra.mrb[0].mxu0 %v1263
  %v1531 = vpop.f32.mrb[0].mxu0
  %v1532 = vadd.f32 0.0, %v1531
  %v1533 = vpop.f32.mrb[0].mxu0
  %v1534 = vadd.f32 0.0, %v1533
  %v1535 = vpop.f32.mrb[0].mxu0
  %v1536 = vpop.f32.mrb[0].mxu0
  %1537 = vdwg.mxu0
  %v1538 = vadd.f32 %v1259, %v1491
  %v1539 = vadd.f32 %v1260, %v1493
  %v1540 = vadd.f32 %v1261, %v1532
  %v1541 = vadd.f32 %v1262, %v1534
  %v1542 = vxor.u32 %v1538, 2147483648
  %v1543 = vmul.f32 %v1542, 1.442695
  %v1544 = vpow.pop %v1543
  %v1545 = vadd.f32 %v1544, 1.0
  %v1546 = vrcp.pop %v1545
  %v1547 = vmul.f32 1.0, %v1546
  %v1548 = vxor.u32 %v1539, 2147483648
  %v1549 = vmul.f32 %v1548, 1.442695
  %v1550 = vpow.pop %v1549
  %v1551 = vadd.f32 %v1550, 1.0
  %v1552 = vrcp.pop %v1551
  %v1553 = vmul.f32 1.0, %v1552
  %v1554 = vtanh.pop %v1540
  %v1555 = vxor.u32 %v1541, 2147483648
  %v1556 = vmul.f32 %v1555, 1.442695
  %v1557 = vpow.pop %v1556
  %v1558 = vadd.f32 %v1557, 1.0
  %v1559 = vrcp.pop %v1558
  %v1560 = vmul.f32 1.0, %v1559
  %v1561 = vmul.f32 %v1553, %v1253
  %v1562 = vmul.f32 %v1547, %v1554
  %v1563 = vadd.f32 %v1561, %v1562
  %v1564 = vtanh.pop %v1563
  %v1565 = vmul.f32 %v1560, %v1564
  %s1566 = scalar_lea.vmem %s2, 32
  %1567 = vst [vmem:[%s1566] sm:$0xff] %v1565
  %s1568 = scalar_lea.vmem %s0, 160
  %v1569 = vld [vmem:[%s1568] sm:$0xff]
  %v1570 = vld [vmem:[%s1568 + $0x8] sm:$0xff]
  %v1571 = vld [vmem:[%s1568 + $0x10] sm:$0xff]
  %v1572 = vld [vmem:[%s1568 + $0x18] sm:$0xff]
  %v1573 = vpack.c.bf16 %v1565, %v1565
  %v1574 = vld [vmem:[%s1] sm:$0xff]
  %v1575 = vld [vmem:[%s1 + $0x8] sm:$0xff]
  %v1576 = vld [vmem:[%s1 + $0x10] sm:$0xff]
  %v1577 = vld [vmem:[%s1 + $0x18] sm:$0xff]
  %v1578 = vld [vmem:[%s1 + $0x20] sm:$0xff]
  %v1579 = vld [vmem:[%s1 + $0x28] sm:$0xff]
  %v1580 = vld [vmem:[%s1 + $0x30] sm:$0xff]
  %v1581 = vld [vmem:[%s1 + $0x38] sm:$0xff]
  %v1582 = vld [vmem:[%s1 + $0x40] sm:$0xff]
  %v1583 = vld [vmem:[%s1 + $0x48] sm:$0xff]
  %v1584 = vld [vmem:[%s1 + $0x50] sm:$0xff]
  %v1585 = vld [vmem:[%s1 + $0x58] sm:$0xff]
  %v1586 = vld [vmem:[%s1 + $0x60] sm:$0xff]
  %v1587 = vld [vmem:[%s1 + $0x68] sm:$0xff]
  %v1588 = vld [vmem:[%s1 + $0x70] sm:$0xff]
  %v1589 = vld [vmem:[%s1 + $0x78] sm:$0xff]
  %v1590 = vld [vmem:[%s1 + $0x80] sm:$0xff]
  %v1591 = vld [vmem:[%s1 + $0x88] sm:$0xff]
  %v1592 = vld [vmem:[%s1 + $0x90] sm:$0xff]
  %v1593 = vld [vmem:[%s1 + $0x98] sm:$0xff]
  %v1594 = vld [vmem:[%s1 + $0xa0] sm:$0xff]
  %v1595 = vld [vmem:[%s1 + $0xa8] sm:$0xff]
  %v1596 = vld [vmem:[%s1 + $0xb0] sm:$0xff]
  %v1597 = vld [vmem:[%s1 + $0xb8] sm:$0xff]
  %v1598 = vld [vmem:[%s1 + $0xc0] sm:$0xff]
  %v1599 = vld [vmem:[%s1 + $0xc8] sm:$0xff]
  %v1600 = vld [vmem:[%s1 + $0xd0] sm:$0xff]
  %v1601 = vld [vmem:[%s1 + $0xd8] sm:$0xff]
  %v1602 = vld [vmem:[%s1 + $0xe0] sm:$0xff]
  %v1603 = vld [vmem:[%s1 + $0xe8] sm:$0xff]
  %v1604 = vld [vmem:[%s1 + $0xf0] sm:$0xff]
  %v1605 = vld [vmem:[%s1 + $0xf8] sm:$0xff]
  %v1638 = vunpack.c.l.b16 %v1574
  %v1639 = vunpack.c.h.b16 %v1574
  %v1640 = vunpack.c.l.b16 %v1575
  %v1641 = vunpack.c.h.b16 %v1575
  %v1642 = vunpack.c.l.b16 %v1576
  %v1643 = vunpack.c.h.b16 %v1576
  %v1644 = vunpack.c.l.b16 %v1577
  %v1645 = vunpack.c.h.b16 %v1577
  %v1646 = vunpack.c.l.b16 %v1578
  %v1647 = vunpack.c.h.b16 %v1578
  %v1648 = vunpack.c.l.b16 %v1579
  %v1649 = vunpack.c.h.b16 %v1579
  %v1650 = vunpack.c.l.b16 %v1580
  %v1651 = vunpack.c.h.b16 %v1580
  %v1652 = vunpack.c.l.b16 %v1581
  %v1653 = vunpack.c.h.b16 %v1581
  %v1654 = vunpack.c.l.b16 %v1582
  %v1655 = vunpack.c.h.b16 %v1582
  %v1656 = vunpack.c.l.b16 %v1583
  %v1657 = vunpack.c.h.b16 %v1583
  %v1658 = vunpack.c.l.b16 %v1584
  %v1659 = vunpack.c.h.b16 %v1584
  %v1660 = vunpack.c.l.b16 %v1585
  %v1661 = vunpack.c.h.b16 %v1585
  %v1662 = vunpack.c.l.b16 %v1586
  %v1663 = vunpack.c.h.b16 %v1586
  %v1664 = vunpack.c.l.b16 %v1587
  %v1665 = vunpack.c.h.b16 %v1587
  %v1666 = vunpack.c.l.b16 %v1588
  %v1667 = vunpack.c.h.b16 %v1588
  %v1668 = vunpack.c.l.b16 %v1589
  %v1669 = vunpack.c.h.b16 %v1589
  %v1670 = vunpack.c.l.b16 %v1590
  %v1671 = vunpack.c.h.b16 %v1590
  %v1672 = vunpack.c.l.b16 %v1591
  %v1673 = vunpack.c.h.b16 %v1591
  %v1674 = vunpack.c.l.b16 %v1592
  %v1675 = vunpack.c.h.b16 %v1592
  %v1676 = vunpack.c.l.b16 %v1593
  %v1677 = vunpack.c.h.b16 %v1593
  %v1678 = vunpack.c.l.b16 %v1594
  %v1679 = vunpack.c.h.b16 %v1594
  %v1680 = vunpack.c.l.b16 %v1595
  %v1681 = vunpack.c.h.b16 %v1595
  %v1682 = vunpack.c.l.b16 %v1596
  %v1683 = vunpack.c.h.b16 %v1596
  %v1684 = vunpack.c.l.b16 %v1597
  %v1685 = vunpack.c.h.b16 %v1597
  %v1686 = vunpack.c.l.b16 %v1598
  %v1687 = vunpack.c.h.b16 %v1598
  %v1688 = vunpack.c.l.b16 %v1599
  %v1689 = vunpack.c.h.b16 %v1599
  %v1690 = vunpack.c.l.b16 %v1600
  %v1691 = vunpack.c.h.b16 %v1600
  %v1692 = vunpack.c.l.b16 %v1601
  %v1693 = vunpack.c.h.b16 %v1601
  %v1694 = vunpack.c.l.b16 %v1602
  %v1695 = vunpack.c.h.b16 %v1602
  %v1696 = vunpack.c.l.b16 %v1603
  %v1697 = vunpack.c.h.b16 %v1603
  %v1698 = vunpack.c.l.b16 %v1604
  %v1699 = vunpack.c.h.b16 %v1604
  %v1700 = vunpack.c.l.b16 %v1605
  %v1701 = vunpack.c.h.b16 %v1605
  %v1702 = vpack.c.b16 %v1642, %v1638
  %v1703 = vpack.c.b16 %v1643, %v1639
  %v1704 = vpack.c.b16 %v1644, %v1640
  %v1705 = vpack.c.b16 %v1645, %v1641
  %v1706 = vpack.c.b16 %v1650, %v1646
  %v1707 = vpack.c.b16 %v1651, %v1647
  %v1708 = vpack.c.b16 %v1652, %v1648
  %v1709 = vpack.c.b16 %v1653, %v1649
  %v1710 = vpack.c.b16 %v1658, %v1654
  %v1711 = vpack.c.b16 %v1659, %v1655
  %v1712 = vpack.c.b16 %v1660, %v1656
  %v1713 = vpack.c.b16 %v1661, %v1657
  %v1714 = vpack.c.b16 %v1666, %v1662
  %v1715 = vpack.c.b16 %v1667, %v1663
  %v1716 = vpack.c.b16 %v1668, %v1664
  %v1717 = vpack.c.b16 %v1669, %v1665
  %v1718 = vpack.c.b16 %v1674, %v1670
  %v1719 = vpack.c.b16 %v1675, %v1671
  %v1720 = vpack.c.b16 %v1676, %v1672
  %v1721 = vpack.c.b16 %v1677, %v1673
  %v1722 = vpack.c.b16 %v1682, %v1678
  %v1723 = vpack.c.b16 %v1683, %v1679
  %v1724 = vpack.c.b16 %v1684, %v1680
  %v1725 = vpack.c.b16 %v1685, %v1681
  %v1726 = vpack.c.b16 %v1690, %v1686
  %v1727 = vpack.c.b16 %v1691, %v1687
  %v1728 = vpack.c.b16 %v1692, %v1688
  %v1729 = vpack.c.b16 %v1693, %v1689
  %v1730 = vpack.c.b16 %v1698, %v1694
  %v1731 = vpack.c.b16 %v1699, %v1695
  %v1732 = vpack.c.b16 %v1700, %v1696
  %v1733 = vpack.c.b16 %v1701, %v1697
  %1766 = vmatprep.subr.bf16.mxu0 %v1703
  %1767 = vmatpush1.bf16.msra.mxu0 %v1702
  %1768 = vmatprep.subr.bf16.mxu0 %v1707
  %1769 = vmatpush1.bf16.msra.mxu0 %v1706
  %1770 = vmatprep.subr.bf16.mxu0 %v1711
  %1771 = vmatpush1.bf16.msra.mxu0 %v1710
  %1772 = vmatprep.subr.bf16.mxu0 %v1715
  %1773 = vmatpush1.bf16.msra.mxu0 %v1714
  %1774 = vmatprep.subr.bf16.mxu0 %v1719
  %1775 = vmatpush1.bf16.msra.mxu0 %v1718
  %1776 = vmatprep.subr.bf16.mxu0 %v1723
  %1777 = vmatpush1.bf16.msra.mxu0 %v1722
  %1778 = vmatprep.subr.bf16.mxu0 %v1727
  %1779 = vmatpush1.bf16.msra.mxu0 %v1726
  %1780 = vmatprep.subr.bf16.mxu0 %v1731
  %1781 = vmatpush1.bf16.msra.mxu0 %v1730
  %1782 = vmatprep.subr.bf16.mxu0 0
  %1783 = vmatpush1.bf16.msra.mxu0 0
  %1784 = vmatprep.subr.bf16.mxu0 0
  %1785 = vmatpush1.bf16.msra.mxu0 0
  %1786 = vmatprep.subr.bf16.mxu0 0
  %1787 = vmatpush1.bf16.msra.mxu0 0
  %1788 = vmatprep.subr.bf16.mxu0 0
  %1789 = vmatpush1.bf16.msra.mxu0 0
  %1790 = vmatprep.subr.bf16.mxu0 0
  %1791 = vmatpush1.bf16.msra.mxu0 0
  %1792 = vmatprep.subr.bf16.mxu0 0
  %1793 = vmatpush1.bf16.msra.mxu0 0
  %1794 = vmatprep.subr.bf16.mxu0 0
  %1795 = vmatpush1.bf16.msra.mxu0 0
  %1796 = vmatprep.subr.bf16.mxu0 0
  %1797 = vmatpush1.bf16.msra.mxu0 0
  %1798 = vmatprep.mubr.bf16.mxu0 0
  %1799 = vmatmul.mubr.bf16.gmra.mrb[0].mxu0 %v1573
  %v1800 = vpop.f32.mrb[0].mxu0
  %v1801 = vadd.f32 0.0, %v1800
  %v1802 = vpop.f32.mrb[0].mxu0
  %v1803 = vadd.f32 0.0, %v1802
  %v1804 = vpop.f32.mrb[0].mxu0
  %v1805 = vpop.f32.mrb[0].mxu0
  %1806 = vdwg.mxu0
  %1807 = vmatprep.subr.bf16.mxu0 %v1705
  %1808 = vmatpush1.bf16.msra.mxu0 %v1704
  %1809 = vmatprep.subr.bf16.mxu0 %v1709
  %1810 = vmatpush1.bf16.msra.mxu0 %v1708
  %1811 = vmatprep.subr.bf16.mxu0 %v1713
  %1812 = vmatpush1.bf16.msra.mxu0 %v1712
  %1813 = vmatprep.subr.bf16.mxu0 %v1717
  %1814 = vmatpush1.bf16.msra.mxu0 %v1716
  %1815 = vmatprep.subr.bf16.mxu0 %v1721
  %1816 = vmatpush1.bf16.msra.mxu0 %v1720
  %1817 = vmatprep.subr.bf16.mxu0 %v1725
  %1818 = vmatpush1.bf16.msra.mxu0 %v1724
  %1819 = vmatprep.subr.bf16.mxu0 %v1729
  %1820 = vmatpush1.bf16.msra.mxu0 %v1728
  %1821 = vmatprep.subr.bf16.mxu0 %v1733
  %1822 = vmatpush1.bf16.msra.mxu0 %v1732
  %1823 = vmatprep.subr.bf16.mxu0 0
  %1824 = vmatpush1.bf16.msra.mxu0 0
  %1825 = vmatprep.subr.bf16.mxu0 0
  %1826 = vmatpush1.bf16.msra.mxu0 0
  %1827 = vmatprep.subr.bf16.mxu0 0
  %1828 = vmatpush1.bf16.msra.mxu0 0
  %1829 = vmatprep.subr.bf16.mxu0 0
  %1830 = vmatpush1.bf16.msra.mxu0 0
  %1831 = vmatprep.subr.bf16.mxu0 0
  %1832 = vmatpush1.bf16.msra.mxu0 0
  %1833 = vmatprep.subr.bf16.mxu0 0
  %1834 = vmatpush1.bf16.msra.mxu0 0
  %1835 = vmatprep.subr.bf16.mxu0 0
  %1836 = vmatpush1.bf16.msra.mxu0 0
  %1837 = vmatprep.subr.bf16.mxu0 0
  %1838 = vmatpush1.bf16.msra.mxu0 0
  %1839 = vmatprep.mubr.bf16.mxu0 0
  %1840 = vmatmul.mubr.bf16.gmra.mrb[0].mxu0 %v1573
  %v1841 = vpop.f32.mrb[0].mxu0
  %v1842 = vadd.f32 0.0, %v1841
  %v1843 = vpop.f32.mrb[0].mxu0
  %v1844 = vadd.f32 0.0, %v1843
  %v1845 = vpop.f32.mrb[0].mxu0
  %v1846 = vpop.f32.mrb[0].mxu0
  %1847 = vdwg.mxu0
  %v1848 = vadd.f32 %v1569, %v1801
  %v1849 = vadd.f32 %v1570, %v1803
  %v1850 = vadd.f32 %v1571, %v1842
  %v1851 = vadd.f32 %v1572, %v1844
  %v1852 = vxor.u32 %v1848, 2147483648
  %v1853 = vmul.f32 %v1852, 1.442695
  %v1854 = vpow.pop %v1853
  %v1855 = vadd.f32 %v1854, 1.0
  %v1856 = vrcp.pop %v1855
  %v1857 = vmul.f32 1.0, %v1856
  %v1858 = vxor.u32 %v1849, 2147483648
  %v1859 = vmul.f32 %v1858, 1.442695
  %v1860 = vpow.pop %v1859
  %v1861 = vadd.f32 %v1860, 1.0
  %v1862 = vrcp.pop %v1861
  %v1863 = vmul.f32 1.0, %v1862
  %v1864 = vtanh.pop %v1850
  %v1865 = vxor.u32 %v1851, 2147483648
  %v1866 = vmul.f32 %v1865, 1.442695
  %v1867 = vpow.pop %v1866
  %v1868 = vadd.f32 %v1867, 1.0
  %v1869 = vrcp.pop %v1868
  %v1870 = vmul.f32 1.0, %v1869
  %v1871 = vmul.f32 %v1863, %v1563
  %v1872 = vmul.f32 %v1857, %v1864
  %v1873 = vadd.f32 %v1871, %v1872
  %v1874 = vtanh.pop %v1873
  %v1875 = vmul.f32 %v1870, %v1874
  %s1876 = scalar_lea.vmem %s2, 40
  %1877 = vst [vmem:[%s1876] sm:$0xff] %v1875
  %s1878 = scalar_lea.vmem %s0, 192
  %v1879 = vld [vmem:[%s1878] sm:$0xff]
  %v1880 = vld [vmem:[%s1878 + $0x8] sm:$0xff]
  %v1881 = vld [vmem:[%s1878 + $0x10] sm:$0xff]
  %v1882 = vld [vmem:[%s1878 + $0x18] sm:$0xff]
  %v1883 = vpack.c.bf16 %v1875, %v1875
  %v1884 = vld [vmem:[%s1] sm:$0xff]
  %v1885 = vld [vmem:[%s1 + $0x8] sm:$0xff]
  %v1886 = vld [vmem:[%s1 + $0x10] sm:$0xff]
  %v1887 = vld [vmem:[%s1 + $0x18] sm:$0xff]
  %v1888 = vld [vmem:[%s1 + $0x20] sm:$0xff]
  %v1889 = vld [vmem:[%s1 + $0x28] sm:$0xff]
  %v1890 = vld [vmem:[%s1 + $0x30] sm:$0xff]
  %v1891 = vld [vmem:[%s1 + $0x38] sm:$0xff]
  %v1892 = vld [vmem:[%s1 + $0x40] sm:$0xff]
  %v1893 = vld [vmem:[%s1 + $0x48] sm:$0xff]
  %v1894 = vld [vmem:[%s1 + $0x50] sm:$0xff]
  %v1895 = vld [vmem:[%s1 + $0x58] sm:$0xff]
  %v1896 = vld [vmem:[%s1 + $0x60] sm:$0xff]
  %v1897 = vld [vmem:[%s1 + $0x68] sm:$0xff]
  %v1898 = vld [vmem:[%s1 + $0x70] sm:$0xff]
  %v1899 = vld [vmem:[%s1 + $0x78] sm:$0xff]
  %v1900 = vld [vmem:[%s1 + $0x80] sm:$0xff]
  %v1901 = vld [vmem:[%s1 + $0x88] sm:$0xff]
  %v1902 = vld [vmem:[%s1 + $0x90] sm:$0xff]
  %v1903 = vld [vmem:[%s1 + $0x98] sm:$0xff]
  %v1904 = vld [vmem:[%s1 + $0xa0] sm:$0xff]
  %v1905 = vld [vmem:[%s1 + $0xa8] sm:$0xff]
  %v1906 = vld [vmem:[%s1 + $0xb0] sm:$0xff]
  %v1907 = vld [vmem:[%s1 + $0xb8] sm:$0xff]
  %v1908 = vld [vmem:[%s1 + $0xc0] sm:$0xff]
  %v1909 = vld [vmem:[%s1 + $0xc8] sm:$0xff]
  %v1910 = vld [vmem:[%s1 + $0xd0] sm:$0xff]
  %v1911 = vld [vmem:[%s1 + $0xd8] sm:$0xff]
  %v1912 = vld [vmem:[%s1 + $0xe0] sm:$0xff]
  %v1913 = vld [vmem:[%s1 + $0xe8] sm:$0xff]
  %v1914 = vld [vmem:[%s1 + $0xf0] sm:$0xff]
  %v1915 = vld [vmem:[%s1 + $0xf8] sm:$0xff]
  %v1948 = vunpack.c.l.b16 %v1884
  %v1949 = vunpack.c.h.b16 %v1884
  %v1950 = vunpack.c.l.b16 %v1885
  %v1951 = vunpack.c.h.b16 %v1885
  %v1952 = vunpack.c.l.b16 %v1886
  %v1953 = vunpack.c.h.b16 %v1886
  %v1954 = vunpack.c.l.b16 %v1887
  %v1955 = vunpack.c.h.b16 %v1887
  %v1956 = vunpack.c.l.b16 %v1888
  %v1957 = vunpack.c.h.b16 %v1888
  %v1958 = vunpack.c.l.b16 %v1889
  %v1959 = vunpack.c.h.b16 %v1889
  %v1960 = vunpack.c.l.b16 %v1890
  %v1961 = vunpack.c.h.b16 %v1890
  %v1962 = vunpack.c.l.b16 %v1891
  %v1963 = vunpack.c.h.b16 %v1891
  %v1964 = vunpack.c.l.b16 %v1892
  %v1965 = vunpack.c.h.b16 %v1892
  %v1966 = vunpack.c.l.b16 %v1893
  %v1967 = vunpack.c.h.b16 %v1893
  %v1968 = vunpack.c.l.b16 %v1894
  %v1969 = vunpack.c.h.b16 %v1894
  %v1970 = vunpack.c.l.b16 %v1895
  %v1971 = vunpack.c.h.b16 %v1895
  %v1972 = vunpack.c.l.b16 %v1896
  %v1973 = vunpack.c.h.b16 %v1896
  %v1974 = vunpack.c.l.b16 %v1897
  %v1975 = vunpack.c.h.b16 %v1897
  %v1976 = vunpack.c.l.b16 %v1898
  %v1977 = vunpack.c.h.b16 %v1898
  %v1978 = vunpack.c.l.b16 %v1899
  %v1979 = vunpack.c.h.b16 %v1899
  %v1980 = vunpack.c.l.b16 %v1900
  %v1981 = vunpack.c.h.b16 %v1900
  %v1982 = vunpack.c.l.b16 %v1901
  %v1983 = vunpack.c.h.b16 %v1901
  %v1984 = vunpack.c.l.b16 %v1902
  %v1985 = vunpack.c.h.b16 %v1902
  %v1986 = vunpack.c.l.b16 %v1903
  %v1987 = vunpack.c.h.b16 %v1903
  %v1988 = vunpack.c.l.b16 %v1904
  %v1989 = vunpack.c.h.b16 %v1904
  %v1990 = vunpack.c.l.b16 %v1905
  %v1991 = vunpack.c.h.b16 %v1905
  %v1992 = vunpack.c.l.b16 %v1906
  %v1993 = vunpack.c.h.b16 %v1906
  %v1994 = vunpack.c.l.b16 %v1907
  %v1995 = vunpack.c.h.b16 %v1907
  %v1996 = vunpack.c.l.b16 %v1908
  %v1997 = vunpack.c.h.b16 %v1908
  %v1998 = vunpack.c.l.b16 %v1909
  %v1999 = vunpack.c.h.b16 %v1909
  %v2000 = vunpack.c.l.b16 %v1910
  %v2001 = vunpack.c.h.b16 %v1910
  %v2002 = vunpack.c.l.b16 %v1911
  %v2003 = vunpack.c.h.b16 %v1911
  %v2004 = vunpack.c.l.b16 %v1912
  %v2005 = vunpack.c.h.b16 %v1912
  %v2006 = vunpack.c.l.b16 %v1913
  %v2007 = vunpack.c.h.b16 %v1913
  %v2008 = vunpack.c.l.b16 %v1914
  %v2009 = vunpack.c.h.b16 %v1914
  %v2010 = vunpack.c.l.b16 %v1915
  %v2011 = vunpack.c.h.b16 %v1915
  %v2012 = vpack.c.b16 %v1952, %v1948
  %v2013 = vpack.c.b16 %v1953, %v1949
  %v2014 = vpack.c.b16 %v1954, %v1950
  %v2015 = vpack.c.b16 %v1955, %v1951
  %v2016 = vpack.c.b16 %v1960, %v1956
  %v2017 = vpack.c.b16 %v1961, %v1957
  %v2018 = vpack.c.b16 %v1962, %v1958
  %v2019 = vpack.c.b16 %v1963, %v1959
  %v2020 = vpack.c.b16 %v1968, %v1964
  %v2021 = vpack.c.b16 %v1969, %v1965
  %v2022 = vpack.c.b16 %v1970, %v1966
  %v2023 = vpack.c.b16 %v1971, %v1967
  %v2024 = vpack.c.b16 %v1976, %v1972
  %v2025 = vpack.c.b16 %v1977, %v1973
  %v2026 = vpack.c.b16 %v1978, %v1974
  %v2027 = vpack.c.b16 %v1979, %v1975
  %v2028 = vpack.c.b16 %v1984, %v1980
  %v2029 = vpack.c.b16 %v1985, %v1981
  %v2030 = vpack.c.b16 %v1986, %v1982
  %v2031 = vpack.c.b16 %v1987, %v1983
  %v2032 = vpack.c.b16 %v1992, %v1988
  %v2033 = vpack.c.b16 %v1993, %v1989
  %v2034 = vpack.c.b16 %v1994, %v1990
  %v2035 = vpack.c.b16 %v1995, %v1991
  %v2036 = vpack.c.b16 %v2000, %v1996
  %v2037 = vpack.c.b16 %v2001, %v1997
  %v2038 = vpack.c.b16 %v2002, %v1998
  %v2039 = vpack.c.b16 %v2003, %v1999
  %v2040 = vpack.c.b16 %v2008, %v2004
  %v2041 = vpack.c.b16 %v2009, %v2005
  %v2042 = vpack.c.b16 %v2010, %v2006
  %v2043 = vpack.c.b16 %v2011, %v2007
  %2076 = vmatprep.subr.bf16.mxu0 %v2013
  %2077 = vmatpush1.bf16.msra.mxu0 %v2012
  %2078 = vmatprep.subr.bf16.mxu0 %v2017
  %2079 = vmatpush1.bf16.msra.mxu0 %v2016
  %2080 = vmatprep.subr.bf16.mxu0 %v2021
  %2081 = vmatpush1.bf16.msra.mxu0 %v2020
  %2082 = vmatprep.subr.bf16.mxu0 %v2025
  %2083 = vmatpush1.bf16.msra.mxu0 %v2024
  %2084 = vmatprep.subr.bf16.mxu0 %v2029
  %2085 = vmatpush1.bf16.msra.mxu0 %v2028
  %2086 = vmatprep.subr.bf16.mxu0 %v2033
  %2087 = vmatpush1.bf16.msra.mxu0 %v2032
  %2088 = vmatprep.subr.bf16.mxu0 %v2037
  %2089 = vmatpush1.bf16.msra.mxu0 %v2036
  %2090 = vmatprep.subr.bf16.mxu0 %v2041
  %2091 = vmatpush1.bf16.msra.mxu0 %v2040
  %2092 = vmatprep.subr.bf16.mxu0 0
  %2093 = vmatpush1.bf16.msra.mxu0 0
  %2094 = vmatprep.subr.bf16.mxu0 0
  %2095 = vmatpush1.bf16.msra.mxu0 0
  %2096 = vmatprep.subr.bf16.mxu0 0
  %2097 = vmatpush1.bf16.msra.mxu0 0
  %2098 = vmatprep.subr.bf16.mxu0 0
  %2099 = vmatpush1.bf16.msra.mxu0 0
  %2100 = vmatprep.subr.bf16.mxu0 0
  %2101 = vmatpush1.bf16.msra.mxu0 0
  %2102 = vmatprep.subr.bf16.mxu0 0
  %2103 = vmatpush1.bf16.msra.mxu0 0
  %2104 = vmatprep.subr.bf16.mxu0 0
  %2105 = vmatpush1.bf16.msra.mxu0 0
  %2106 = vmatprep.subr.bf16.mxu0 0
  %2107 = vmatpush1.bf16.msra.mxu0 0
  %2108 = vmatprep.mubr.bf16.mxu0 0
  %2109 = vmatmul.mubr.bf16.gmra.mrb[0].mxu0 %v1883
  %v2110 = vpop.f32.mrb[0].mxu0
  %v2111 = vadd.f32 0.0, %v2110
  %v2112 = vpop.f32.mrb[0].mxu0
  %v2113 = vadd.f32 0.0, %v2112
  %v2114 = vpop.f32.mrb[0].mxu0
  %v2115 = vpop.f32.mrb[0].mxu0
  %2116 = vdwg.mxu0
  %2117 = vmatprep.subr.bf16.mxu0 %v2015
  %2118 = vmatpush1.bf16.msra.mxu0 %v2014
  %2119 = vmatprep.subr.bf16.mxu0 %v2019
  %2120 = vmatpush1.bf16.msra.mxu0 %v2018
  %2121 = vmatprep.subr.bf16.mxu0 %v2023
  %2122 = vmatpush1.bf16.msra.mxu0 %v2022
  %2123 = vmatprep.subr.bf16.mxu0 %v2027
  %2124 = vmatpush1.bf16.msra.mxu0 %v2026
  %2125 = vmatprep.subr.bf16.mxu0 %v2031
  %2126 = vmatpush1.bf16.msra.mxu0 %v2030
  %2127 = vmatprep.subr.bf16.mxu0 %v2035
  %2128 = vmatpush1.bf16.msra.mxu0 %v2034
  %2129 = vmatprep.subr.bf16.mxu0 %v2039
  %2130 = vmatpush1.bf16.msra.mxu0 %v2038
  %2131 = vmatprep.subr.bf16.mxu0 %v2043
  %2132 = vmatpush1.bf16.msra.mxu0 %v2042
  %2133 = vmatprep.subr.bf16.mxu0 0
  %2134 = vmatpush1.bf16.msra.mxu0 0
  %2135 = vmatprep.subr.bf16.mxu0 0
  %2136 = vmatpush1.bf16.msra.mxu0 0
  %2137 = vmatprep.subr.bf16.mxu0 0
  %2138 = vmatpush1.bf16.msra.mxu0 0
  %2139 = vmatprep.subr.bf16.mxu0 0
  %2140 = vmatpush1.bf16.msra.mxu0 0
  %2141 = vmatprep.subr.bf16.mxu0 0
  %2142 = vmatpush1.bf16.msra.mxu0 0
  %2143 = vmatprep.subr.bf16.mxu0 0
  %2144 = vmatpush1.bf16.msra.mxu0 0
  %2145 = vmatprep.subr.bf16.mxu0 0
  %2146 = vmatpush1.bf16.msra.mxu0 0
  %2147 = vmatprep.subr.bf16.mxu0 0
  %2148 = vmatpush1.bf16.msra.mxu0 0
  %2149 = vmatprep.mubr.bf16.mxu0 0
  %2150 = vmatmul.mubr.bf16.gmra.mrb[0].mxu0 %v1883
  %v2151 = vpop.f32.mrb[0].mxu0
  %v2152 = vadd.f32 0.0, %v2151
  %v2153 = vpop.f32.mrb[0].mxu0
  %v2154 = vadd.f32 0.0, %v2153
  %v2155 = vpop.f32.mrb[0].mxu0
  %v2156 = vpop.f32.mrb[0].mxu0
  %2157 = vdwg.mxu0
  %v2158 = vadd.f32 %v1879, %v2111
  %v2159 = vadd.f32 %v1880, %v2113
  %v2160 = vadd.f32 %v1881, %v2152
  %v2161 = vadd.f32 %v1882, %v2154
  %v2162 = vxor.u32 %v2158, 2147483648
  %v2163 = vmul.f32 %v2162, 1.442695
  %v2164 = vpow.pop %v2163
  %v2165 = vadd.f32 %v2164, 1.0
  %v2166 = vrcp.pop %v2165
  %v2167 = vmul.f32 1.0, %v2166
  %v2168 = vxor.u32 %v2159, 2147483648
  %v2169 = vmul.f32 %v2168, 1.442695
  %v2170 = vpow.pop %v2169
  %v2171 = vadd.f32 %v2170, 1.0
  %v2172 = vrcp.pop %v2171
  %v2173 = vmul.f32 1.0, %v2172
  %v2174 = vtanh.pop %v2160
  %v2175 = vxor.u32 %v2161, 2147483648
  %v2176 = vmul.f32 %v2175, 1.442695
  %v2177 = vpow.pop %v2176
  %v2178 = vadd.f32 %v2177, 1.0
  %v2179 = vrcp.pop %v2178
  %v2180 = vmul.f32 1.0, %v2179
  %v2181 = vmul.f32 %v2173, %v1873
  %v2182 = vmul.f32 %v2167, %v2174
  %v2183 = vadd.f32 %v2181, %v2182
  %v2184 = vtanh.pop %v2183
  %v2185 = vmul.f32 %v2180, %v2184
  %s2186 = scalar_lea.vmem %s2, 48
  %2187 = vst [vmem:[%s2186] sm:$0xff] %v2185
  %s2188 = scalar_lea.vmem %s0, 224
  %v2189 = vld [vmem:[%s2188] sm:$0xff]
  %v2190 = vld [vmem:[%s2188 + $0x8] sm:$0xff]
  %v2191 = vld [vmem:[%s2188 + $0x10] sm:$0xff]
  %v2192 = vld [vmem:[%s2188 + $0x18] sm:$0xff]
  %v2193 = vpack.c.bf16 %v2185, %v2185
  %v2194 = vld [vmem:[%s1] sm:$0xff]
  %v2195 = vld [vmem:[%s1 + $0x8] sm:$0xff]
  %v2196 = vld [vmem:[%s1 + $0x10] sm:$0xff]
  %v2197 = vld [vmem:[%s1 + $0x18] sm:$0xff]
  %v2198 = vld [vmem:[%s1 + $0x20] sm:$0xff]
  %v2199 = vld [vmem:[%s1 + $0x28] sm:$0xff]
  %v2200 = vld [vmem:[%s1 + $0x30] sm:$0xff]
  %v2201 = vld [vmem:[%s1 + $0x38] sm:$0xff]
  %v2202 = vld [vmem:[%s1 + $0x40] sm:$0xff]
  %v2203 = vld [vmem:[%s1 + $0x48] sm:$0xff]
  %v2204 = vld [vmem:[%s1 + $0x50] sm:$0xff]
  %v2205 = vld [vmem:[%s1 + $0x58] sm:$0xff]
  %v2206 = vld [vmem:[%s1 + $0x60] sm:$0xff]
  %v2207 = vld [vmem:[%s1 + $0x68] sm:$0xff]
  %v2208 = vld [vmem:[%s1 + $0x70] sm:$0xff]
  %v2209 = vld [vmem:[%s1 + $0x78] sm:$0xff]
  %v2210 = vld [vmem:[%s1 + $0x80] sm:$0xff]
  %v2211 = vld [vmem:[%s1 + $0x88] sm:$0xff]
  %v2212 = vld [vmem:[%s1 + $0x90] sm:$0xff]
  %v2213 = vld [vmem:[%s1 + $0x98] sm:$0xff]
  %v2214 = vld [vmem:[%s1 + $0xa0] sm:$0xff]
  %v2215 = vld [vmem:[%s1 + $0xa8] sm:$0xff]
  %v2216 = vld [vmem:[%s1 + $0xb0] sm:$0xff]
  %v2217 = vld [vmem:[%s1 + $0xb8] sm:$0xff]
  %v2218 = vld [vmem:[%s1 + $0xc0] sm:$0xff]
  %v2219 = vld [vmem:[%s1 + $0xc8] sm:$0xff]
  %v2220 = vld [vmem:[%s1 + $0xd0] sm:$0xff]
  %v2221 = vld [vmem:[%s1 + $0xd8] sm:$0xff]
  %v2222 = vld [vmem:[%s1 + $0xe0] sm:$0xff]
  %v2223 = vld [vmem:[%s1 + $0xe8] sm:$0xff]
  %v2224 = vld [vmem:[%s1 + $0xf0] sm:$0xff]
  %v2225 = vld [vmem:[%s1 + $0xf8] sm:$0xff]
  %v2258 = vunpack.c.l.b16 %v2194
  %v2259 = vunpack.c.h.b16 %v2194
  %v2260 = vunpack.c.l.b16 %v2195
  %v2261 = vunpack.c.h.b16 %v2195
  %v2262 = vunpack.c.l.b16 %v2196
  %v2263 = vunpack.c.h.b16 %v2196
  %v2264 = vunpack.c.l.b16 %v2197
  %v2265 = vunpack.c.h.b16 %v2197
  %v2266 = vunpack.c.l.b16 %v2198
  %v2267 = vunpack.c.h.b16 %v2198
  %v2268 = vunpack.c.l.b16 %v2199
  %v2269 = vunpack.c.h.b16 %v2199
  %v2270 = vunpack.c.l.b16 %v2200
  %v2271 = vunpack.c.h.b16 %v2200
  %v2272 = vunpack.c.l.b16 %v2201
  %v2273 = vunpack.c.h.b16 %v2201
  %v2274 = vunpack.c.l.b16 %v2202
  %v2275 = vunpack.c.h.b16 %v2202
  %v2276 = vunpack.c.l.b16 %v2203
  %v2277 = vunpack.c.h.b16 %v2203
  %v2278 = vunpack.c.l.b16 %v2204
  %v2279 = vunpack.c.h.b16 %v2204
  %v2280 = vunpack.c.l.b16 %v2205
  %v2281 = vunpack.c.h.b16 %v2205
  %v2282 = vunpack.c.l.b16 %v2206
  %v2283 = vunpack.c.h.b16 %v2206
  %v2284 = vunpack.c.l.b16 %v2207
  %v2285 = vunpack.c.h.b16 %v2207
  %v2286 = vunpack.c.l.b16 %v2208
  %v2287 = vunpack.c.h.b16 %v2208
  %v2288 = vunpack.c.l.b16 %v2209
  %v2289 = vunpack.c.h.b16 %v2209
  %v2290 = vunpack.c.l.b16 %v2210
  %v2291 = vunpack.c.h.b16 %v2210
  %v2292 = vunpack.c.l.b16 %v2211
  %v2293 = vunpack.c.h.b16 %v2211
  %v2294 = vunpack.c.l.b16 %v2212
  %v2295 = vunpack.c.h.b16 %v2212
  %v2296 = vunpack.c.l.b16 %v2213
  %v2297 = vunpack.c.h.b16 %v2213
  %v2298 = vunpack.c.l.b16 %v2214
  %v2299 = vunpack.c.h.b16 %v2214
  %v2300 = vunpack.c.l.b16 %v2215
  %v2301 = vunpack.c.h.b16 %v2215
  %v2302 = vunpack.c.l.b16 %v2216
  %v2303 = vunpack.c.h.b16 %v2216
  %v2304 = vunpack.c.l.b16 %v2217
  %v2305 = vunpack.c.h.b16 %v2217
  %v2306 = vunpack.c.l.b16 %v2218
  %v2307 = vunpack.c.h.b16 %v2218
  %v2308 = vunpack.c.l.b16 %v2219
  %v2309 = vunpack.c.h.b16 %v2219
  %v2310 = vunpack.c.l.b16 %v2220
  %v2311 = vunpack.c.h.b16 %v2220
  %v2312 = vunpack.c.l.b16 %v2221
  %v2313 = vunpack.c.h.b16 %v2221
  %v2314 = vunpack.c.l.b16 %v2222
  %v2315 = vunpack.c.h.b16 %v2222
  %v2316 = vunpack.c.l.b16 %v2223
  %v2317 = vunpack.c.h.b16 %v2223
  %v2318 = vunpack.c.l.b16 %v2224
  %v2319 = vunpack.c.h.b16 %v2224
  %v2320 = vunpack.c.l.b16 %v2225
  %v2321 = vunpack.c.h.b16 %v2225
  %v2322 = vpack.c.b16 %v2262, %v2258
  %v2323 = vpack.c.b16 %v2263, %v2259
  %v2324 = vpack.c.b16 %v2264, %v2260
  %v2325 = vpack.c.b16 %v2265, %v2261
  %v2326 = vpack.c.b16 %v2270, %v2266
  %v2327 = vpack.c.b16 %v2271, %v2267
  %v2328 = vpack.c.b16 %v2272, %v2268
  %v2329 = vpack.c.b16 %v2273, %v2269
  %v2330 = vpack.c.b16 %v2278, %v2274
  %v2331 = vpack.c.b16 %v2279, %v2275
  %v2332 = vpack.c.b16 %v2280, %v2276
  %v2333 = vpack.c.b16 %v2281, %v2277
  %v2334 = vpack.c.b16 %v2286, %v2282
  %v2335 = vpack.c.b16 %v2287, %v2283
  %v2336 = vpack.c.b16 %v2288, %v2284
  %v2337 = vpack.c.b16 %v2289, %v2285
  %v2338 = vpack.c.b16 %v2294, %v2290
  %v2339 = vpack.c.b16 %v2295, %v2291
  %v2340 = vpack.c.b16 %v2296, %v2292
  %v2341 = vpack.c.b16 %v2297, %v2293
  %v2342 = vpack.c.b16 %v2302, %v2298
  %v2343 = vpack.c.b16 %v2303, %v2299
  %v2344 = vpack.c.b16 %v2304, %v2300
  %v2345 = vpack.c.b16 %v2305, %v2301
  %v2346 = vpack.c.b16 %v2310, %v2306
  %v2347 = vpack.c.b16 %v2311, %v2307
  %v2348 = vpack.c.b16 %v2312, %v2308
  %v2349 = vpack.c.b16 %v2313, %v2309
  %v2350 = vpack.c.b16 %v2318, %v2314
  %v2351 = vpack.c.b16 %v2319, %v2315
  %v2352 = vpack.c.b16 %v2320, %v2316
  %v2353 = vpack.c.b16 %v2321, %v2317
  %2386 = vmatprep.subr.bf16.mxu0 %v2323
  %2387 = vmatpush1.bf16.msra.mxu0 %v2322
  %2388 = vmatprep.subr.bf16.mxu0 %v2327
  %2389 = vmatpush1.bf16.msra.mxu0 %v2326
  %2390 = vmatprep.subr.bf16.mxu0 %v2331
  %2391 = vmatpush1.bf16.msra.mxu0 %v2330
  %2392 = vmatprep.subr.bf16.mxu0 %v2335
  %2393 = vmatpush1.bf16.msra.mxu0 %v2334
  %2394 = vmatprep.subr.bf16.mxu0 %v2339
  %2395 = vmatpush1.bf16.msra.mxu0 %v2338
  %2396 = vmatprep.subr.bf16.mxu0 %v2343
  %2397 = vmatpush1.bf16.msra.mxu0 %v2342
  %2398 = vmatprep.subr.bf16.mxu0 %v2347
  %2399 = vmatpush1.bf16.msra.mxu0 %v2346
  %2400 = vmatprep.subr.bf16.mxu0 %v2351
  %2401 = vmatpush1.bf16.msra.mxu0 %v2350
  %2402 = vmatprep.subr.bf16.mxu0 0
  %2403 = vmatpush1.bf16.msra.mxu0 0
  %2404 = vmatprep.subr.bf16.mxu0 0
  %2405 = vmatpush1.bf16.msra.mxu0 0
  %2406 = vmatprep.subr.bf16.mxu0 0
  %2407 = vmatpush1.bf16.msra.mxu0 0
  %2408 = vmatprep.subr.bf16.mxu0 0
  %2409 = vmatpush1.bf16.msra.mxu0 0
  %2410 = vmatprep.subr.bf16.mxu0 0
  %2411 = vmatpush1.bf16.msra.mxu0 0
  %2412 = vmatprep.subr.bf16.mxu0 0
  %2413 = vmatpush1.bf16.msra.mxu0 0
  %2414 = vmatprep.subr.bf16.mxu0 0
  %2415 = vmatpush1.bf16.msra.mxu0 0
  %2416 = vmatprep.subr.bf16.mxu0 0
  %2417 = vmatpush1.bf16.msra.mxu0 0
  %2418 = vmatprep.mubr.bf16.mxu0 0
  %2419 = vmatmul.mubr.bf16.gmra.mrb[0].mxu0 %v2193
  %v2420 = vpop.f32.mrb[0].mxu0
  %v2421 = vadd.f32 0.0, %v2420
  %v2422 = vpop.f32.mrb[0].mxu0
  %v2423 = vadd.f32 0.0, %v2422
  %v2424 = vpop.f32.mrb[0].mxu0
  %v2425 = vpop.f32.mrb[0].mxu0
  %2426 = vdwg.mxu0
  %2427 = vmatprep.subr.bf16.mxu0 %v2325
  %2428 = vmatpush1.bf16.msra.mxu0 %v2324
  %2429 = vmatprep.subr.bf16.mxu0 %v2329
  %2430 = vmatpush1.bf16.msra.mxu0 %v2328
  %2431 = vmatprep.subr.bf16.mxu0 %v2333
  %2432 = vmatpush1.bf16.msra.mxu0 %v2332
  %2433 = vmatprep.subr.bf16.mxu0 %v2337
  %2434 = vmatpush1.bf16.msra.mxu0 %v2336
  %2435 = vmatprep.subr.bf16.mxu0 %v2341
  %2436 = vmatpush1.bf16.msra.mxu0 %v2340
  %2437 = vmatprep.subr.bf16.mxu0 %v2345
  %2438 = vmatpush1.bf16.msra.mxu0 %v2344
  %2439 = vmatprep.subr.bf16.mxu0 %v2349
  %2440 = vmatpush1.bf16.msra.mxu0 %v2348
  %2441 = vmatprep.subr.bf16.mxu0 %v2353
  %2442 = vmatpush1.bf16.msra.mxu0 %v2352
  %2443 = vmatprep.subr.bf16.mxu0 0
  %2444 = vmatpush1.bf16.msra.mxu0 0
  %2445 = vmatprep.subr.bf16.mxu0 0
  %2446 = vmatpush1.bf16.msra.mxu0 0
  %2447 = vmatprep.subr.bf16.mxu0 0
  %2448 = vmatpush1.bf16.msra.mxu0 0
  %2449 = vmatprep.subr.bf16.mxu0 0
  %2450 = vmatpush1.bf16.msra.mxu0 0
  %2451 = vmatprep.subr.bf16.mxu0 0
  %2452 = vmatpush1.bf16.msra.mxu0 0
  %2453 = vmatprep.subr.bf16.mxu0 0
  %2454 = vmatpush1.bf16.msra.mxu0 0
  %2455 = vmatprep.subr.bf16.mxu0 0
  %2456 = vmatpush1.bf16.msra.mxu0 0
  %2457 = vmatprep.subr.bf16.mxu0 0
  %2458 = vmatpush1.bf16.msra.mxu0 0
  %2459 = vmatprep.mubr.bf16.mxu0 0
  %2460 = vmatmul.mubr.bf16.gmra.mrb[0].mxu0 %v2193
  %v2461 = vpop.f32.mrb[0].mxu0
  %v2462 = vadd.f32 0.0, %v2461
  %v2463 = vpop.f32.mrb[0].mxu0
  %v2464 = vadd.f32 0.0, %v2463
  %v2465 = vpop.f32.mrb[0].mxu0
  %v2466 = vpop.f32.mrb[0].mxu0
  %2467 = vdwg.mxu0
  %v2468 = vadd.f32 %v2189, %v2421
  %v2469 = vadd.f32 %v2190, %v2423
  %v2470 = vadd.f32 %v2191, %v2462
  %v2471 = vadd.f32 %v2192, %v2464
  %v2472 = vxor.u32 %v2468, 2147483648
  %v2473 = vmul.f32 %v2472, 1.442695
  %v2474 = vpow.pop %v2473
  %v2475 = vadd.f32 %v2474, 1.0
  %v2476 = vrcp.pop %v2475
  %v2477 = vmul.f32 1.0, %v2476
  %v2478 = vxor.u32 %v2469, 2147483648
  %v2479 = vmul.f32 %v2478, 1.442695
  %v2480 = vpow.pop %v2479
  %v2481 = vadd.f32 %v2480, 1.0
  %v2482 = vrcp.pop %v2481
  %v2483 = vmul.f32 1.0, %v2482
  %v2484 = vtanh.pop %v2470
  %v2485 = vxor.u32 %v2471, 2147483648
  %v2486 = vmul.f32 %v2485, 1.442695
  %v2487 = vpow.pop %v2486
  %v2488 = vadd.f32 %v2487, 1.0
  %v2489 = vrcp.pop %v2488
  %v2490 = vmul.f32 1.0, %v2489
  %v2491 = vmul.f32 %v2483, %v2183
  %v2492 = vmul.f32 %v2477, %v2484
  %v2493 = vadd.f32 %v2491, %v2492
  %v2494 = vtanh.pop %v2493
  %v2495 = vmul.f32 %v2490, %v2494
  %s2496 = scalar_lea.vmem %s2, 56
  %2497 = vst [vmem:[%s2496] sm:$0xff] %v2495
  %2498 = vst [vmem:[#allocation2] sm:$0xff] %v2495
  %2499 = vst [vmem:[#allocation3] sm:$0xff] %v2493
  // Predicated region
  $region14: #{decoder_rnn_forward.6} parent=0 // pred_check
    _
  $region15: #{decoder_rnn_forward.6} parent=0 // pred_check_branch
    %2501 = sbr.rel (0) target = $region17
  $region16: #{decoder_rnn_forward.6} parent=0 // pred_region
    _
  $region17: #{decoder_rnn_forward.6} parent=0 // pred_fallthru
    _
  // Predicated region
  $region18: #{decoder_rnn_forward.6} parent=0 // pred_check
    _
  $region19: #{decoder_rnn_forward.6} parent=0 // pred_check_branch
    %2503 = sbr.rel (0) target = $region21
  $region20: #{decoder_rnn_forward.6} parent=0 // pred_region
    _
  $region21: #{decoder_rnn_forward.6} parent=0 // pred_fallthru
    _

</llo_original>
